<compile_context>
chip_gen: v7x
topology: tpu7x:2x2x1
jax: 0.10.0
libtpu: 0.0.40
codegen_flags: <defaults>
</compile_context>

<pallas_src>
import functools

import jax
import jax.numpy as jnp
from jax import lax
from jax.experimental import pallas as pl
from jax.experimental.pallas import tpu as pltpu

CONTEXT_SIZE = 256   # max_pos from the PyTorch module
LN_EPS = 1e-5        # torch.nn.LayerNorm default eps
NEG_INF = -1e30      # causal-mask fill (representable in bf16; exp -> 0)


def _largest_divisor_leq(n, cap):
    cap = max(1, min(n, cap))
    for d in range(cap, 0, -1):
        if n % d == 0:
            return d
    return 1


def _layer_norm(x, gamma, beta, eps=LN_EPS):
    mu = jnp.mean(x, axis=-1, keepdims=True)
    xc = x - mu
    var = jnp.mean(xc * xc, axis=-1, keepdims=True)
    return xc * lax.rsqrt(var + eps) * gamma + beta


def _block_relpos_kernel(x_ref, ln1g_ref, ln1b_ref, wqkv_ref, bias_ref,
                         wproj_ref, bproj_ref, ln2g_ref, ln2b_ref,
                         w1_ref, b1_ref, w2_ref, b2_ref,
                         o_ref, qkv_scr, attn_scr,
                         *, num_heads, head_size, tq, tr):
    bb, t, c = x_ref.shape          # one grid step == Bb batch elements
    rows = bb * t
    n_row_tiles = rows // tr
    n_q_tiles = t // tq

    def load_x_rows(r0, n):
        # x is f32 already, so the .astype is a no-op; re-reading from the
        # VMEM-resident x block is as cheap as a scratch copy would be.
        if bb == 1:
            return x_ref[0, r0:r0 + n, :].astype(jnp.float32)
        # bb > 1 only occurs in the single-row-tile case (n == rows).
        return x_ref[...].reshape(rows, c).astype(jnp.float32)

    # ---- Stage 1: LN1 + fused Q/K/V projection, all heads & batch rows stacked
    for ri in range(n_row_tiles):
        r0 = ri * tr
        xr = load_x_rows(r0, tr)
        ln1 = _layer_norm(xr, ln1g_ref[...], ln1b_ref[...])
        qkv = jnp.dot(ln1.astype(jnp.bfloat16), wqkv_ref[...],
                      preferred_element_type=jnp.float32)          # (tr, 3c)
        qkv_scr[r0:r0 + tr, :] = qkv.astype(jnp.bfloat16)

    # ---- Stage 2: per-batch-element rel-pos causal attention (mask folded
    #      into the precomputed bf16 bias; softmax denom via approx reciprocal)
    for bi in range(bb):
        base = bi * t
        for ti in range(n_q_tiles):
            q0 = ti * tq
            row0 = base + q0
            head_outs = []
            for h in range(num_heads):
                lo = h * head_size
                qh = qkv_scr[row0:row0 + tq, lo:lo + head_size]            # (tq, hs)
                kh = qkv_scr[base:base + t, c + lo:c + lo + head_size]     # (t, hs)
                vh = qkv_scr[base:base + t, 2 * c + lo:2 * c + lo + head_size]
                # q @ k^T without materializing a transpose.
                s = lax.dot_general(qh, kh, (((1,), (1,)), ((), ())),
                                    preferred_element_type=jnp.float32)    # (tq, t)
                s = s + bias_ref[h, q0:q0 + tq, :].astype(jnp.float32)
                m = jnp.max(s, axis=-1, keepdims=True)
                p = jnp.exp(s - m)
                denom = jnp.sum(p, axis=-1, keepdims=True)
                # f32 denom first, then a single bf16 cast -> halves live vregs.
                p16 = (p * pl.reciprocal(denom, approx=True)).astype(jnp.bfloat16)
                # TODO(synk): nn.Dropout(0.2) on attn is identity in eval mode.
                head_outs.append(jnp.dot(p16, vh,
                                         preferred_element_type=jnp.float32))
            sa = jnp.concatenate(head_outs, axis=-1)                       # (tq, c)
            attn_scr[row0:row0 + tq, :] = sa.astype(jnp.bfloat16)          # lane-dense

    # ---- Stage 3: output proj + residual + LN2 + FFN + residual (stacked rows)
    for ri in range(n_row_tiles):
        r0 = ri * tr
        sa = jnp.dot(attn_scr[r0:r0 + tr, :], wproj_ref[...],
                     preferred_element_type=jnp.float32) + bproj_ref[...]
        xr = load_x_rows(r0, tr)
        r1 = xr + sa                                                       # residual 1
        x2 = _layer_norm(r1, ln2g_ref[...], ln2b_ref[...])
        hmid = jnp.dot(x2.astype(jnp.bfloat16), w1_ref[...],
                       preferred_element_type=jnp.float32) + b1_ref[...]
        hmid = jnp.maximum(hmid, 0.0)
        ff = jnp.dot(hmid.astype(jnp.bfloat16), w2_ref[...],
                     preferred_element_type=jnp.float32) + b2_ref[...]
        # TODO(synk): projection / FFN dropouts are identity in eval mode.
        out_rows = (r1 + ff).astype(o_ref.dtype)
        if bb == 1:
            o_ref[0, r0:r0 + tr, :] = out_rows
        else:
            o_ref[...] = out_rows.reshape(bb, t, c)


def prepare_block_params(params, seq_len, max_pos=CONTEXT_SIZE):
    """One-time host-side precompute: fused bf16 Wqkv and masked bf16 rel-pos bias."""
    nh, c, hs = params["wq"].shape
    hidden = params["w1"].shape[1]
    assert seq_len <= max_pos, "sequence length exceeds the relative-position table"

    def fuse(w):                                    # (nh, c, hs) -> (c, nh*hs)
        return jnp.moveaxis(w, 0, 1).reshape(c, nh * hs)

    scale = jnp.float32(hs) ** -0.5                 # fold 1/sqrt(hs) into Wq
    wqkv = jnp.concatenate([fuse(params["wq"]) * scale,
                            fuse(params["wk"]),
                            fuse(params["wv"])], axis=-1).astype(jnp.bfloat16)

    pos = jnp.arange(seq_len)
    rel = pos[None, :] - pos[:, None] + (max_pos - 1)                  # (t, t)
    rel_bias = params["rel_emb"][:, rel, :].mean(axis=-1)              # (nh, t, t)
    causal = jnp.tril(jnp.ones((seq_len, seq_len), dtype=bool))
    bias = jnp.where(causal[None], rel_bias, NEG_INF).astype(jnp.bfloat16)

    return {
        "wqkv": wqkv,
        "bias": bias,
        "ln1_g": params["ln1_g"].reshape(1, c).astype(jnp.float32),
        "ln1_b": params["ln1_b"].reshape(1, c).astype(jnp.float32),
        "ln2_g": params["ln2_g"].reshape(1, c).astype(jnp.float32),
        "ln2_b": params["ln2_b"].reshape(1, c).astype(jnp.float32),
        "wproj": params["wproj"].astype(jnp.bfloat16),
        "bproj": params["bproj"].reshape(1, c).astype(jnp.float32),
        "w1": params["w1"].astype(jnp.bfloat16),
        "b1": params["b1"].reshape(1, hidden).astype(jnp.float32),
        "w2": params["w2"].astype(jnp.bfloat16),
        "b2": params["b2"].reshape(1, c).astype(jnp.float32),
    }


def block_relpos_forward(x, prep):
    b, t, c = x.shape
    nh = prep["bias"].shape[0]
    hs = c // nh
    hidden = prep["w1"].shape[1]
    assert prep["bias"].shape[1] == t, "prepared bias was built for a different seq_len"

    # Tiling: batch rows per grid step (Bb*t <= 128), query tile <= 64 rows,
    # row tile for the stacked matmuls <= 128 rows.
    bb = _largest_divisor_leq(b, max(1, 128 // t)) if t <= 128 else 1
    rows = bb * t
    tq = _largest_divisor_leq(t, 64)
    if rows <= 128:
        tr = rows
    else:                                   # rows > 128 implies bb == 1
        tr = _largest_divisor_leq(t, 128)
    assert bb == 1 or rows // tr == 1

    kernel = functools.partial(_block_relpos_kernel,
                               num_heads=nh, head_size=hs, tq=tq, tr=tr)

    cost = pl.CostEstimate(
        flops=int(2 * b * t * c * 3 * c        # QKV
                  + 4 * b * nh * t * t * hs    # scores + PV
                  + 2 * b * t * c * c          # output proj
                  + 4 * b * t * c * hidden),   # FFN
        transcendentals=int(b * nh * t * t),
        bytes_accessed=int(4 * b * t * c * 2
                           + 2 * nh * t * t
                           + 2 * (c * 3 * c + c * c + 2 * c * hidden)
                           + 4 * (6 * c + hidden)),
    )

    return pl.pallas_call(
        kernel,
        out_shape=jax.ShapeDtypeStruct((b, t, c), x.dtype),
        grid_spec=pltpu.PrefetchScalarGridSpec(
            num_scalar_prefetch=0,
            grid=(b // bb,),
            in_specs=[
                pl.BlockSpec((bb, t, c), lambda i: (i, 0, 0)),       # x
                pl.BlockSpec((1, c), lambda i: (0, 0)),              # ln1 gamma
                pl.BlockSpec((1, c), lambda i: (0, 0)),              # ln1 beta
                pl.BlockSpec((c, 3 * c), lambda i: (0, 0)),          # fused Wqkv (bf16)
                pl.BlockSpec((nh, t, t), lambda i: (0, 0, 0)),       # masked bias (bf16)
                pl.BlockSpec((c, c), lambda i: (0, 0)),              # Wproj (bf16)
                pl.BlockSpec((1, c), lambda i: (0, 0)),              # bproj
                pl.BlockSpec((1, c), lambda i: (0, 0)),              # ln2 gamma
                pl.BlockSpec((1, c), lambda i: (0, 0)),              # ln2 beta
                pl.BlockSpec((c, hidden), lambda i: (0, 0)),         # W1 (bf16)
                pl.BlockSpec((1, hidden), lambda i: (0, 0)),         # b1
                pl.BlockSpec((hidden, c), lambda i: (0, 0)),         # W2 (bf16)
                pl.BlockSpec((1, c), lambda i: (0, 0)),              # b2
            ],
            out_specs=pl.BlockSpec((bb, t, c), lambda i: (i, 0, 0)),
            scratch_shapes=[pltpu.VMEM((rows, 3 * c), jnp.bfloat16),  # QKV
                            pltpu.VMEM((rows, c), jnp.bfloat16)],     # attn out
        ),
        compiler_params=pltpu.CompilerParams(
            dimension_semantics=("parallel",),
            vmem_limit_bytes=32 * 1024 * 1024),
        cost_estimate=cost,
    )(x, prep["ln1_g"], prep["ln1_b"], prep["wqkv"], prep["bias"],
      prep["wproj"], prep["bproj"], prep["ln2_g"], prep["ln2_b"],
      prep["w1"], prep["b1"], prep["w2"], prep["b2"])


def reference(x, params, *, max_pos=CONTEXT_SIZE):
    """Pure-JAX f32 reference matching the PyTorch BlockRelPos forward (eval mode)."""
    b, t, c = x.shape
    nh, _, hs = params["wq"].shape

    def ln(v, g, bta):
        mu = v.mean(-1, keepdims=True)
        var = ((v - mu) ** 2).mean(-1, keepdims=True)
        return (v - mu) / jnp.sqrt(var + LN_EPS) * g + bta

    x1 = ln(x, params["ln1_g"], params["ln1_b"])
    pos = jnp.arange(t)
    rel = pos[None, :] - pos[:, None] + (max_pos - 1)
    causal = jnp.tril(jnp.ones((t, t), dtype=bool))

    head_outs = []
    for h in range(nh):
        q = x1 @ params["wq"][h]
        k = x1 @ params["wk"][h]
        v = x1 @ params["wv"][h]
        scores = jnp.einsum("btd,bsd->bts", q, k) * hs ** -0.5
        bias_h = params["rel_emb"][h][rel].mean(-1)
        scores = scores + bias_h[None]
        scores = jnp.where(causal[None], scores, -jnp.inf)
        attn = jax.nn.softmax(scores, axis=-1)
        head_outs.append(attn @ v)
    sa = jnp.concatenate(head_outs, axis=-1) @ params["wproj"] + params["bproj"]
    r1 = x + sa
    x2 = ln(r1, params["ln2_g"], params["ln2_b"])
    ff = jnp.maximum(x2 @ params["w1"] + params["b1"], 0.0) @ params["w2"] + params["b2"]
    return r1 + ff


if __name__ == "__main__":
    batch, seq, embed_dim, num_heads = 2, 16, 128, 4
    head_size = embed_dim // num_heads
    hidden = 4 * embed_dim

    key = jax.random.PRNGKey(0)
    ks = jax.random.split(key, 15)

    lim_c = 1.0 / (embed_dim ** 0.5)
    lim_h = 1.0 / (hidden ** 0.5)

    params = {
        "ln1_g": 1.0 + 0.05 * jax.random.normal(ks[0], (embed_dim,), jnp.float32),
        "ln1_b": 0.05 * jax.random.normal(ks[1], (embed_dim,), jnp.float32),
        "wq": jax.random.uniform(ks[2], (num_heads, embed_dim, head_size),
                                 jnp.float32, -lim_c, lim_c),
        "wk": jax.random.uniform(ks[3], (num_heads, embed_dim, head_size),
                                 jnp.float32, -lim_c, lim_c),
        "wv": jax.random.uniform(ks[4], (num_heads, embed_dim, head_size),
                                 jnp.float32, -lim_c, lim_c),
        "rel_emb": jax.random.normal(ks[5], (num_heads, 2 * CONTEXT_SIZE - 1,
                                             head_size), jnp.float32),
        "wproj": jax.random.uniform(ks[6], (embed_dim, embed_dim),
                                    jnp.float32, -lim_c, lim_c),
        "bproj": jax.random.uniform(ks[7], (embed_dim,), jnp.float32, -lim_c, lim_c),
        "ln2_g": 1.0 + 0.05 * jax.random.normal(ks[8], (embed_dim,), jnp.float32),
        "ln2_b": 0.05 * jax.random.normal(ks[9], (embed_dim,), jnp.float32),
        "w1": jax.random.uniform(ks[10], (embed_dim, hidden),
                                 jnp.float32, -lim_c, lim_c),
        "b1": jax.random.uniform(ks[11], (hidden,), jnp.float32, -lim_c, lim_c),
        "w2": jax.random.uniform(ks[12], (hidden, embed_dim),
                                 jnp.float32, -lim_h, lim_h),
        "b2": jax.random.uniform(ks[13], (embed_dim,), jnp.float32, -lim_h, lim_h),
    }
    x = jax.random.normal(ks[14], (batch, seq, embed_dim), dtype=jnp.float32)

    # One-time precompute (bias gather/mean + Wqkv fuse), then a jitted forward.
    prep = jax.tree_util.tree_map(jnp.asarray, prepare_block_params(params, seq))
    fwd = jax.jit(block_relpos_forward)

    out = jax.block_until_ready(fwd(x, prep))

    ref = reference(x, params)
    assert out.shape == (batch, seq, embed_dim)
    err = float(jnp.max(jnp.abs(out - ref)))
    # bf16 matmul operands + bf16 bias + approx reciprocal -> relaxed tolerance.
    assert jnp.allclose(out, ref, atol=3e-2, rtol=3e-2), \
        f"mismatch vs JAX reference (max abs err = {err})"

    print("KERNEL_OK")
</pallas_src>

<mosaic_0001>
module attributes {stable_mosaic.version = 11 : i64} {
  func.func @_block_relpos_kernel(%arg0: i32, %arg1: memref<2x16x128xf32, #tpu.memory_space<vmem>>, %arg2: memref<1x128xf32, #tpu.memory_space<vmem>>, %arg3: memref<1x128xf32, #tpu.memory_space<vmem>>, %arg4: memref<128x384xbf16, #tpu.memory_space<vmem>>, %arg5: memref<4x16x16xbf16, #tpu.memory_space<vmem>>, %arg6: memref<128x128xbf16, #tpu.memory_space<vmem>>, %arg7: memref<1x128xf32, #tpu.memory_space<vmem>>, %arg8: memref<1x128xf32, #tpu.memory_space<vmem>>, %arg9: memref<1x128xf32, #tpu.memory_space<vmem>>, %arg10: memref<128x512xbf16, #tpu.memory_space<vmem>>, %arg11: memref<1x512xf32, #tpu.memory_space<vmem>>, %arg12: memref<512x128xbf16, #tpu.memory_space<vmem>>, %arg13: memref<1x128xf32, #tpu.memory_space<vmem>>, %arg14: memref<2x16x128xf32, #tpu.memory_space<vmem>>, %arg15: memref<32x384xbf16, #tpu.memory_space<vmem>>, %arg16: memref<32x128xbf16, #tpu.memory_space<vmem>>) attributes {dimension_semantics = [#tpu.dimension_semantics<parallel>], iteration_bounds = array<i64: 1>, scalar_prefetch = 0 : i64, scratch_operands = 2 : i64, tpu.core_type = #tpu.core_type<tc>, window_params = [{transform_indices = @transform_0, window_bounds = array<i64: 2, 16, 128>}, {pipeline_mode = #tpu.pipeline_mode<synchronous>, transform_indices = @transform_1, window_bounds = array<i64: 1, 128>}, {pipeline_mode = #tpu.pipeline_mode<synchronous>, transform_indices = @transform_2, window_bounds = array<i64: 1, 128>}, {pipeline_mode = #tpu.pipeline_mode<synchronous>, transform_indices = @transform_3, window_bounds = array<i64: 128, 384>}, {pipeline_mode = #tpu.pipeline_mode<synchronous>, transform_indices = @transform_4, window_bounds = array<i64: 4, 16, 16>}, {pipeline_mode = #tpu.pipeline_mode<synchronous>, transform_indices = @transform_5, window_bounds = array<i64: 128, 128>}, {pipeline_mode = #tpu.pipeline_mode<synchronous>, transform_indices = @transform_6, window_bounds = array<i64: 1, 128>}, {pipeline_mode = #tpu.pipeline_mode<synchronous>, transform_indices = @transform_7, window_bounds = array<i64: 1, 128>}, {pipeline_mode = #tpu.pipeline_mode<synchronous>, transform_indices = @transform_8, window_bounds = array<i64: 1, 128>}, {pipeline_mode = #tpu.pipeline_mode<synchronous>, transform_indices = @transform_9, window_bounds = array<i64: 128, 512>}, {pipeline_mode = #tpu.pipeline_mode<synchronous>, transform_indices = @transform_10, window_bounds = array<i64: 1, 512>}, {pipeline_mode = #tpu.pipeline_mode<synchronous>, transform_indices = @transform_11, window_bounds = array<i64: 512, 128>}, {pipeline_mode = #tpu.pipeline_mode<synchronous>, transform_indices = @transform_12, window_bounds = array<i64: 1, 128>}, {transform_indices = @transform_13, window_bounds = array<i64: 2, 16, 128>}]} {
    %c0 = arith.constant 0 : index
    %c0_0 = arith.constant 0 : index
    %c0_1 = arith.constant 0 : index
    %0 = vector.load %arg1[%c0, %c0_0, %c0_1] : memref<2x16x128xf32, #tpu.memory_space<vmem>>, vector<2x16x128xf32>
    %1 = vector.shape_cast %0 : vector<2x16x128xf32> to vector<32x128xf32>
    %c0_2 = arith.constant 0 : index
    %c0_3 = arith.constant 0 : index
    %2 = vector.load %arg2[%c0_2, %c0_3] : memref<1x128xf32, #tpu.memory_space<vmem>>, vector<1x128xf32>
    %c0_4 = arith.constant 0 : index
    %c0_5 = arith.constant 0 : index
    %3 = vector.load %arg3[%c0_4, %c0_5] : memref<1x128xf32, #tpu.memory_space<vmem>>, vector<1x128xf32>
    %cst = arith.constant dense<0.000000e+00> : vector<32xf32>
    %4 = vector.multi_reduction <add>, %1, %cst [1] : vector<32x128xf32> to vector<32xf32>
    %5 = vector.shape_cast %4 : vector<32xf32> to vector<32x1xf32>
    %cst_6 = arith.constant 1.280000e+02 : f32
    %6 = vector.broadcast %cst_6 : f32 to vector<32x1xf32>
    %7 = arith.divf %5, %6 : vector<32x1xf32>
    %8 = vector.broadcast %7 : vector<32x1xf32> to vector<32x128xf32>
    %9 = arith.subf %1, %8 : vector<32x128xf32>
    %10 = arith.mulf %9, %9 : vector<32x128xf32>
    %cst_7 = arith.constant dense<0.000000e+00> : vector<32xf32>
    %11 = vector.multi_reduction <add>, %10, %cst_7 [1] : vector<32x128xf32> to vector<32xf32>
    %12 = vector.shape_cast %11 : vector<32xf32> to vector<32x1xf32>
    %cst_8 = arith.constant 1.280000e+02 : f32
    %13 = vector.broadcast %cst_8 : f32 to vector<32x1xf32>
    %14 = arith.divf %12, %13 : vector<32x1xf32>
    %cst_9 = arith.constant 9.99999974E-6 : f32
    %15 = vector.broadcast %cst_9 : f32 to vector<32x1xf32>
    %16 = arith.addf %14, %15 : vector<32x1xf32>
    %17 = math.rsqrt %16 : vector<32x1xf32>
    %18 = vector.broadcast %17 : vector<32x1xf32> to vector<32x128xf32>
    %19 = arith.mulf %9, %18 : vector<32x128xf32>
    %20 = vector.broadcast %2 : vector<1x128xf32> to vector<32x128xf32>
    %21 = arith.mulf %19, %20 : vector<32x128xf32>
    %22 = vector.broadcast %3 : vector<1x128xf32> to vector<32x128xf32>
    %23 = arith.addf %21, %22 : vector<32x128xf32>
    %24 = arith.truncf %23 : vector<32x128xf32> to vector<32x128xbf16>
    %c0_10 = arith.constant 0 : index
    %c0_11 = arith.constant 0 : index
    %25 = vector.load %arg4[%c0_10, %c0_11] : memref<128x384xbf16, #tpu.memory_space<vmem>>, vector<128x384xbf16>
    %cst_12 = arith.constant dense<0.000000e+00> : vector<32x384xf32>
    %26 = tpu.matmul %24, %25, %cst_12 {dimension_numbers = #tpu.dot_dimension_numbers<[1], [0], [0], [1], [0, 0, 1, 1], [], []>} : vector<32x128xbf16>, vector<128x384xbf16>, vector<32x384xf32> -> vector<32x384xf32>
    %27 = arith.truncf %26 : vector<32x384xf32> to vector<32x384xbf16>
    %c0_13 = arith.constant 0 : index
    %c0_14 = arith.constant 0 : index
    %28 = vector.load %arg15[%c0_13, %c0_14] : memref<32x384xbf16, #tpu.memory_space<vmem>>, vector<32x384xbf16>
    tpu.vector_store %arg15[%c0_13, %c0_14], %27 {strides = array<i32>} : memref<32x384xbf16, #tpu.memory_space<vmem>>, vector<32x384xbf16>,
    %c0_15 = arith.constant 0 : index
    %c0_16 = arith.constant 0 : index
    %29 = vector.load %arg15[%c0_15, %c0_16] : memref<32x384xbf16, #tpu.memory_space<vmem>>, vector<16x32xbf16>
    %c0_17 = arith.constant 0 : index
    %c128 = arith.constant 128 : index
    %30 = vector.load %arg15[%c0_17, %c128] : memref<32x384xbf16, #tpu.memory_space<vmem>>, vector<16x32xbf16>
    %c0_18 = arith.constant 0 : index
    %c256 = arith.constant 256 : index
    %31 = vector.load %arg15[%c0_18, %c256] : memref<32x384xbf16, #tpu.memory_space<vmem>>, vector<16x32xbf16>
    %cst_19 = arith.constant dense<0.000000e+00> : vector<16x16xf32>
    %32 = tpu.matmul %29, %30, %cst_19 {dimension_numbers = #tpu.dot_dimension_numbers<[1], [1], [0], [0], [0, 0, 1, 0], [], []>} : vector<16x32xbf16>, vector<16x32xbf16>, vector<16x16xf32> -> vector<16x16xf32>
    %c0_20 = arith.constant 0 : index
    %c0_21 = arith.constant 0 : index
    %c0_22 = arith.constant 0 : index
    %33 = vector.load %arg5[%c0_20, %c0_21, %c0_22] : memref<4x16x16xbf16, #tpu.memory_space<vmem>>, vector<1x16x16xbf16>
    %34 = vector.shape_cast %33 : vector<1x16x16xbf16> to vector<16x16xbf16>
    %35 = arith.extf %34 : vector<16x16xbf16> to vector<16x16xf32>
    %36 = arith.addf %32, %35 : vector<16x16xf32>
    %cst_23 = arith.constant dense<0xFF800000> : vector<16xf32>
    %37 = vector.multi_reduction <maximumf>, %36, %cst_23 [1] : vector<16x16xf32> to vector<16xf32>
    %38 = vector.shape_cast %37 : vector<16xf32> to vector<16x1xf32>
    %39 = vector.broadcast %38 : vector<16x1xf32> to vector<16x16xf32>
    %40 = arith.subf %36, %39 : vector<16x16xf32>
    %41 = math.exp %40 : vector<16x16xf32>
    %cst_24 = arith.constant dense<0.000000e+00> : vector<16xf32>
    %42 = vector.multi_reduction <add>, %41, %cst_24 [1] : vector<16x16xf32> to vector<16xf32>
    %43 = vector.shape_cast %42 : vector<16xf32> to vector<16x1xf32>
    %44 = tpu.reciprocal %43 {approx = true} : vector<16x1xf32> -> vector<16x1xf32>
    %45 = vector.broadcast %44 : vector<16x1xf32> to vector<16x16xf32>
    %46 = arith.mulf %41, %45 : vector<16x16xf32>
    %47 = arith.truncf %46 : vector<16x16xf32> to vector<16x16xbf16>
    %cst_25 = arith.constant dense<0.000000e+00> : vector<16x32xf32>
    %48 = tpu.matmul %47, %31, %cst_25 {dimension_numbers = #tpu.dot_dimension_numbers<[1], [0], [0], [1], [0, 0, 1, 1], [], []>} : vector<16x16xbf16>, vector<16x32xbf16>, vector<16x32xf32> -> vector<16x32xf32>
    %c0_26 = arith.constant 0 : index
    %c32 = arith.constant 32 : index
    %49 = vector.load %arg15[%c0_26, %c32] : memref<32x384xbf16, #tpu.memory_space<vmem>>, vector<16x32xbf16>
    %c0_27 = arith.constant 0 : index
    %c160 = arith.constant 160 : index
    %50 = vector.load %arg15[%c0_27, %c160] : memref<32x384xbf16, #tpu.memory_space<vmem>>, vector<16x32xbf16>
    %c0_28 = arith.constant 0 : index
    %c288 = arith.constant 288 : index
    %51 = vector.load %arg15[%c0_28, %c288] : memref<32x384xbf16, #tpu.memory_space<vmem>>, vector<16x32xbf16>
    %cst_29 = arith.constant dense<0.000000e+00> : vector<16x16xf32>
    %52 = tpu.matmul %49, %50, %cst_29 {dimension_numbers = #tpu.dot_dimension_numbers<[1], [1], [0], [0], [0, 0, 1, 0], [], []>} : vector<16x32xbf16>, vector<16x32xbf16>, vector<16x16xf32> -> vector<16x16xf32>
    %c1 = arith.constant 1 : index
    %c0_30 = arith.constant 0 : index
    %c0_31 = arith.constant 0 : index
    %53 = vector.load %arg5[%c1, %c0_30, %c0_31] : memref<4x16x16xbf16, #tpu.memory_space<vmem>>, vector<1x16x16xbf16>
    %54 = vector.shape_cast %53 : vector<1x16x16xbf16> to vector<16x16xbf16>
    %55 = arith.extf %54 : vector<16x16xbf16> to vector<16x16xf32>
    %56 = arith.addf %52, %55 : vector<16x16xf32>
    %cst_32 = arith.constant dense<0xFF800000> : vector<16xf32>
    %57 = vector.multi_reduction <maximumf>, %56, %cst_32 [1] : vector<16x16xf32> to vector<16xf32>
    %58 = vector.shape_cast %57 : vector<16xf32> to vector<16x1xf32>
    %59 = vector.broadcast %58 : vector<16x1xf32> to vector<16x16xf32>
    %60 = arith.subf %56, %59 : vector<16x16xf32>
    %61 = math.exp %60 : vector<16x16xf32>
    %cst_33 = arith.constant dense<0.000000e+00> : vector<16xf32>
    %62 = vector.multi_reduction <add>, %61, %cst_33 [1] : vector<16x16xf32> to vector<16xf32>
    %63 = vector.shape_cast %62 : vector<16xf32> to vector<16x1xf32>
    %64 = tpu.reciprocal %63 {approx = true} : vector<16x1xf32> -> vector<16x1xf32>
    %65 = vector.broadcast %64 : vector<16x1xf32> to vector<16x16xf32>
    %66 = arith.mulf %61, %65 : vector<16x16xf32>
    %67 = arith.truncf %66 : vector<16x16xf32> to vector<16x16xbf16>
    %cst_34 = arith.constant dense<0.000000e+00> : vector<16x32xf32>
    %68 = tpu.matmul %67, %51, %cst_34 {dimension_numbers = #tpu.dot_dimension_numbers<[1], [0], [0], [1], [0, 0, 1, 1], [], []>} : vector<16x16xbf16>, vector<16x32xbf16>, vector<16x32xf32> -> vector<16x32xf32>
    %c0_35 = arith.constant 0 : index
    %c64 = arith.constant 64 : index
    %69 = vector.load %arg15[%c0_35, %c64] : memref<32x384xbf16, #tpu.memory_space<vmem>>, vector<16x32xbf16>
    %c0_36 = arith.constant 0 : index
    %c192 = arith.constant 192 : index
    %70 = vector.load %arg15[%c0_36, %c192] : memref<32x384xbf16, #tpu.memory_space<vmem>>, vector<16x32xbf16>
    %c0_37 = arith.constant 0 : index
    %c320 = arith.constant 320 : index
    %71 = vector.load %arg15[%c0_37, %c320] : memref<32x384xbf16, #tpu.memory_space<vmem>>, vector<16x32xbf16>
    %cst_38 = arith.constant dense<0.000000e+00> : vector<16x16xf32>
    %72 = tpu.matmul %69, %70, %cst_38 {dimension_numbers = #tpu.dot_dimension_numbers<[1], [1], [0], [0], [0, 0, 1, 0], [], []>} : vector<16x32xbf16>, vector<16x32xbf16>, vector<16x16xf32> -> vector<16x16xf32>
    %c2 = arith.constant 2 : index
    %c0_39 = arith.constant 0 : index
    %c0_40 = arith.constant 0 : index
    %73 = vector.load %arg5[%c2, %c0_39, %c0_40] : memref<4x16x16xbf16, #tpu.memory_space<vmem>>, vector<1x16x16xbf16>
    %74 = vector.shape_cast %73 : vector<1x16x16xbf16> to vector<16x16xbf16>
    %75 = arith.extf %74 : vector<16x16xbf16> to vector<16x16xf32>
    %76 = arith.addf %72, %75 : vector<16x16xf32>
    %cst_41 = arith.constant dense<0xFF800000> : vector<16xf32>
    %77 = vector.multi_reduction <maximumf>, %76, %cst_41 [1] : vector<16x16xf32> to vector<16xf32>
    %78 = vector.shape_cast %77 : vector<16xf32> to vector<16x1xf32>
    %79 = vector.broadcast %78 : vector<16x1xf32> to vector<16x16xf32>
    %80 = arith.subf %76, %79 : vector<16x16xf32>
    %81 = math.exp %80 : vector<16x16xf32>
    %cst_42 = arith.constant dense<0.000000e+00> : vector<16xf32>
    %82 = vector.multi_reduction <add>, %81, %cst_42 [1] : vector<16x16xf32> to vector<16xf32>
    %83 = vector.shape_cast %82 : vector<16xf32> to vector<16x1xf32>
    %84 = tpu.reciprocal %83 {approx = true} : vector<16x1xf32> -> vector<16x1xf32>
    %85 = vector.broadcast %84 : vector<16x1xf32> to vector<16x16xf32>
    %86 = arith.mulf %81, %85 : vector<16x16xf32>
    %87 = arith.truncf %86 : vector<16x16xf32> to vector<16x16xbf16>
    %cst_43 = arith.constant dense<0.000000e+00> : vector<16x32xf32>
    %88 = tpu.matmul %87, %71, %cst_43 {dimension_numbers = #tpu.dot_dimension_numbers<[1], [0], [0], [1], [0, 0, 1, 1], [], []>} : vector<16x16xbf16>, vector<16x32xbf16>, vector<16x32xf32> -> vector<16x32xf32>
    %c0_44 = arith.constant 0 : index
    %c96 = arith.constant 96 : index
    %89 = vector.load %arg15[%c0_44, %c96] : memref<32x384xbf16, #tpu.memory_space<vmem>>, vector<16x32xbf16>
    %c0_45 = arith.constant 0 : index
    %c224 = arith.constant 224 : index
    %90 = vector.load %arg15[%c0_45, %c224] : memref<32x384xbf16, #tpu.memory_space<vmem>>, vector<16x32xbf16>
    %c0_46 = arith.constant 0 : index
    %c352 = arith.constant 352 : index
    %91 = vector.load %arg15[%c0_46, %c352] : memref<32x384xbf16, #tpu.memory_space<vmem>>, vector<16x32xbf16>
    %cst_47 = arith.constant dense<0.000000e+00> : vector<16x16xf32>
    %92 = tpu.matmul %89, %90, %cst_47 {dimension_numbers = #tpu.dot_dimension_numbers<[1], [1], [0], [0], [0, 0, 1, 0], [], []>} : vector<16x32xbf16>, vector<16x32xbf16>, vector<16x16xf32> -> vector<16x16xf32>
    %c3 = arith.constant 3 : index
    %c0_48 = arith.constant 0 : index
    %c0_49 = arith.constant 0 : index
    %93 = vector.load %arg5[%c3, %c0_48, %c0_49] : memref<4x16x16xbf16, #tpu.memory_space<vmem>>, vector<1x16x16xbf16>
    %94 = vector.shape_cast %93 : vector<1x16x16xbf16> to vector<16x16xbf16>
    %95 = arith.extf %94 : vector<16x16xbf16> to vector<16x16xf32>
    %96 = arith.addf %92, %95 : vector<16x16xf32>
    %cst_50 = arith.constant dense<0xFF800000> : vector<16xf32>
    %97 = vector.multi_reduction <maximumf>, %96, %cst_50 [1] : vector<16x16xf32> to vector<16xf32>
    %98 = vector.shape_cast %97 : vector<16xf32> to vector<16x1xf32>
    %99 = vector.broadcast %98 : vector<16x1xf32> to vector<16x16xf32>
    %100 = arith.subf %96, %99 : vector<16x16xf32>
    %101 = math.exp %100 : vector<16x16xf32>
    %cst_51 = arith.constant dense<0.000000e+00> : vector<16xf32>
    %102 = vector.multi_reduction <add>, %101, %cst_51 [1] : vector<16x16xf32> to vector<16xf32>
    %103 = vector.shape_cast %102 : vector<16xf32> to vector<16x1xf32>
    %104 = tpu.reciprocal %103 {approx = true} : vector<16x1xf32> -> vector<16x1xf32>
    %105 = vector.broadcast %104 : vector<16x1xf32> to vector<16x16xf32>
    %106 = arith.mulf %101, %105 : vector<16x16xf32>
    %107 = arith.truncf %106 : vector<16x16xf32> to vector<16x16xbf16>
    %cst_52 = arith.constant dense<0.000000e+00> : vector<16x32xf32>
    %108 = tpu.matmul %107, %91, %cst_52 {dimension_numbers = #tpu.dot_dimension_numbers<[1], [0], [0], [1], [0, 0, 1, 1], [], []>} : vector<16x16xbf16>, vector<16x32xbf16>, vector<16x32xf32> -> vector<16x32xf32>
    %109 = tpu.concatenate %48, %68, %88, %108 in 1 : vector<16x32xf32>, vector<16x32xf32>, vector<16x32xf32>, vector<16x32xf32> -> vector<16x128xf32>
    %110 = arith.truncf %109 : vector<16x128xf32> to vector<16x128xbf16>
    %c0_53 = arith.constant 0 : index
    %c0_54 = arith.constant 0 : index
    %111 = vector.load %arg16[%c0_53, %c0_54] : memref<32x128xbf16, #tpu.memory_space<vmem>>, vector<16x128xbf16>
    tpu.vector_store %arg16[%c0_53, %c0_54], %110 {strides = array<i32>} : memref<32x128xbf16, #tpu.memory_space<vmem>>, vector<16x128xbf16>,
    %c16 = arith.constant 16 : index
    %c0_55 = arith.constant 0 : index
    %112 = vector.load %arg15[%c16, %c0_55] : memref<32x384xbf16, #tpu.memory_space<vmem>>, vector<16x32xbf16>
    %c16_56 = arith.constant 16 : index
    %c128_57 = arith.constant 128 : index
    %113 = vector.load %arg15[%c16_56, %c128_57] : memref<32x384xbf16, #tpu.memory_space<vmem>>, vector<16x32xbf16>
    %c16_58 = arith.constant 16 : index
    %c256_59 = arith.constant 256 : index
    %114 = vector.load %arg15[%c16_58, %c256_59] : memref<32x384xbf16, #tpu.memory_space<vmem>>, vector<16x32xbf16>
    %cst_60 = arith.constant dense<0.000000e+00> : vector<16x16xf32>
    %115 = tpu.matmul %112, %113, %cst_60 {dimension_numbers = #tpu.dot_dimension_numbers<[1], [1], [0], [0], [0, 0, 1, 0], [], []>} : vector<16x32xbf16>, vector<16x32xbf16>, vector<16x16xf32> -> vector<16x16xf32>
    %c0_61 = arith.constant 0 : index
    %c0_62 = arith.constant 0 : index
    %c0_63 = arith.constant 0 : index
    %116 = vector.load %arg5[%c0_61, %c0_62, %c0_63] : memref<4x16x16xbf16, #tpu.memory_space<vmem>>, vector<1x16x16xbf16>
    %117 = vector.shape_cast %116 : vector<1x16x16xbf16> to vector<16x16xbf16>
    %118 = arith.extf %117 : vector<16x16xbf16> to vector<16x16xf32>
    %119 = arith.addf %115, %118 : vector<16x16xf32>
    %cst_64 = arith.constant dense<0xFF800000> : vector<16xf32>
    %120 = vector.multi_reduction <maximumf>, %119, %cst_64 [1] : vector<16x16xf32> to vector<16xf32>
    %121 = vector.shape_cast %120 : vector<16xf32> to vector<16x1xf32>
    %122 = vector.broadcast %121 : vector<16x1xf32> to vector<16x16xf32>
    %123 = arith.subf %119, %122 : vector<16x16xf32>
    %124 = math.exp %123 : vector<16x16xf32>
    %cst_65 = arith.constant dense<0.000000e+00> : vector<16xf32>
    %125 = vector.multi_reduction <add>, %124, %cst_65 [1] : vector<16x16xf32> to vector<16xf32>
    %126 = vector.shape_cast %125 : vector<16xf32> to vector<16x1xf32>
    %127 = tpu.reciprocal %126 {approx = true} : vector<16x1xf32> -> vector<16x1xf32>
    %128 = vector.broadcast %127 : vector<16x1xf32> to vector<16x16xf32>
    %129 = arith.mulf %124, %128 : vector<16x16xf32>
    %130 = arith.truncf %129 : vector<16x16xf32> to vector<16x16xbf16>
    %cst_66 = arith.constant dense<0.000000e+00> : vector<16x32xf32>
    %131 = tpu.matmul %130, %114, %cst_66 {dimension_numbers = #tpu.dot_dimension_numbers<[1], [0], [0], [1], [0, 0, 1, 1], [], []>} : vector<16x16xbf16>, vector<16x32xbf16>, vector<16x32xf32> -> vector<16x32xf32>
    %c16_67 = arith.constant 16 : index
    %c32_68 = arith.constant 32 : index
    %132 = vector.load %arg15[%c16_67, %c32_68] : memref<32x384xbf16, #tpu.memory_space<vmem>>, vector<16x32xbf16>
    %c16_69 = arith.constant 16 : index
    %c160_70 = arith.constant 160 : index
    %133 = vector.load %arg15[%c16_69, %c160_70] : memref<32x384xbf16, #tpu.memory_space<vmem>>, vector<16x32xbf16>
    %c16_71 = arith.constant 16 : index
    %c288_72 = arith.constant 288 : index
    %134 = vector.load %arg15[%c16_71, %c288_72] : memref<32x384xbf16, #tpu.memory_space<vmem>>, vector<16x32xbf16>
    %cst_73 = arith.constant dense<0.000000e+00> : vector<16x16xf32>
    %135 = tpu.matmul %132, %133, %cst_73 {dimension_numbers = #tpu.dot_dimension_numbers<[1], [1], [0], [0], [0, 0, 1, 0], [], []>} : vector<16x32xbf16>, vector<16x32xbf16>, vector<16x16xf32> -> vector<16x16xf32>
    %c1_74 = arith.constant 1 : index
    %c0_75 = arith.constant 0 : index
    %c0_76 = arith.constant 0 : index
    %136 = vector.load %arg5[%c1_74, %c0_75, %c0_76] : memref<4x16x16xbf16, #tpu.memory_space<vmem>>, vector<1x16x16xbf16>
    %137 = vector.shape_cast %136 : vector<1x16x16xbf16> to vector<16x16xbf16>
    %138 = arith.extf %137 : vector<16x16xbf16> to vector<16x16xf32>
    %139 = arith.addf %135, %138 : vector<16x16xf32>
    %cst_77 = arith.constant dense<0xFF800000> : vector<16xf32>
    %140 = vector.multi_reduction <maximumf>, %139, %cst_77 [1] : vector<16x16xf32> to vector<16xf32>
    %141 = vector.shape_cast %140 : vector<16xf32> to vector<16x1xf32>
    %142 = vector.broadcast %141 : vector<16x1xf32> to vector<16x16xf32>
    %143 = arith.subf %139, %142 : vector<16x16xf32>
    %144 = math.exp %143 : vector<16x16xf32>
    %cst_78 = arith.constant dense<0.000000e+00> : vector<16xf32>
    %145 = vector.multi_reduction <add>, %144, %cst_78 [1] : vector<16x16xf32> to vector<16xf32>
    %146 = vector.shape_cast %145 : vector<16xf32> to vector<16x1xf32>
    %147 = tpu.reciprocal %146 {approx = true} : vector<16x1xf32> -> vector<16x1xf32>
    %148 = vector.broadcast %147 : vector<16x1xf32> to vector<16x16xf32>
    %149 = arith.mulf %144, %148 : vector<16x16xf32>
    %150 = arith.truncf %149 : vector<16x16xf32> to vector<16x16xbf16>
    %cst_79 = arith.constant dense<0.000000e+00> : vector<16x32xf32>
    %151 = tpu.matmul %150, %134, %cst_79 {dimension_numbers = #tpu.dot_dimension_numbers<[1], [0], [0], [1], [0, 0, 1, 1], [], []>} : vector<16x16xbf16>, vector<16x32xbf16>, vector<16x32xf32> -> vector<16x32xf32>
    %c16_80 = arith.constant 16 : index
    %c64_81 = arith.constant 64 : index
    %152 = vector.load %arg15[%c16_80, %c64_81] : memref<32x384xbf16, #tpu.memory_space<vmem>>, vector<16x32xbf16>
    %c16_82 = arith.constant 16 : index
    %c192_83 = arith.constant 192 : index
    %153 = vector.load %arg15[%c16_82, %c192_83] : memref<32x384xbf16, #tpu.memory_space<vmem>>, vector<16x32xbf16>
    %c16_84 = arith.constant 16 : index
    %c320_85 = arith.constant 320 : index
    %154 = vector.load %arg15[%c16_84, %c320_85] : memref<32x384xbf16, #tpu.memory_space<vmem>>, vector<16x32xbf16>
    %cst_86 = arith.constant dense<0.000000e+00> : vector<16x16xf32>
    %155 = tpu.matmul %152, %153, %cst_86 {dimension_numbers = #tpu.dot_dimension_numbers<[1], [1], [0], [0], [0, 0, 1, 0], [], []>} : vector<16x32xbf16>, vector<16x32xbf16>, vector<16x16xf32> -> vector<16x16xf32>
    %c2_87 = arith.constant 2 : index
    %c0_88 = arith.constant 0 : index
    %c0_89 = arith.constant 0 : index
    %156 = vector.load %arg5[%c2_87, %c0_88, %c0_89] : memref<4x16x16xbf16, #tpu.memory_space<vmem>>, vector<1x16x16xbf16>
    %157 = vector.shape_cast %156 : vector<1x16x16xbf16> to vector<16x16xbf16>
    %158 = arith.extf %157 : vector<16x16xbf16> to vector<16x16xf32>
    %159 = arith.addf %155, %158 : vector<16x16xf32>
    %cst_90 = arith.constant dense<0xFF800000> : vector<16xf32>
    %160 = vector.multi_reduction <maximumf>, %159, %cst_90 [1] : vector<16x16xf32> to vector<16xf32>
    %161 = vector.shape_cast %160 : vector<16xf32> to vector<16x1xf32>
    %162 = vector.broadcast %161 : vector<16x1xf32> to vector<16x16xf32>
    %163 = arith.subf %159, %162 : vector<16x16xf32>
    %164 = math.exp %163 : vector<16x16xf32>
    %cst_91 = arith.constant dense<0.000000e+00> : vector<16xf32>
    %165 = vector.multi_reduction <add>, %164, %cst_91 [1] : vector<16x16xf32> to vector<16xf32>
    %166 = vector.shape_cast %165 : vector<16xf32> to vector<16x1xf32>
    %167 = tpu.reciprocal %166 {approx = true} : vector<16x1xf32> -> vector<16x1xf32>
    %168 = vector.broadcast %167 : vector<16x1xf32> to vector<16x16xf32>
    %169 = arith.mulf %164, %168 : vector<16x16xf32>
    %170 = arith.truncf %169 : vector<16x16xf32> to vector<16x16xbf16>
    %cst_92 = arith.constant dense<0.000000e+00> : vector<16x32xf32>
    %171 = tpu.matmul %170, %154, %cst_92 {dimension_numbers = #tpu.dot_dimension_numbers<[1], [0], [0], [1], [0, 0, 1, 1], [], []>} : vector<16x16xbf16>, vector<16x32xbf16>, vector<16x32xf32> -> vector<16x32xf32>
    %c16_93 = arith.constant 16 : index
    %c96_94 = arith.constant 96 : index
    %172 = vector.load %arg15[%c16_93, %c96_94] : memref<32x384xbf16, #tpu.memory_space<vmem>>, vector<16x32xbf16>
    %c16_95 = arith.constant 16 : index
    %c224_96 = arith.constant 224 : index
    %173 = vector.load %arg15[%c16_95, %c224_96] : memref<32x384xbf16, #tpu.memory_space<vmem>>, vector<16x32xbf16>
    %c16_97 = arith.constant 16 : index
    %c352_98 = arith.constant 352 : index
    %174 = vector.load %arg15[%c16_97, %c352_98] : memref<32x384xbf16, #tpu.memory_space<vmem>>, vector<16x32xbf16>
    %cst_99 = arith.constant dense<0.000000e+00> : vector<16x16xf32>
    %175 = tpu.matmul %172, %173, %cst_99 {dimension_numbers = #tpu.dot_dimension_numbers<[1], [1], [0], [0], [0, 0, 1, 0], [], []>} : vector<16x32xbf16>, vector<16x32xbf16>, vector<16x16xf32> -> vector<16x16xf32>
    %c3_100 = arith.constant 3 : index
    %c0_101 = arith.constant 0 : index
    %c0_102 = arith.constant 0 : index
    %176 = vector.load %arg5[%c3_100, %c0_101, %c0_102] : memref<4x16x16xbf16, #tpu.memory_space<vmem>>, vector<1x16x16xbf16>
    %177 = vector.shape_cast %176 : vector<1x16x16xbf16> to vector<16x16xbf16>
    %178 = arith.extf %177 : vector<16x16xbf16> to vector<16x16xf32>
    %179 = arith.addf %175, %178 : vector<16x16xf32>
    %cst_103 = arith.constant dense<0xFF800000> : vector<16xf32>
    %180 = vector.multi_reduction <maximumf>, %179, %cst_103 [1] : vector<16x16xf32> to vector<16xf32>
    %181 = vector.shape_cast %180 : vector<16xf32> to vector<16x1xf32>
    %182 = vector.broadcast %181 : vector<16x1xf32> to vector<16x16xf32>
    %183 = arith.subf %179, %182 : vector<16x16xf32>
    %184 = math.exp %183 : vector<16x16xf32>
    %cst_104 = arith.constant dense<0.000000e+00> : vector<16xf32>
    %185 = vector.multi_reduction <add>, %184, %cst_104 [1] : vector<16x16xf32> to vector<16xf32>
    %186 = vector.shape_cast %185 : vector<16xf32> to vector<16x1xf32>
    %187 = tpu.reciprocal %186 {approx = true} : vector<16x1xf32> -> vector<16x1xf32>
    %188 = vector.broadcast %187 : vector<16x1xf32> to vector<16x16xf32>
    %189 = arith.mulf %184, %188 : vector<16x16xf32>
    %190 = arith.truncf %189 : vector<16x16xf32> to vector<16x16xbf16>
    %cst_105 = arith.constant dense<0.000000e+00> : vector<16x32xf32>
    %191 = tpu.matmul %190, %174, %cst_105 {dimension_numbers = #tpu.dot_dimension_numbers<[1], [0], [0], [1], [0, 0, 1, 1], [], []>} : vector<16x16xbf16>, vector<16x32xbf16>, vector<16x32xf32> -> vector<16x32xf32>
    %192 = tpu.concatenate %131, %151, %171, %191 in 1 : vector<16x32xf32>, vector<16x32xf32>, vector<16x32xf32>, vector<16x32xf32> -> vector<16x128xf32>
    %193 = arith.truncf %192 : vector<16x128xf32> to vector<16x128xbf16>
    %c16_106 = arith.constant 16 : index
    %c0_107 = arith.constant 0 : index
    %194 = vector.load %arg16[%c16_106, %c0_107] : memref<32x128xbf16, #tpu.memory_space<vmem>>, vector<16x128xbf16>
    tpu.vector_store %arg16[%c16_106, %c0_107], %193 {strides = array<i32>} : memref<32x128xbf16, #tpu.memory_space<vmem>>, vector<16x128xbf16>,
    %c0_108 = arith.constant 0 : index
    %c0_109 = arith.constant 0 : index
    %195 = vector.load %arg16[%c0_108, %c0_109] : memref<32x128xbf16, #tpu.memory_space<vmem>>, vector<32x128xbf16>
    %c0_110 = arith.constant 0 : index
    %c0_111 = arith.constant 0 : index
    %196 = vector.load %arg6[%c0_110, %c0_111] : memref<128x128xbf16, #tpu.memory_space<vmem>>, vector<128x128xbf16>
    %cst_112 = arith.constant dense<0.000000e+00> : vector<32x128xf32>
    %197 = tpu.matmul %195, %196, %cst_112 {dimension_numbers = #tpu.dot_dimension_numbers<[1], [0], [0], [1], [0, 0, 1, 1], [], []>} : vector<32x128xbf16>, vector<128x128xbf16>, vector<32x128xf32> -> vector<32x128xf32>
    %c0_113 = arith.constant 0 : index
    %c0_114 = arith.constant 0 : index
    %198 = vector.load %arg7[%c0_113, %c0_114] : memref<1x128xf32, #tpu.memory_space<vmem>>, vector<1x128xf32>
    %199 = vector.broadcast %198 : vector<1x128xf32> to vector<32x128xf32>
    %200 = arith.addf %197, %199 : vector<32x128xf32>
    %c0_115 = arith.constant 0 : index
    %c0_116 = arith.constant 0 : index
    %c0_117 = arith.constant 0 : index
    %201 = vector.load %arg1[%c0_115, %c0_116, %c0_117] : memref<2x16x128xf32, #tpu.memory_space<vmem>>, vector<2x16x128xf32>
    %202 = vector.shape_cast %201 : vector<2x16x128xf32> to vector<32x128xf32>
    %203 = arith.addf %202, %200 : vector<32x128xf32>
    %c0_118 = arith.constant 0 : index
    %c0_119 = arith.constant 0 : index
    %204 = vector.load %arg8[%c0_118, %c0_119] : memref<1x128xf32, #tpu.memory_space<vmem>>, vector<1x128xf32>
    %c0_120 = arith.constant 0 : index
    %c0_121 = arith.constant 0 : index
    %205 = vector.load %arg9[%c0_120, %c0_121] : memref<1x128xf32, #tpu.memory_space<vmem>>, vector<1x128xf32>
    %cst_122 = arith.constant dense<0.000000e+00> : vector<32xf32>
    %206 = vector.multi_reduction <add>, %203, %cst_122 [1] : vector<32x128xf32> to vector<32xf32>
    %207 = vector.shape_cast %206 : vector<32xf32> to vector<32x1xf32>
    %cst_123 = arith.constant 1.280000e+02 : f32
    %208 = vector.broadcast %cst_123 : f32 to vector<32x1xf32>
    %209 = arith.divf %207, %208 : vector<32x1xf32>
    %210 = vector.broadcast %209 : vector<32x1xf32> to vector<32x128xf32>
    %211 = arith.subf %203, %210 : vector<32x128xf32>
    %212 = arith.mulf %211, %211 : vector<32x128xf32>
    %cst_124 = arith.constant dense<0.000000e+00> : vector<32xf32>
    %213 = vector.multi_reduction <add>, %212, %cst_124 [1] : vector<32x128xf32> to vector<32xf32>
    %214 = vector.shape_cast %213 : vector<32xf32> to vector<32x1xf32>
    %cst_125 = arith.constant 1.280000e+02 : f32
    %215 = vector.broadcast %cst_125 : f32 to vector<32x1xf32>
    %216 = arith.divf %214, %215 : vector<32x1xf32>
    %cst_126 = arith.constant 9.99999974E-6 : f32
    %217 = vector.broadcast %cst_126 : f32 to vector<32x1xf32>
    %218 = arith.addf %216, %217 : vector<32x1xf32>
    %219 = math.rsqrt %218 : vector<32x1xf32>
    %220 = vector.broadcast %219 : vector<32x1xf32> to vector<32x128xf32>
    %221 = arith.mulf %211, %220 : vector<32x128xf32>
    %222 = vector.broadcast %204 : vector<1x128xf32> to vector<32x128xf32>
    %223 = arith.mulf %221, %222 : vector<32x128xf32>
    %224 = vector.broadcast %205 : vector<1x128xf32> to vector<32x128xf32>
    %225 = arith.addf %223, %224 : vector<32x128xf32>
    %226 = arith.truncf %225 : vector<32x128xf32> to vector<32x128xbf16>
    %c0_127 = arith.constant 0 : index
    %c0_128 = arith.constant 0 : index
    %227 = vector.load %arg10[%c0_127, %c0_128] : memref<128x512xbf16, #tpu.memory_space<vmem>>, vector<128x512xbf16>
    %cst_129 = arith.constant dense<0.000000e+00> : vector<32x512xf32>
    %228 = tpu.matmul %226, %227, %cst_129 {dimension_numbers = #tpu.dot_dimension_numbers<[1], [0], [0], [1], [0, 0, 1, 1], [], []>} : vector<32x128xbf16>, vector<128x512xbf16>, vector<32x512xf32> -> vector<32x512xf32>
    %c0_130 = arith.constant 0 : index
    %c0_131 = arith.constant 0 : index
    %229 = vector.load %arg11[%c0_130, %c0_131] : memref<1x512xf32, #tpu.memory_space<vmem>>, vector<1x512xf32>
    %230 = vector.broadcast %229 : vector<1x512xf32> to vector<32x512xf32>
    %231 = arith.addf %228, %230 : vector<32x512xf32>
    %cst_132 = arith.constant 0.000000e+00 : f32
    %232 = vector.broadcast %cst_132 : f32 to vector<32x512xf32>
    %233 = arith.maximumf %231, %232 : vector<32x512xf32>
    %234 = arith.truncf %233 : vector<32x512xf32> to vector<32x512xbf16>
    %c0_133 = arith.constant 0 : index
    %c0_134 = arith.constant 0 : index
    %235 = vector.load %arg12[%c0_133, %c0_134] : memref<512x128xbf16, #tpu.memory_space<vmem>>, vector<512x128xbf16>
    %cst_135 = arith.constant dense<0.000000e+00> : vector<32x128xf32>
    %236 = tpu.matmul %234, %235, %cst_135 {dimension_numbers = #tpu.dot_dimension_numbers<[1], [0], [0], [1], [0, 0, 1, 1], [], []>} : vector<32x512xbf16>, vector<512x128xbf16>, vector<32x128xf32> -> vector<32x128xf32>
    %c0_136 = arith.constant 0 : index
    %c0_137 = arith.constant 0 : index
    %237 = vector.load %arg13[%c0_136, %c0_137] : memref<1x128xf32, #tpu.memory_space<vmem>>, vector<1x128xf32>
    %238 = vector.broadcast %237 : vector<1x128xf32> to vector<32x128xf32>
    %239 = arith.addf %236, %238 : vector<32x128xf32>
    %240 = arith.addf %203, %239 : vector<32x128xf32>
    %241 = vector.shape_cast %240 : vector<32x128xf32> to vector<2x16x128xf32>
    %c0_138 = arith.constant 0 : index
    %c0_139 = arith.constant 0 : index
    %c0_140 = arith.constant 0 : index
    %242 = vector.load %arg14[%c0_138, %c0_139, %c0_140] : memref<2x16x128xf32, #tpu.memory_space<vmem>>, vector<2x16x128xf32>
    tpu.vector_store %arg14[%c0_138, %c0_139, %c0_140], %241 {strides = array<i32>} : memref<2x16x128xf32, #tpu.memory_space<vmem>>, vector<2x16x128xf32>,
    return
  }
  func.func @transform_0(%arg0: i32) -> (i32, i32, i32) {
    %c0_i32 = arith.constant 0 : i32
    %c0_i32_0 = arith.constant 0 : i32
    %c0_i32_1 = arith.constant 0 : i32
    return %arg0, %c0_i32, %c0_i32_0 : i32, i32, i32
  }
  func.func @transform_1(%arg0: i32) -> (i32, i32) {
    %c0_i32 = arith.constant 0 : i32
    %c0_i32_0 = arith.constant 0 : i32
    %c0_i32_1 = arith.constant 0 : i32
    return %c0_i32, %c0_i32_0 : i32, i32
  }
  func.func @transform_2(%arg0: i32) -> (i32, i32) {
    %c0_i32 = arith.constant 0 : i32
    %c0_i32_0 = arith.constant 0 : i32
    %c0_i32_1 = arith.constant 0 : i32
    return %c0_i32, %c0_i32_0 : i32, i32
  }
  func.func @transform_3(%arg0: i32) -> (i32, i32) {
    %c0_i32 = arith.constant 0 : i32
    %c0_i32_0 = arith.constant 0 : i32
    %c0_i32_1 = arith.constant 0 : i32
    return %c0_i32, %c0_i32_0 : i32, i32
  }
  func.func @transform_4(%arg0: i32) -> (i32, i32, i32) {
    %c0_i32 = arith.constant 0 : i32
    %c0_i32_0 = arith.constant 0 : i32
    %c0_i32_1 = arith.constant 0 : i32
    %c0_i32_2 = arith.constant 0 : i32
    return %c0_i32, %c0_i32_0, %c0_i32_1 : i32, i32, i32
  }
  func.func @transform_5(%arg0: i32) -> (i32, i32) {
    %c0_i32 = arith.constant 0 : i32
    %c0_i32_0 = arith.constant 0 : i32
    %c0_i32_1 = arith.constant 0 : i32
    return %c0_i32, %c0_i32_0 : i32, i32
  }
  func.func @transform_6(%arg0: i32) -> (i32, i32) {
    %c0_i32 = arith.constant 0 : i32
    %c0_i32_0 = arith.constant 0 : i32
    %c0_i32_1 = arith.constant 0 : i32
    return %c0_i32, %c0_i32_0 : i32, i32
  }
  func.func @transform_7(%arg0: i32) -> (i32, i32) {
    %c0_i32 = arith.constant 0 : i32
    %c0_i32_0 = arith.constant 0 : i32
    %c0_i32_1 = arith.constant 0 : i32
    return %c0_i32, %c0_i32_0 : i32, i32
  }
  func.func @transform_8(%arg0: i32) -> (i32, i32) {
    %c0_i32 = arith.constant 0 : i32
    %c0_i32_0 = arith.constant 0 : i32
    %c0_i32_1 = arith.constant 0 : i32
    return %c0_i32, %c0_i32_0 : i32, i32
  }
  func.func @transform_9(%arg0: i32) -> (i32, i32) {
    %c0_i32 = arith.constant 0 : i32
    %c0_i32_0 = arith.constant 0 : i32
    %c0_i32_1 = arith.constant 0 : i32
    return %c0_i32, %c0_i32_0 : i32, i32
  }
  func.func @transform_10(%arg0: i32) -> (i32, i32) {
    %c0_i32 = arith.constant 0 : i32
    %c0_i32_0 = arith.constant 0 : i32
    %c0_i32_1 = arith.constant 0 : i32
    return %c0_i32, %c0_i32_0 : i32, i32
  }
  func.func @transform_11(%arg0: i32) -> (i32, i32) {
    %c0_i32 = arith.constant 0 : i32
    %c0_i32_0 = arith.constant 0 : i32
    %c0_i32_1 = arith.constant 0 : i32
    return %c0_i32, %c0_i32_0 : i32, i32
  }
  func.func @transform_12(%arg0: i32) -> (i32, i32) {
    %c0_i32 = arith.constant 0 : i32
    %c0_i32_0 = arith.constant 0 : i32
    %c0_i32_1 = arith.constant 0 : i32
    return %c0_i32, %c0_i32_0 : i32, i32
  }
  func.func @transform_13(%arg0: i32) -> (i32, i32, i32) {
    %c0_i32 = arith.constant 0 : i32
    %c0_i32_0 = arith.constant 0 : i32
    %c0_i32_1 = arith.constant 0 : i32
    return %arg0, %c0_i32, %c0_i32_0 : i32, i32, i32
  }
}

</mosaic_0001>

<llo_original>
// kernel: block_relpos_forward.1
$region0: #{block_relpos_forward.1}
  #allocation0 [shape = 'u32[]', space=smem, size = 0x4, offset = 0x4, fixed_abs, tag = 'smem constant byte address 0x4 - core index']
  #allocation1 [shape = 'u32[144,128]{1,0:T(1,128)}', space=vmem, size = 0x12000, scoped, tag = 'internal scratch']
  #allocation2 [shape = 'bf16[32,384]{1,0:T(16,128)(2,1)}', space=vmem, size = 0x6000, scoped, tag = 'scratch operand']
  #allocation3 [shape = 'bf16[32,128]{1,0:T(16,128)(2,1)}', space=vmem, size = 0x2000, scoped, tag = 'scratch operand']
  %s0 = inlined_call_operand.hbm [shape: f32[2,16,128], index: 0, kind: input, shape index: {}]
  %s1 = inlined_call_operand.vmem [shape: f32[1,128], index: 1, kind: input, shape index: {}]
  %s2 = inlined_call_operand.vmem [shape: f32[1,128], index: 2, kind: input, shape index: {}]
  %s3 = inlined_call_operand.hbm [shape: bf16[128,384], index: 3, kind: input, shape index: {}]
  %s4 = inlined_call_operand.hbm [shape: bf16[4,16,16], index: 4, kind: input, shape index: {}]
  %s5 = inlined_call_operand.hbm [shape: bf16[128,128], index: 5, kind: input, shape index: {}]
  %s6 = inlined_call_operand.vmem [shape: f32[1,128], index: 6, kind: input, shape index: {}]
  %s7 = inlined_call_operand.vmem [shape: f32[1,128], index: 7, kind: input, shape index: {}]
  %s8 = inlined_call_operand.vmem [shape: f32[1,128], index: 8, kind: input, shape index: {}]
  %s9 = inlined_call_operand.hbm [shape: bf16[128,512], index: 9, kind: input, shape index: {}]
  %s10 = inlined_call_operand.hbm [shape: f32[1,512], index: 10, kind: input, shape index: {}]
  %s11 = inlined_call_operand.hbm [shape: bf16[512,128], index: 11, kind: input, shape index: {}]
  %s12 = inlined_call_operand.vmem [shape: f32[1,128], index: 12, kind: input, shape index: {}]
  %s13 = inlined_call_operand.hbm [shape: f32[2,16,128], index: 13, kind: output, shape index: {}]
  %s14 = sld [smem:[#allocation0]]
  $region90: #{block_relpos_forward.1} parent=0
    _
  %s16 = ssub.s32 1, %s14
  %s17 = scalar_select 0, %s16, %s14
  $region1: #{block_relpos_forward.1} parent=0
    #allocation4 [shape = 'u8[16384]{0}', space=vmem, size = 0x4000, scoped, tag = 'input window, operand 0, single buffered']
    #allocation5 [shape = 's32[1]{0}', space=sflag, size = 0x4, scoped, tag = 'scoped memory for block_relpos_forward.1']
    #allocation6 [shape = 's32[1]{0}', space=sflag, size = 0x4, scoped, tag = 'scoped memory for block_relpos_forward.1']
    #allocation7 [shape = 'u8[98304]{0}', space=vmem, size = 0x18000, scoped, tag = 'input window, operand 3, single buffered']
    #allocation8 [shape = 's32[1]{0}', space=sflag, size = 0x4, scoped, tag = 'scoped memory for block_relpos_forward.1']
    #allocation9 [shape = 'u8[16384]{0}', space=vmem, size = 0x4000, scoped, tag = 'input window, operand 4, single buffered']
    #allocation10 [shape = 'u8[32768]{0}', space=vmem, size = 0x8000, scoped, tag = 'input window, operand 5, single buffered']
    #allocation11 [shape = 's32[1]{0}', space=sflag, size = 0x4, scoped, tag = 'scoped memory for block_relpos_forward.1']
    #allocation12 [shape = 'u8[131072]{0}', space=vmem, size = 0x20000, scoped, tag = 'input window, operand 9, single buffered']
    #allocation13 [shape = 'u8[2048]{0}', space=vmem, size = 0x800, scoped, tag = 'input window, operand 10, single buffered']
    #allocation14 [shape = 's32[1]{0}', space=sflag, size = 0x4, scoped, tag = 'scoped memory for block_relpos_forward.1']
    #allocation15 [shape = 'u8[131072]{0}', space=vmem, size = 0x20000, scoped, tag = 'input window, operand 11, single buffered']
    #allocation16 [shape = 'u8[16384]{0}', space=vmem, size = 0x4000, scoped, tag = 'output window, operand 0, single buffered']
    %18 = vsyncpa [#allocation5], 0
    %19 = vsyncpa [#allocation8], 0
    %20 = vsyncpa [#allocation11], 0
    %21 = vsyncpa [#allocation14], 0
    %22 = vsyncpa [#allocation6], 0
    // Predicated region
    $region2: #{block_relpos_forward.1} parent=1 // pred_check
      _
    $region3: #{block_relpos_forward.1} parent=1 // pred_check_branch
      %24 = sbr.rel (0) target = $region5
    $region4: #{block_relpos_forward.1} parent=1 // pred_region
      %s26 = ssub.s32 512, 512
      %27 = vsyncadd [#allocation5], %s26
      %s28 = sshll.u32 [#allocation4], 4
      %s29 = int_to_ptr.vmem [resolvable:$true] %s28
      %34 = dma.hbm_to_vmem [thread:$0]  %s0, 512, %s29, [#allocation5], 128, 128, 8
    $region5: #{block_relpos_forward.1} parent=1 // pred_fallthru
      _
    // Predicated region
    $region6: #{block_relpos_forward.1} parent=1 // pred_check
      _
    $region7: #{block_relpos_forward.1} parent=1 // pred_check_branch
      %36 = sbr.rel (0) target = $region9
    $region8: #{block_relpos_forward.1} parent=1 // pred_region
      _
    $region9: #{block_relpos_forward.1} parent=1 // pred_fallthru
      _
    // Predicated region
    $region10: #{block_relpos_forward.1} parent=1 // pred_check
      _
    $region11: #{block_relpos_forward.1} parent=1 // pred_check_branch
      %38 = sbr.rel (0) target = $region13
    $region12: #{block_relpos_forward.1} parent=1 // pred_region
      _
    $region13: #{block_relpos_forward.1} parent=1 // pred_fallthru
      _
    // Predicated region
    $region14: #{block_relpos_forward.1} parent=1 // pred_check
      _
    $region15: #{block_relpos_forward.1} parent=1 // pred_check_branch
      %40 = sbr.rel (0) target = $region17
    $region16: #{block_relpos_forward.1} parent=1 // pred_region
      %s42 = ssub.s32 3072, 3072
      %43 = vsyncadd [#allocation8], %s42
      %s44 = sshll.u32 [#allocation7], 4
      %s45 = int_to_ptr.vmem [resolvable:$true] %s44
      %50 = dma.hbm_to_vmem [thread:$0]  %s3, 3072, %s45, [#allocation8], 192, 192, 12
    $region17: #{block_relpos_forward.1} parent=1 // pred_fallthru
      _
    // Predicated region
    $region18: #{block_relpos_forward.1} parent=1 // pred_check
      _
    $region19: #{block_relpos_forward.1} parent=1 // pred_check_branch
      %52 = sbr.rel (0) target = $region21
    $region20: #{block_relpos_forward.1} parent=1 // pred_region
      %s54 = ssub.s32 512, 512
      %55 = vsyncadd [#allocation8], %s54
      %s56 = sshll.u32 [#allocation9], 4
      %s57 = int_to_ptr.vmem [resolvable:$true] %s56
      %62 = dma.hbm_to_vmem [thread:$0]  %s4, 512, %s57, [#allocation8], 64, 64, 4
    $region21: #{block_relpos_forward.1} parent=1 // pred_fallthru
      _
    // Predicated region
    $region22: #{block_relpos_forward.1} parent=1 // pred_check
      _
    $region23: #{block_relpos_forward.1} parent=1 // pred_check_branch
      %64 = sbr.rel (0) target = $region25
    $region24: #{block_relpos_forward.1} parent=1 // pred_region
      %s66 = ssub.s32 1024, 1024
      %67 = vsyncadd [#allocation11], %s66
      %s68 = sshll.u32 [#allocation10], 4
      %s69 = int_to_ptr.vmem [resolvable:$true] %s68
      %74 = dma.hbm_to_vmem [thread:$0]  %s5, 1024, %s69, [#allocation11], 64, 64, 4
    $region25: #{block_relpos_forward.1} parent=1 // pred_fallthru
      _
    // Predicated region
    $region26: #{block_relpos_forward.1} parent=1 // pred_check
      _
    $region27: #{block_relpos_forward.1} parent=1 // pred_check_branch
      %76 = sbr.rel (0) target = $region29
    $region28: #{block_relpos_forward.1} parent=1 // pred_region
      _
    $region29: #{block_relpos_forward.1} parent=1 // pred_fallthru
      _
    // Predicated region
    $region30: #{block_relpos_forward.1} parent=1 // pred_check
      _
    $region31: #{block_relpos_forward.1} parent=1 // pred_check_branch
      %78 = sbr.rel (0) target = $region33
    $region32: #{block_relpos_forward.1} parent=1 // pred_region
      _
    $region33: #{block_relpos_forward.1} parent=1 // pred_fallthru
      _
    // Predicated region
    $region34: #{block_relpos_forward.1} parent=1 // pred_check
      _
    $region35: #{block_relpos_forward.1} parent=1 // pred_check_branch
      %80 = sbr.rel (0) target = $region37
    $region36: #{block_relpos_forward.1} parent=1 // pred_region
      _
    $region37: #{block_relpos_forward.1} parent=1 // pred_fallthru
      _
    // Predicated region
    $region38: #{block_relpos_forward.1} parent=1 // pred_check
      _
    $region39: #{block_relpos_forward.1} parent=1 // pred_check_branch
      %82 = sbr.rel (0) target = $region41
    $region40: #{block_relpos_forward.1} parent=1 // pred_region
      %s84 = ssub.s32 4096, 4096
      %85 = vsyncadd [#allocation11], %s84
      %s86 = sshll.u32 [#allocation12], 4
      %s87 = int_to_ptr.vmem [resolvable:$true] %s86
      %92 = dma.hbm_to_vmem [thread:$0]  %s9, 4096, %s87, [#allocation11], 256, 256, 16
    $region41: #{block_relpos_forward.1} parent=1 // pred_fallthru
      _
    // Predicated region
    $region42: #{block_relpos_forward.1} parent=1 // pred_check
      _
    $region43: #{block_relpos_forward.1} parent=1 // pred_check_branch
      %94 = sbr.rel (0) target = $region45
    $region44: #{block_relpos_forward.1} parent=1 // pred_region
      %s96 = ssub.s32 64, 64
      %97 = vsyncadd [#allocation14], %s96
      %s99 = sshll.u32 [#allocation13], 4
      %s100 = int_to_ptr.vmem [resolvable:$true] %s99
      %102 = dma.hbm_to_vmem [thread:$0]  %s10, 64, %s100, [#allocation14]
    $region45: #{block_relpos_forward.1} parent=1 // pred_fallthru
      _
    // Predicated region
    $region46: #{block_relpos_forward.1} parent=1 // pred_check
      _
    $region47: #{block_relpos_forward.1} parent=1 // pred_check_branch
      %104 = sbr.rel (0) target = $region49
    $region48: #{block_relpos_forward.1} parent=1 // pred_region
      %s106 = ssub.s32 4096, 4096
      %107 = vsyncadd [#allocation14], %s106
      %s108 = sshll.u32 [#allocation15], 4
      %s109 = int_to_ptr.vmem [resolvable:$true] %s108
      %114 = dma.hbm_to_vmem [thread:$0]  %s11, 4096, %s109, [#allocation14], 64, 64, 4
    $region49: #{block_relpos_forward.1} parent=1 // pred_fallthru
      _
    // Predicated region
    $region50: #{block_relpos_forward.1} parent=1 // pred_check
      _
    $region51: #{block_relpos_forward.1} parent=1 // pred_check_branch
      %116 = sbr.rel (0) target = $region53
    $region52: #{block_relpos_forward.1} parent=1 // pred_region
      _
    $region53: #{block_relpos_forward.1} parent=1 // pred_fallthru
      _
    // Predicated region
    $region54: #{block_relpos_forward.1} parent=1 // pred_check
      _
    $region55: #{block_relpos_forward.1} parent=1 // pred_check_branch
      %118 = sbr.rel (0) target = $region57
    $region56: #{block_relpos_forward.1} parent=1 // pred_region
      %119 = dma.done [#allocation5], 512
    $region57: #{block_relpos_forward.1} parent=1 // pred_fallthru
      _
    // Predicated region
    $region58: #{block_relpos_forward.1} parent=1 // pred_check
      _
    $region59: #{block_relpos_forward.1} parent=1 // pred_check_branch
      %121 = sbr.rel (0) target = $region61
    $region60: #{block_relpos_forward.1} parent=1 // pred_region
      %122 = dma.done [#allocation8], 3072
    $region61: #{block_relpos_forward.1} parent=1 // pred_fallthru
      _
    // Predicated region
    $region62: #{block_relpos_forward.1} parent=1 // pred_check
      _
    $region63: #{block_relpos_forward.1} parent=1 // pred_check_branch
      %124 = sbr.rel (0) target = $region65
    $region64: #{block_relpos_forward.1} parent=1 // pred_region
      %125 = dma.done [#allocation8], 512
    $region65: #{block_relpos_forward.1} parent=1 // pred_fallthru
      _
    // Predicated region
    $region66: #{block_relpos_forward.1} parent=1 // pred_check
      _
    $region67: #{block_relpos_forward.1} parent=1 // pred_check_branch
      %127 = sbr.rel (0) target = $region69
    $region68: #{block_relpos_forward.1} parent=1 // pred_region
      %128 = dma.done [#allocation11], 1024
    $region69: #{block_relpos_forward.1} parent=1 // pred_fallthru
      _
    // Predicated region
    $region70: #{block_relpos_forward.1} parent=1 // pred_check
      _
    $region71: #{block_relpos_forward.1} parent=1 // pred_check_branch
      %130 = sbr.rel (0) target = $region73
    $region72: #{block_relpos_forward.1} parent=1 // pred_region
      %131 = dma.done [#allocation11], 4096
    $region73: #{block_relpos_forward.1} parent=1 // pred_fallthru
      _
    // Predicated region
    $region74: #{block_relpos_forward.1} parent=1 // pred_check
      _
    $region75: #{block_relpos_forward.1} parent=1 // pred_check_branch
      %133 = sbr.rel (0) target = $region77
    $region76: #{block_relpos_forward.1} parent=1 // pred_region
      %134 = dma.done [#allocation14], 64
    $region77: #{block_relpos_forward.1} parent=1 // pred_fallthru
      _
    // Predicated region
    $region78: #{block_relpos_forward.1} parent=1 // pred_check
      _
    $region79: #{block_relpos_forward.1} parent=1 // pred_check_branch
      %136 = sbr.rel (0) target = $region81
    $region80: #{block_relpos_forward.1} parent=1 // pred_region
      %137 = dma.done [#allocation14], 4096
    $region81: #{block_relpos_forward.1} parent=1 // pred_fallthru
      _
    %v139 = vld [vmem:[#allocation4] sm:$0xff]
    %v140 = vld [vmem:[#allocation4 + $0x8] sm:$0xff]
    %v141 = vld [vmem:[#allocation4 + $0x10] sm:$0xff]
    %v142 = vld [vmem:[#allocation4 + $0x18] sm:$0xff]
    %v143 = vld [vmem:[%s1] sm:$0x1]
    %v144 = vld [vmem:[%s2] sm:$0x1]
    %145 = vadd.xlane.f32.xlu0 %v139
    %v146 = vpop.xlane.xlu0 %145
    %147 = vadd.xlane.f32.xlu0 %v140
    %v148 = vpop.xlane.xlu0 %147
    %149 = vadd.xlane.f32.xlu0 %v141
    %v150 = vpop.xlane.xlu0 %149
    %151 = vadd.xlane.f32.xlu0 %v142
    %v152 = vpop.xlane.xlu0 %151
    %v153 = vrcp.pop 128.0
    %v154 = vmul.f32 %v146, %v153
    %v155 = vmul.f32 %v148, %v153
    %v156 = vmul.f32 %v150, %v153
    %v157 = vmul.f32 %v152, %v153
    %v158 = vsub.f32 %v139, %v154
    %v159 = vsub.f32 %v140, %v155
    %v160 = vsub.f32 %v141, %v156
    %v161 = vsub.f32 %v142, %v157
    %v162 = vmul.f32 %v158, %v158
    %v163 = vmul.f32 %v159, %v159
    %v164 = vmul.f32 %v160, %v160
    %v165 = vmul.f32 %v161, %v161
    %166 = vadd.xlane.f32.xlu0 %v162
    %v167 = vpop.xlane.xlu0 %166
    %168 = vadd.xlane.f32.xlu0 %v163
    %v169 = vpop.xlane.xlu0 %168
    %170 = vadd.xlane.f32.xlu0 %v164
    %v171 = vpop.xlane.xlu0 %170
    %172 = vadd.xlane.f32.xlu0 %v165
    %v173 = vpop.xlane.xlu0 %172
    %v174 = vmul.f32 %v167, %v153
    %v175 = vmul.f32 %v169, %v153
    %v176 = vmul.f32 %v171, %v153
    %v177 = vmul.f32 %v173, %v153
    %v178 = vadd.f32 %v174, 1e-05
    %v179 = vadd.f32 %v175, 1e-05
    %v180 = vadd.f32 %v176, 1e-05
    %v181 = vadd.f32 %v177, 1e-05
    %v182 = vrsqrt.pop %v178
    %v183 = vrsqrt.pop %v179
    %v184 = vrsqrt.pop %v180
    %v185 = vrsqrt.pop %v181
    %v186 = vmul.f32 %v158, %v182
    %v187 = vmul.f32 %v159, %v183
    %v188 = vmul.f32 %v160, %v184
    %v189 = vmul.f32 %v161, %v185
    %v191 = vlaneseq
    %v192 = vshrl.u32 %v191, 7
    %v193 = vsub.s32 0, %v192
    %v194 = vrot.slane %v143, %v193
    %v196 = vmul.f32 %v186, %v194
    %v197 = vmul.f32 %v187, %v194
    %v198 = vmul.f32 %v188, %v194
    %v199 = vmul.f32 %v189, %v194
    %v201 = vlaneseq
    %v202 = vshrl.u32 %v201, 7
    %v203 = vsub.s32 0, %v202
    %v204 = vrot.slane %v144, %v203
    %v206 = vadd.f32 %v196, %v204
    %v207 = vadd.f32 %v197, %v204
    %v208 = vadd.f32 %v198, %v204
    %v209 = vadd.f32 %v199, %v204
    %v210 = vpack.c.bf16 %v207, %v206
    %v211 = vpack.c.bf16 %v209, %v208
    %v212 = vld [vmem:[#allocation7] sm:$0xff]
    %v213 = vld [vmem:[#allocation7 + $0x8] sm:$0xf]
    %v214 = vld [vmem:[#allocation7 + $0xc] sm:$0xff]
    %v215 = vld [vmem:[#allocation7 + $0x14] sm:$0xf]
    %v216 = vld [vmem:[#allocation7 + $0x18] sm:$0xff]
    %v217 = vld [vmem:[#allocation7 + $0x20] sm:$0xf]
    %v218 = vld [vmem:[#allocation7 + $0x24] sm:$0xff]
    %v219 = vld [vmem:[#allocation7 + $0x2c] sm:$0xf]
    %v220 = vld [vmem:[#allocation7 + $0x30] sm:$0xff]
    %v221 = vld [vmem:[#allocation7 + $0x38] sm:$0xf]
    %v222 = vld [vmem:[#allocation7 + $0x3c] sm:$0xff]
    %v223 = vld [vmem:[#allocation7 + $0x44] sm:$0xf]
    %v224 = vld [vmem:[#allocation7 + $0x48] sm:$0xff]
    %v225 = vld [vmem:[#allocation7 + $0x50] sm:$0xf]
    %v226 = vld [vmem:[#allocation7 + $0x54] sm:$0xff]
    %v227 = vld [vmem:[#allocation7 + $0x5c] sm:$0xf]
    %v228 = vld [vmem:[#allocation7 + $0x60] sm:$0xff]
    %v229 = vld [vmem:[#allocation7 + $0x68] sm:$0xf]
    %v230 = vld [vmem:[#allocation7 + $0x6c] sm:$0xff]
    %v231 = vld [vmem:[#allocation7 + $0x74] sm:$0xf]
    %v232 = vld [vmem:[#allocation7 + $0x78] sm:$0xff]
    %v233 = vld [vmem:[#allocation7 + $0x80] sm:$0xf]
    %v234 = vld [vmem:[#allocation7 + $0x84] sm:$0xff]
    %v235 = vld [vmem:[#allocation7 + $0x8c] sm:$0xf]
    %v236 = vld [vmem:[#allocation7 + $0x90] sm:$0xff]
    %v237 = vld [vmem:[#allocation7 + $0x98] sm:$0xf]
    %v238 = vld [vmem:[#allocation7 + $0x9c] sm:$0xff]
    %v239 = vld [vmem:[#allocation7 + $0xa4] sm:$0xf]
    %v240 = vld [vmem:[#allocation7 + $0xa8] sm:$0xff]
    %v241 = vld [vmem:[#allocation7 + $0xb0] sm:$0xf]
    %v242 = vld [vmem:[#allocation7 + $0xb4] sm:$0xff]
    %v243 = vld [vmem:[#allocation7 + $0xbc] sm:$0xf]
    %v276 = vunpack.c.l.b16 %v212
    %v277 = vunpack.c.h.b16 %v212
    %v278 = vunpack.c.l.b16 %v213
    %v279 = vunpack.c.l.b16 %v214
    %v280 = vunpack.c.h.b16 %v214
    %v281 = vunpack.c.l.b16 %v215
    %v282 = vunpack.c.l.b16 %v216
    %v283 = vunpack.c.h.b16 %v216
    %v284 = vunpack.c.l.b16 %v217
    %v285 = vunpack.c.l.b16 %v218
    %v286 = vunpack.c.h.b16 %v218
    %v287 = vunpack.c.l.b16 %v219
    %v288 = vunpack.c.l.b16 %v220
    %v289 = vunpack.c.h.b16 %v220
    %v290 = vunpack.c.l.b16 %v221
    %v291 = vunpack.c.l.b16 %v222
    %v292 = vunpack.c.h.b16 %v222
    %v293 = vunpack.c.l.b16 %v223
    %v294 = vunpack.c.l.b16 %v224
    %v295 = vunpack.c.h.b16 %v224
    %v296 = vunpack.c.l.b16 %v225
    %v297 = vunpack.c.l.b16 %v226
    %v298 = vunpack.c.h.b16 %v226
    %v299 = vunpack.c.l.b16 %v227
    %v300 = vunpack.c.l.b16 %v228
    %v301 = vunpack.c.h.b16 %v228
    %v302 = vunpack.c.l.b16 %v229
    %v303 = vunpack.c.l.b16 %v230
    %v304 = vunpack.c.h.b16 %v230
    %v305 = vunpack.c.l.b16 %v231
    %v306 = vunpack.c.l.b16 %v232
    %v307 = vunpack.c.h.b16 %v232
    %v308 = vunpack.c.l.b16 %v233
    %v309 = vunpack.c.l.b16 %v234
    %v310 = vunpack.c.h.b16 %v234
    %v311 = vunpack.c.l.b16 %v235
    %v312 = vunpack.c.l.b16 %v236
    %v313 = vunpack.c.h.b16 %v236
    %v314 = vunpack.c.l.b16 %v237
    %v315 = vunpack.c.l.b16 %v238
    %v316 = vunpack.c.h.b16 %v238
    %v317 = vunpack.c.l.b16 %v239
    %v318 = vunpack.c.l.b16 %v240
    %v319 = vunpack.c.h.b16 %v240
    %v320 = vunpack.c.l.b16 %v241
    %v321 = vunpack.c.l.b16 %v242
    %v322 = vunpack.c.h.b16 %v242
    %v323 = vunpack.c.l.b16 %v243
    %v324 = vpack.c.b16 %v279, %v276
    %v325 = vpack.c.b16 %v280, %v277
    %v326 = vpack.c.b16 %v281, %v278
    %v327 = vpack.c.b16 %v285, %v282
    %v328 = vpack.c.b16 %v286, %v283
    %v329 = vpack.c.b16 %v287, %v284
    %v330 = vpack.c.b16 %v291, %v288
    %v331 = vpack.c.b16 %v292, %v289
    %v332 = vpack.c.b16 %v293, %v290
    %v333 = vpack.c.b16 %v297, %v294
    %v334 = vpack.c.b16 %v298, %v295
    %v335 = vpack.c.b16 %v299, %v296
    %v336 = vpack.c.b16 %v303, %v300
    %v337 = vpack.c.b16 %v304, %v301
    %v338 = vpack.c.b16 %v305, %v302
    %v339 = vpack.c.b16 %v309, %v306
    %v340 = vpack.c.b16 %v310, %v307
    %v341 = vpack.c.b16 %v311, %v308
    %v342 = vpack.c.b16 %v315, %v312
    %v343 = vpack.c.b16 %v316, %v313
    %v344 = vpack.c.b16 %v317, %v314
    %v345 = vpack.c.b16 %v321, %v318
    %v346 = vpack.c.b16 %v322, %v319
    %v347 = vpack.c.b16 %v323, %v320
    %372 = vmatprep.subr.bf16.mxu0 %v325
    %373 = vmatpush1.bf16.msra.mxu0 %v324
    %374 = vmatprep.subr.bf16.mxu0 %v328
    %375 = vmatpush1.bf16.msra.mxu0 %v327
    %376 = vmatprep.subr.bf16.mxu0 %v331
    %377 = vmatpush1.bf16.msra.mxu0 %v330
    %378 = vmatprep.subr.bf16.mxu0 %v334
    %379 = vmatpush1.bf16.msra.mxu0 %v333
    %380 = vmatprep.subr.bf16.mxu0 %v337
    %381 = vmatpush1.bf16.msra.mxu0 %v336
    %382 = vmatprep.subr.bf16.mxu0 %v340
    %383 = vmatpush1.bf16.msra.mxu0 %v339
    %384 = vmatprep.subr.bf16.mxu0 %v343
    %385 = vmatpush1.bf16.msra.mxu0 %v342
    %386 = vmatprep.subr.bf16.mxu0 %v346
    %387 = vmatpush1.bf16.msra.mxu0 %v345
    %388 = vmatprep.subr.bf16.mxu0 0
    %389 = vmatpush1.bf16.msra.mxu0 0
    %390 = vmatprep.subr.bf16.mxu0 0
    %391 = vmatpush1.bf16.msra.mxu0 0
    %392 = vmatprep.subr.bf16.mxu0 0
    %393 = vmatpush1.bf16.msra.mxu0 0
    %394 = vmatprep.subr.bf16.mxu0 0
    %395 = vmatpush1.bf16.msra.mxu0 0
    %396 = vmatprep.subr.bf16.mxu0 0
    %397 = vmatpush1.bf16.msra.mxu0 0
    %398 = vmatprep.subr.bf16.mxu0 0
    %399 = vmatpush1.bf16.msra.mxu0 0
    %400 = vmatprep.subr.bf16.mxu0 0
    %401 = vmatpush1.bf16.msra.mxu0 0
    %402 = vmatprep.subr.bf16.mxu0 0
    %403 = vmatpush1.bf16.msra.mxu0 0
    %404 = vmatprep.mubr.bf16.mxu0 0
    %405 = vmatmul.mubr.bf16.gmra.mrb[0].mxu0 %v210
    %v406 = vpop.f32.mrb[0].mxu0
    %v407 = vadd.f32 0.0, %v406
    %v408 = vpop.f32.mrb[0].mxu0
    %v409 = vadd.f32 0.0, %v408
    %v410 = vpop.f32.mrb[0].mxu0
    %v411 = vadd.f32 0.0, %v410
    %v412 = vpop.f32.mrb[0].mxu0
    %v413 = vadd.f32 0.0, %v412
    %414 = vmatprep.mubr.bf16.mxu0 0
    %415 = vmatmul.mubr.bf16.gmra.mrb[0].mxu0 %v211
    %v416 = vpop.f32.mrb[0].mxu0
    %v417 = vadd.f32 0.0, %v416
    %v418 = vpop.f32.mrb[0].mxu0
    %v419 = vadd.f32 0.0, %v418
    %v420 = vpop.f32.mrb[0].mxu0
    %v421 = vadd.f32 0.0, %v420
    %v422 = vpop.f32.mrb[0].mxu0
    %v423 = vadd.f32 0.0, %v422
    %424 = vdwg.mxu0
    %425 = vmatprep.subr.bf16.mxu0 0
    %426 = vmatpush1.bf16.msra.mxu0 %v326
    %427 = vmatprep.subr.bf16.mxu0 0
    %428 = vmatpush1.bf16.msra.mxu0 %v329
    %429 = vmatprep.subr.bf16.mxu0 0
    %430 = vmatpush1.bf16.msra.mxu0 %v332
    %431 = vmatprep.subr.bf16.mxu0 0
    %432 = vmatpush1.bf16.msra.mxu0 %v335
    %433 = vmatprep.subr.bf16.mxu0 0
    %434 = vmatpush1.bf16.msra.mxu0 %v338
    %435 = vmatprep.subr.bf16.mxu0 0
    %436 = vmatpush1.bf16.msra.mxu0 %v341
    %437 = vmatprep.subr.bf16.mxu0 0
    %438 = vmatpush1.bf16.msra.mxu0 %v344
    %439 = vmatprep.subr.bf16.mxu0 0
    %440 = vmatpush1.bf16.msra.mxu0 %v347
    %441 = vmatprep.subr.bf16.mxu0 0
    %442 = vmatpush1.bf16.msra.mxu0 0
    %443 = vmatprep.subr.bf16.mxu0 0
    %444 = vmatpush1.bf16.msra.mxu0 0
    %445 = vmatprep.subr.bf16.mxu0 0
    %446 = vmatpush1.bf16.msra.mxu0 0
    %447 = vmatprep.subr.bf16.mxu0 0
    %448 = vmatpush1.bf16.msra.mxu0 0
    %449 = vmatprep.subr.bf16.mxu0 0
    %450 = vmatpush1.bf16.msra.mxu0 0
    %451 = vmatprep.subr.bf16.mxu0 0
    %452 = vmatpush1.bf16.msra.mxu0 0
    %453 = vmatprep.subr.bf16.mxu0 0
    %454 = vmatpush1.bf16.msra.mxu0 0
    %455 = vmatprep.subr.bf16.mxu0 0
    %456 = vmatpush1.bf16.msra.mxu0 0
    %457 = vmatprep.mubr.bf16.mxu0 0
    %458 = vmatmul.mubr.bf16.gmra.mrb[0].mxu0 %v210
    %v459 = vpop.f32.mrb[0].mxu0
    %v460 = vadd.f32 0.0, %v459
    %v461 = vpop.f32.mrb[0].mxu0
    %v462 = vpop.f32.mrb[0].mxu0
    %v463 = vadd.f32 0.0, %v462
    %v464 = vpop.f32.mrb[0].mxu0
    %465 = vmatprep.mubr.bf16.mxu0 0
    %466 = vmatmul.mubr.bf16.gmra.mrb[0].mxu0 %v211
    %v467 = vpop.f32.mrb[0].mxu0
    %v468 = vadd.f32 0.0, %v467
    %v469 = vpop.f32.mrb[0].mxu0
    %v470 = vpop.f32.mrb[0].mxu0
    %v471 = vadd.f32 0.0, %v470
    %v472 = vpop.f32.mrb[0].mxu0
    %473 = vdwg.mxu0
    %v474 = vpack.c.bf16 %v411, %v407
    %v475 = vpack.c.bf16 %v413, %v409
    %v476 = vpack.c.bf16 %v463, %v460
    %v477 = vpack.c.bf16 %v421, %v417
    %v478 = vpack.c.bf16 %v423, %v419
    %v479 = vpack.c.bf16 %v471, %v468
    %480 = vst [vmem:[#allocation2] sm:$0xff] %v474
    %481 = vst [vmem:[#allocation2 + $0x8] sm:$0xff] %v475
    %482 = vst [vmem:[#allocation2 + $0x10] sm:$0xff] %v476
    %483 = vst [vmem:[#allocation2 + $0x18] sm:$0xff] %v477
    %484 = vst [vmem:[#allocation2 + $0x20] sm:$0xff] %v478
    %485 = vst [vmem:[#allocation2 + $0x28] sm:$0xff] %v479
    %v486 = vld [vmem:[#allocation2] sm:$0xff]
    %v487 = vld [vmem:[#allocation2 + $0x8] sm:$0xff]
    %v488 = vld [vmem:[#allocation2 + $0x10] sm:$0xff]
    %v489 = vld [vmem:[#allocation9] sm:$0xf]
    %v490 = vld [vmem:[#allocation9 + $0x4] sm:$0xf]
    %v491 = vunpack.c.l.bf16 %v489
    %v492 = vunpack.c.l.bf16 %v490
    %vm493 = vcmask 261120
    %v495 = vsel %vm493, %v486, 0
    %v498 = vsel %vm493, %v487, 0
    %500 = vmatprep.subr.bf16.mxu0 0
    %501 = vmatpush1.bf16.xpose.msra.mxu0 %v498
    %502 = vmatprep.subr.bf16.mxu0 0
    %503 = vmatpush1.bf16.xpose.msra.mxu0 0
    %504 = vmatprep.subr.bf16.mxu0 0
    %505 = vmatpush1.bf16.xpose.msra.mxu0 0
    %506 = vmatprep.subr.bf16.mxu0 0
    %507 = vmatpush1.bf16.xpose.msra.mxu0 0
    %508 = vmatprep.subr.bf16.mxu0 0
    %509 = vmatpush1.bf16.xpose.msra.mxu0 0
    %510 = vmatprep.subr.bf16.mxu0 0
    %511 = vmatpush1.bf16.xpose.msra.mxu0 0
    %512 = vmatprep.subr.bf16.mxu0 0
    %513 = vmatpush1.bf16.xpose.msra.mxu0 0
    %514 = vmatprep.subr.bf16.mxu0 0
    %515 = vmatpush1.bf16.xpose.msra.mxu0 0
    %516 = vmatprep.subr.bf16.mxu0 0
    %517 = vmatpush1.bf16.xpose.msra.mxu0 0
    %518 = vmatprep.subr.bf16.mxu0 0
    %519 = vmatpush1.bf16.xpose.msra.mxu0 0
    %520 = vmatprep.subr.bf16.mxu0 0
    %521 = vmatpush1.bf16.xpose.msra.mxu0 0
    %522 = vmatprep.subr.bf16.mxu0 0
    %523 = vmatpush1.bf16.xpose.msra.mxu0 0
    %524 = vmatprep.subr.bf16.mxu0 0
    %525 = vmatpush1.bf16.xpose.msra.mxu0 0
    %526 = vmatprep.subr.bf16.mxu0 0
    %527 = vmatpush1.bf16.xpose.msra.mxu0 0
    %528 = vmatprep.subr.bf16.mxu0 0
    %529 = vmatpush1.bf16.xpose.msra.mxu0 0
    %530 = vmatprep.subr.bf16.mxu0 0
    %531 = vmatpush1.bf16.xpose.msra.mxu0 0
    %532 = vmatprep.mubr.bf16.mxu0 0
    %533 = vmatmul.mubr.bf16.gmra.mrb[0].mxu0 %v495
    %v534 = vpop.f32.mrb[0].mxu0
    %v535 = vadd.f32 %v491, %v534
    %v536 = vpop.f32.mrb[0].mxu0
    %v537 = vpop.f32.mrb[0].mxu0
    %v538 = vadd.f32 %v492, %v537
    %v539 = vpop.f32.mrb[0].mxu0
    %540 = vdwg.mxu0
    %vm541 = vcmask 130048
    %v542 = vsel %vm541, %v535, -inf
    %543 = vmax.xlane.f32.xlu0 %v542
    %v544 = vpop.xlane.xlu0 %543
    %v545 = vsel %vm541, %v538, -inf
    %546 = vmax.xlane.f32.xlu0 %v545
    %v547 = vpop.xlane.xlu0 %546
    %v548 = vsub.f32 %v535, %v544
    %v549 = vsub.f32 %v538, %v547
    %v550 = vmul.f32 %v548, 1.442695
    %v551 = vpow.pop %v550
    %v552 = vmul.f32 %v549, 1.442695
    %v553 = vpow.pop %v552
    %v554 = vsel %vm541, %v551, 0.0
    %555 = vadd.xlane.f32.xlu0 %v554
    %v556 = vpop.xlane.xlu0 %555
    %v557 = vsel %vm541, %v553, 0.0
    %558 = vadd.xlane.f32.xlu0 %v557
    %v559 = vpop.xlane.xlu0 %558
    %v560 = vrcp.pop %v556
    %v561 = vrcp.pop %v559
    %v562 = vmul.f32 %v551, %v560
    %v563 = vmul.f32 %v553, %v561
    %v564 = vpack.c.bf16 %v563, %v562
    %v566 = vsel %vm541, %v564, 0
    %568 = vmatprep.subr.bf16.mxu0 0
    %569 = vmatpush1.bf16.msra.mxu0 %v488
    %570 = vmatprep.subr.bf16.mxu0 0
    %571 = vmatpush1.bf16.msra.mxu0 0
    %572 = vmatprep.subr.bf16.mxu0 0
    %573 = vmatpush1.bf16.msra.mxu0 0
    %574 = vmatprep.subr.bf16.mxu0 0
    %575 = vmatpush1.bf16.msra.mxu0 0
    %576 = vmatprep.subr.bf16.mxu0 0
    %577 = vmatpush1.bf16.msra.mxu0 0
    %578 = vmatprep.subr.bf16.mxu0 0
    %579 = vmatpush1.bf16.msra.mxu0 0
    %580 = vmatprep.subr.bf16.mxu0 0
    %581 = vmatpush1.bf16.msra.mxu0 0
    %582 = vmatprep.subr.bf16.mxu0 0
    %583 = vmatpush1.bf16.msra.mxu0 0
    %584 = vmatprep.subr.bf16.mxu0 0
    %585 = vmatpush1.bf16.msra.mxu0 0
    %586 = vmatprep.subr.bf16.mxu0 0
    %587 = vmatpush1.bf16.msra.mxu0 0
    %588 = vmatprep.subr.bf16.mxu0 0
    %589 = vmatpush1.bf16.msra.mxu0 0
    %590 = vmatprep.subr.bf16.mxu0 0
    %591 = vmatpush1.bf16.msra.mxu0 0
    %592 = vmatprep.subr.bf16.mxu0 0
    %593 = vmatpush1.bf16.msra.mxu0 0
    %594 = vmatprep.subr.bf16.mxu0 0
    %595 = vmatpush1.bf16.msra.mxu0 0
    %596 = vmatprep.subr.bf16.mxu0 0
    %597 = vmatpush1.bf16.msra.mxu0 0
    %598 = vmatprep.subr.bf16.mxu0 0
    %599 = vmatpush1.bf16.msra.mxu0 0
    %600 = vmatprep.mubr.bf16.mxu0 0
    %601 = vmatmul.mubr.bf16.gmra.mrb[0].mxu0 %v566
    %v602 = vpop.f32.mrb[0].mxu0
    %v603 = vadd.f32 0.0, %v602
    %v604 = vpop.f32.mrb[0].mxu0
    %v605 = vpop.f32.mrb[0].mxu0
    %v606 = vadd.f32 0.0, %v605
    %v607 = vpop.f32.mrb[0].mxu0
    %608 = vdwg.mxu0
    %s609 = scalar_lea.vmem [#allocation9], 8
    %v610 = vld [vmem:[%s609] sm:$0xf]
    %v611 = vld [vmem:[%s609 + $0x4] sm:$0xf]
    %v612 = vunpack.c.l.bf16 %v610
    %v613 = vunpack.c.l.bf16 %v611
    %615 = vrot.lane.b32.xlu0 %v486, 96
    %v616 = vpop.permute.xlu0 %615
    %618 = vrot.lane.b32.xlu0 %v487, 96
    %v619 = vpop.permute.xlu0 %618
    %v621 = vsel %vm493, %v616, 0
    %v624 = vsel %vm493, %v619, 0
    %626 = vmatprep.subr.bf16.mxu0 0
    %627 = vmatpush1.bf16.xpose.msra.mxu0 %v624
    %628 = vmatprep.subr.bf16.mxu0 0
    %629 = vmatpush1.bf16.xpose.msra.mxu0 0
    %630 = vmatprep.subr.bf16.mxu0 0
    %631 = vmatpush1.bf16.xpose.msra.mxu0 0
    %632 = vmatprep.subr.bf16.mxu0 0
    %633 = vmatpush1.bf16.xpose.msra.mxu0 0
    %634 = vmatprep.subr.bf16.mxu0 0
    %635 = vmatpush1.bf16.xpose.msra.mxu0 0
    %636 = vmatprep.subr.bf16.mxu0 0
    %637 = vmatpush1.bf16.xpose.msra.mxu0 0
    %638 = vmatprep.subr.bf16.mxu0 0
    %639 = vmatpush1.bf16.xpose.msra.mxu0 0
    %640 = vmatprep.subr.bf16.mxu0 0
    %641 = vmatpush1.bf16.xpose.msra.mxu0 0
    %642 = vmatprep.subr.bf16.mxu0 0
    %643 = vmatpush1.bf16.xpose.msra.mxu0 0
    %644 = vmatprep.subr.bf16.mxu0 0
    %645 = vmatpush1.bf16.xpose.msra.mxu0 0
    %646 = vmatprep.subr.bf16.mxu0 0
    %647 = vmatpush1.bf16.xpose.msra.mxu0 0
    %648 = vmatprep.subr.bf16.mxu0 0
    %649 = vmatpush1.bf16.xpose.msra.mxu0 0
    %650 = vmatprep.subr.bf16.mxu0 0
    %651 = vmatpush1.bf16.xpose.msra.mxu0 0
    %652 = vmatprep.subr.bf16.mxu0 0
    %653 = vmatpush1.bf16.xpose.msra.mxu0 0
    %654 = vmatprep.subr.bf16.mxu0 0
    %655 = vmatpush1.bf16.xpose.msra.mxu0 0
    %656 = vmatprep.subr.bf16.mxu0 0
    %657 = vmatpush1.bf16.xpose.msra.mxu0 0
    %658 = vmatprep.mubr.bf16.mxu0 0
    %659 = vmatmul.mubr.bf16.gmra.mrb[0].mxu0 %v621
    %v660 = vpop.f32.mrb[0].mxu0
    %v661 = vadd.f32 %v612, %v660
    %v662 = vpop.f32.mrb[0].mxu0
    %v663 = vpop.f32.mrb[0].mxu0
    %v664 = vadd.f32 %v613, %v663
    %v665 = vpop.f32.mrb[0].mxu0
    %666 = vdwg.mxu0
    %v667 = vsel %vm541, %v661, -inf
    %668 = vmax.xlane.f32.xlu0 %v667
    %v669 = vpop.xlane.xlu0 %668
    %v670 = vsel %vm541, %v664, -inf
    %671 = vmax.xlane.f32.xlu0 %v670
    %v672 = vpop.xlane.xlu0 %671
    %v673 = vsub.f32 %v661, %v669
    %v674 = vsub.f32 %v664, %v672
    %v675 = vmul.f32 %v673, 1.442695
    %v676 = vpow.pop %v675
    %v677 = vmul.f32 %v674, 1.442695
    %v678 = vpow.pop %v677
    %v679 = vsel %vm541, %v676, 0.0
    %680 = vadd.xlane.f32.xlu0 %v679
    %v681 = vpop.xlane.xlu0 %680
    %v682 = vsel %vm541, %v678, 0.0
    %683 = vadd.xlane.f32.xlu0 %v682
    %v684 = vpop.xlane.xlu0 %683
    %v685 = vrcp.pop %v681
    %v686 = vrcp.pop %v684
    %v687 = vmul.f32 %v676, %v685
    %v688 = vmul.f32 %v678, %v686
    %v689 = vpack.c.bf16 %v688, %v687
    %691 = vrot.lane.b32.xlu0 %v488, 96
    %v692 = vpop.permute.xlu0 %691
    %v695 = vsel %vm541, %v689, 0
    %697 = vmatprep.subr.bf16.mxu0 0
    %698 = vmatpush1.bf16.msra.mxu0 %v692
    %699 = vmatprep.subr.bf16.mxu0 0
    %700 = vmatpush1.bf16.msra.mxu0 0
    %701 = vmatprep.subr.bf16.mxu0 0
    %702 = vmatpush1.bf16.msra.mxu0 0
    %703 = vmatprep.subr.bf16.mxu0 0
    %704 = vmatpush1.bf16.msra.mxu0 0
    %705 = vmatprep.subr.bf16.mxu0 0
    %706 = vmatpush1.bf16.msra.mxu0 0
    %707 = vmatprep.subr.bf16.mxu0 0
    %708 = vmatpush1.bf16.msra.mxu0 0
    %709 = vmatprep.subr.bf16.mxu0 0
    %710 = vmatpush1.bf16.msra.mxu0 0
    %711 = vmatprep.subr.bf16.mxu0 0
    %712 = vmatpush1.bf16.msra.mxu0 0
    %713 = vmatprep.subr.bf16.mxu0 0
    %714 = vmatpush1.bf16.msra.mxu0 0
    %715 = vmatprep.subr.bf16.mxu0 0
    %716 = vmatpush1.bf16.msra.mxu0 0
    %717 = vmatprep.subr.bf16.mxu0 0
    %718 = vmatpush1.bf16.msra.mxu0 0
    %719 = vmatprep.subr.bf16.mxu0 0
    %720 = vmatpush1.bf16.msra.mxu0 0
    %721 = vmatprep.subr.bf16.mxu0 0
    %722 = vmatpush1.bf16.msra.mxu0 0
    %723 = vmatprep.subr.bf16.mxu0 0
    %724 = vmatpush1.bf16.msra.mxu0 0
    %725 = vmatprep.subr.bf16.mxu0 0
    %726 = vmatpush1.bf16.msra.mxu0 0
    %727 = vmatprep.subr.bf16.mxu0 0
    %728 = vmatpush1.bf16.msra.mxu0 0
    %729 = vmatprep.mubr.bf16.mxu0 0
    %730 = vmatmul.mubr.bf16.gmra.mrb[0].mxu0 %v695
    %v731 = vpop.f32.mrb[0].mxu0
    %v732 = vadd.f32 0.0, %v731
    %v733 = vpop.f32.mrb[0].mxu0
    %v734 = vpop.f32.mrb[0].mxu0
    %v735 = vadd.f32 0.0, %v734
    %v736 = vpop.f32.mrb[0].mxu0
    %737 = vdwg.mxu0
    %s738 = scalar_lea.vmem [#allocation9], 16
    %v739 = vld [vmem:[%s738] sm:$0xf]
    %v740 = vld [vmem:[%s738 + $0x4] sm:$0xf]
    %v741 = vunpack.c.l.bf16 %v739
    %v742 = vunpack.c.l.bf16 %v740
    %743 = vrot.lane.b32.xlu0 %v486, 64
    %v744 = vpop.permute.xlu0 %743
    %745 = vrot.lane.b32.xlu0 %v487, 64
    %v746 = vpop.permute.xlu0 %745
    %v748 = vsel %vm493, %v744, 0
    %v751 = vsel %vm493, %v746, 0
    %753 = vmatprep.subr.bf16.mxu0 0
    %754 = vmatpush1.bf16.xpose.msra.mxu0 %v751
    %755 = vmatprep.subr.bf16.mxu0 0
    %756 = vmatpush1.bf16.xpose.msra.mxu0 0
    %757 = vmatprep.subr.bf16.mxu0 0
    %758 = vmatpush1.bf16.xpose.msra.mxu0 0
    %759 = vmatprep.subr.bf16.mxu0 0
    %760 = vmatpush1.bf16.xpose.msra.mxu0 0
    %761 = vmatprep.subr.bf16.mxu0 0
    %762 = vmatpush1.bf16.xpose.msra.mxu0 0
    %763 = vmatprep.subr.bf16.mxu0 0
    %764 = vmatpush1.bf16.xpose.msra.mxu0 0
    %765 = vmatprep.subr.bf16.mxu0 0
    %766 = vmatpush1.bf16.xpose.msra.mxu0 0
    %767 = vmatprep.subr.bf16.mxu0 0
    %768 = vmatpush1.bf16.xpose.msra.mxu0 0
    %769 = vmatprep.subr.bf16.mxu0 0
    %770 = vmatpush1.bf16.xpose.msra.mxu0 0
    %771 = vmatprep.subr.bf16.mxu0 0
    %772 = vmatpush1.bf16.xpose.msra.mxu0 0
    %773 = vmatprep.subr.bf16.mxu0 0
    %774 = vmatpush1.bf16.xpose.msra.mxu0 0
    %775 = vmatprep.subr.bf16.mxu0 0
    %776 = vmatpush1.bf16.xpose.msra.mxu0 0
    %777 = vmatprep.subr.bf16.mxu0 0
    %778 = vmatpush1.bf16.xpose.msra.mxu0 0
    %779 = vmatprep.subr.bf16.mxu0 0
    %780 = vmatpush1.bf16.xpose.msra.mxu0 0
    %781 = vmatprep.subr.bf16.mxu0 0
    %782 = vmatpush1.bf16.xpose.msra.mxu0 0
    %783 = vmatprep.subr.bf16.mxu0 0
    %784 = vmatpush1.bf16.xpose.msra.mxu0 0
    %785 = vmatprep.mubr.bf16.mxu0 0
    %786 = vmatmul.mubr.bf16.gmra.mrb[0].mxu0 %v748
    %v787 = vpop.f32.mrb[0].mxu0
    %v788 = vadd.f32 %v741, %v787
    %v789 = vpop.f32.mrb[0].mxu0
    %v790 = vpop.f32.mrb[0].mxu0
    %v791 = vadd.f32 %v742, %v790
    %v792 = vpop.f32.mrb[0].mxu0
    %793 = vdwg.mxu0
    %v794 = vsel %vm541, %v788, -inf
    %795 = vmax.xlane.f32.xlu0 %v794
    %v796 = vpop.xlane.xlu0 %795
    %v797 = vsel %vm541, %v791, -inf
    %798 = vmax.xlane.f32.xlu0 %v797
    %v799 = vpop.xlane.xlu0 %798
    %v800 = vsub.f32 %v788, %v796
    %v801 = vsub.f32 %v791, %v799
    %v802 = vmul.f32 %v800, 1.442695
    %v803 = vpow.pop %v802
    %v804 = vmul.f32 %v801, 1.442695
    %v805 = vpow.pop %v804
    %v806 = vsel %vm541, %v803, 0.0
    %807 = vadd.xlane.f32.xlu0 %v806
    %v808 = vpop.xlane.xlu0 %807
    %v809 = vsel %vm541, %v805, 0.0
    %810 = vadd.xlane.f32.xlu0 %v809
    %v811 = vpop.xlane.xlu0 %810
    %v812 = vrcp.pop %v808
    %v813 = vrcp.pop %v811
    %v814 = vmul.f32 %v803, %v812
    %v815 = vmul.f32 %v805, %v813
    %v816 = vpack.c.bf16 %v815, %v814
    %817 = vrot.lane.b32.xlu0 %v488, 64
    %v818 = vpop.permute.xlu0 %817
    %v821 = vsel %vm541, %v816, 0
    %823 = vmatprep.subr.bf16.mxu0 0
    %824 = vmatpush1.bf16.msra.mxu0 %v818
    %825 = vmatprep.subr.bf16.mxu0 0
    %826 = vmatpush1.bf16.msra.mxu0 0
    %827 = vmatprep.subr.bf16.mxu0 0
    %828 = vmatpush1.bf16.msra.mxu0 0
    %829 = vmatprep.subr.bf16.mxu0 0
    %830 = vmatpush1.bf16.msra.mxu0 0
    %831 = vmatprep.subr.bf16.mxu0 0
    %832 = vmatpush1.bf16.msra.mxu0 0
    %833 = vmatprep.subr.bf16.mxu0 0
    %834 = vmatpush1.bf16.msra.mxu0 0
    %835 = vmatprep.subr.bf16.mxu0 0
    %836 = vmatpush1.bf16.msra.mxu0 0
    %837 = vmatprep.subr.bf16.mxu0 0
    %838 = vmatpush1.bf16.msra.mxu0 0
    %839 = vmatprep.subr.bf16.mxu0 0
    %840 = vmatpush1.bf16.msra.mxu0 0
    %841 = vmatprep.subr.bf16.mxu0 0
    %842 = vmatpush1.bf16.msra.mxu0 0
    %843 = vmatprep.subr.bf16.mxu0 0
    %844 = vmatpush1.bf16.msra.mxu0 0
    %845 = vmatprep.subr.bf16.mxu0 0
    %846 = vmatpush1.bf16.msra.mxu0 0
    %847 = vmatprep.subr.bf16.mxu0 0
    %848 = vmatpush1.bf16.msra.mxu0 0
    %849 = vmatprep.subr.bf16.mxu0 0
    %850 = vmatpush1.bf16.msra.mxu0 0
    %851 = vmatprep.subr.bf16.mxu0 0
    %852 = vmatpush1.bf16.msra.mxu0 0
    %853 = vmatprep.subr.bf16.mxu0 0
    %854 = vmatpush1.bf16.msra.mxu0 0
    %855 = vmatprep.mubr.bf16.mxu0 0
    %856 = vmatmul.mubr.bf16.gmra.mrb[0].mxu0 %v821
    %v857 = vpop.f32.mrb[0].mxu0
    %v858 = vadd.f32 0.0, %v857
    %v859 = vpop.f32.mrb[0].mxu0
    %v860 = vpop.f32.mrb[0].mxu0
    %v861 = vadd.f32 0.0, %v860
    %v862 = vpop.f32.mrb[0].mxu0
    %863 = vdwg.mxu0
    %s864 = scalar_lea.vmem [#allocation9], 24
    %v865 = vld [vmem:[%s864] sm:$0xf]
    %v866 = vld [vmem:[%s864 + $0x4] sm:$0xf]
    %v867 = vunpack.c.l.bf16 %v865
    %v868 = vunpack.c.l.bf16 %v866
    %869 = vrot.lane.b32.xlu0 %v486, 32
    %v870 = vpop.permute.xlu0 %869
    %871 = vrot.lane.b32.xlu0 %v487, 32
    %v872 = vpop.permute.xlu0 %871
    %v874 = vsel %vm493, %v870, 0
    %v877 = vsel %vm493, %v872, 0
    %879 = vmatprep.subr.bf16.mxu0 0
    %880 = vmatpush1.bf16.xpose.msra.mxu0 %v877
    %881 = vmatprep.subr.bf16.mxu0 0
    %882 = vmatpush1.bf16.xpose.msra.mxu0 0
    %883 = vmatprep.subr.bf16.mxu0 0
    %884 = vmatpush1.bf16.xpose.msra.mxu0 0
    %885 = vmatprep.subr.bf16.mxu0 0
    %886 = vmatpush1.bf16.xpose.msra.mxu0 0
    %887 = vmatprep.subr.bf16.mxu0 0
    %888 = vmatpush1.bf16.xpose.msra.mxu0 0
    %889 = vmatprep.subr.bf16.mxu0 0
    %890 = vmatpush1.bf16.xpose.msra.mxu0 0
    %891 = vmatprep.subr.bf16.mxu0 0
    %892 = vmatpush1.bf16.xpose.msra.mxu0 0
    %893 = vmatprep.subr.bf16.mxu0 0
    %894 = vmatpush1.bf16.xpose.msra.mxu0 0
    %895 = vmatprep.subr.bf16.mxu0 0
    %896 = vmatpush1.bf16.xpose.msra.mxu0 0
    %897 = vmatprep.subr.bf16.mxu0 0
    %898 = vmatpush1.bf16.xpose.msra.mxu0 0
    %899 = vmatprep.subr.bf16.mxu0 0
    %900 = vmatpush1.bf16.xpose.msra.mxu0 0
    %901 = vmatprep.subr.bf16.mxu0 0
    %902 = vmatpush1.bf16.xpose.msra.mxu0 0
    %903 = vmatprep.subr.bf16.mxu0 0
    %904 = vmatpush1.bf16.xpose.msra.mxu0 0
    %905 = vmatprep.subr.bf16.mxu0 0
    %906 = vmatpush1.bf16.xpose.msra.mxu0 0
    %907 = vmatprep.subr.bf16.mxu0 0
    %908 = vmatpush1.bf16.xpose.msra.mxu0 0
    %909 = vmatprep.subr.bf16.mxu0 0
    %910 = vmatpush1.bf16.xpose.msra.mxu0 0
    %911 = vmatprep.mubr.bf16.mxu0 0
    %912 = vmatmul.mubr.bf16.gmra.mrb[0].mxu0 %v874
    %v913 = vpop.f32.mrb[0].mxu0
    %v914 = vadd.f32 %v867, %v913
    %v915 = vpop.f32.mrb[0].mxu0
    %v916 = vpop.f32.mrb[0].mxu0
    %v917 = vadd.f32 %v868, %v916
    %v918 = vpop.f32.mrb[0].mxu0
    %919 = vdwg.mxu0
    %v920 = vsel %vm541, %v914, -inf
    %921 = vmax.xlane.f32.xlu0 %v920
    %v922 = vpop.xlane.xlu0 %921
    %v923 = vsel %vm541, %v917, -inf
    %924 = vmax.xlane.f32.xlu0 %v923
    %v925 = vpop.xlane.xlu0 %924
    %v926 = vsub.f32 %v914, %v922
    %v927 = vsub.f32 %v917, %v925
    %v928 = vmul.f32 %v926, 1.442695
    %v929 = vpow.pop %v928
    %v930 = vmul.f32 %v927, 1.442695
    %v931 = vpow.pop %v930
    %v932 = vsel %vm541, %v929, 0.0
    %933 = vadd.xlane.f32.xlu0 %v932
    %v934 = vpop.xlane.xlu0 %933
    %v935 = vsel %vm541, %v931, 0.0
    %936 = vadd.xlane.f32.xlu0 %v935
    %v937 = vpop.xlane.xlu0 %936
    %v938 = vrcp.pop %v934
    %v939 = vrcp.pop %v937
    %v940 = vmul.f32 %v929, %v938
    %v941 = vmul.f32 %v931, %v939
    %v942 = vpack.c.bf16 %v941, %v940
    %943 = vrot.lane.b32.xlu0 %v488, 32
    %v944 = vpop.permute.xlu0 %943
    %v947 = vsel %vm541, %v942, 0
    %949 = vmatprep.subr.bf16.mxu0 0
    %950 = vmatpush1.bf16.msra.mxu0 %v944
    %951 = vmatprep.subr.bf16.mxu0 0
    %952 = vmatpush1.bf16.msra.mxu0 0
    %953 = vmatprep.subr.bf16.mxu0 0
    %954 = vmatpush1.bf16.msra.mxu0 0
    %955 = vmatprep.subr.bf16.mxu0 0
    %956 = vmatpush1.bf16.msra.mxu0 0
    %957 = vmatprep.subr.bf16.mxu0 0
    %958 = vmatpush1.bf16.msra.mxu0 0
    %959 = vmatprep.subr.bf16.mxu0 0
    %960 = vmatpush1.bf16.msra.mxu0 0
    %961 = vmatprep.subr.bf16.mxu0 0
    %962 = vmatpush1.bf16.msra.mxu0 0
    %963 = vmatprep.subr.bf16.mxu0 0
    %964 = vmatpush1.bf16.msra.mxu0 0
    %965 = vmatprep.subr.bf16.mxu0 0
    %966 = vmatpush1.bf16.msra.mxu0 0
    %967 = vmatprep.subr.bf16.mxu0 0
    %968 = vmatpush1.bf16.msra.mxu0 0
    %969 = vmatprep.subr.bf16.mxu0 0
    %970 = vmatpush1.bf16.msra.mxu0 0
    %971 = vmatprep.subr.bf16.mxu0 0
    %972 = vmatpush1.bf16.msra.mxu0 0
    %973 = vmatprep.subr.bf16.mxu0 0
    %974 = vmatpush1.bf16.msra.mxu0 0
    %975 = vmatprep.subr.bf16.mxu0 0
    %976 = vmatpush1.bf16.msra.mxu0 0
    %977 = vmatprep.subr.bf16.mxu0 0
    %978 = vmatpush1.bf16.msra.mxu0 0
    %979 = vmatprep.subr.bf16.mxu0 0
    %980 = vmatpush1.bf16.msra.mxu0 0
    %981 = vmatprep.mubr.bf16.mxu0 0
    %982 = vmatmul.mubr.bf16.gmra.mrb[0].mxu0 %v947
    %v983 = vpop.f32.mrb[0].mxu0
    %v984 = vadd.f32 0.0, %v983
    %v985 = vpop.f32.mrb[0].mxu0
    %v986 = vpop.f32.mrb[0].mxu0
    %v987 = vadd.f32 0.0, %v986
    %v988 = vpop.f32.mrb[0].mxu0
    %989 = vdwg.mxu0
    %992 = vrot.lane.b32.xlu0 %v732, 32
    %v993 = vpop.permute.xlu0 %992
    %994 = vrot.lane.b32.xlu0 %v735, 32
    %v995 = vpop.permute.xlu0 %994
    %1000 = vrot.lane.b32.xlu0 %v858, 64
    %v1001 = vpop.permute.xlu0 %1000
    %1002 = vrot.lane.b32.xlu0 %v861, 64
    %v1003 = vpop.permute.xlu0 %1002
    %1008 = vrot.lane.b32.xlu0 %v984, 96
    %v1009 = vpop.permute.xlu0 %1008
    %1010 = vrot.lane.b32.xlu0 %v987, 96
    %v1011 = vpop.permute.xlu0 %1010
    %v1014 = vsel %vm493, %v603, %v993
    %v1015 = vsel %vm493, %v606, %v995
    %vm1016 = vcmask 523264
    %v1017 = vsel %vm1016, %v1014, %v1001
    %v1018 = vsel %vm1016, %v1015, %v1003
    %vm1019 = vcmask 785408
    %v1020 = vsel %vm1019, %v1017, %v1009
    %v1021 = vsel %vm1019, %v1018, %v1011
    %v1022 = vpack.c.bf16 %v1021, %v1020
    %1023 = vst [vmem:[#allocation3] sm:$0xff] %v1022
    %v1024 = vld [vmem:[#allocation2 + $0x18] sm:$0xff]
    %v1025 = vld [vmem:[#allocation2 + $0x20] sm:$0xff]
    %v1026 = vld [vmem:[#allocation2 + $0x28] sm:$0xff]
    %v1027 = vld [vmem:[#allocation9] sm:$0xf]
    %v1028 = vld [vmem:[#allocation9 + $0x4] sm:$0xf]
    %v1029 = vunpack.c.l.bf16 %v1027
    %v1030 = vunpack.c.l.bf16 %v1028
    %v1032 = vsel %vm493, %v1024, 0
    %v1035 = vsel %vm493, %v1025, 0
    %1037 = vmatprep.subr.bf16.mxu0 0
    %1038 = vmatpush1.bf16.xpose.msra.mxu0 %v1035
    %1039 = vmatprep.subr.bf16.mxu0 0
    %1040 = vmatpush1.bf16.xpose.msra.mxu0 0
    %1041 = vmatprep.subr.bf16.mxu0 0
    %1042 = vmatpush1.bf16.xpose.msra.mxu0 0
    %1043 = vmatprep.subr.bf16.mxu0 0
    %1044 = vmatpush1.bf16.xpose.msra.mxu0 0
    %1045 = vmatprep.subr.bf16.mxu0 0
    %1046 = vmatpush1.bf16.xpose.msra.mxu0 0
    %1047 = vmatprep.subr.bf16.mxu0 0
    %1048 = vmatpush1.bf16.xpose.msra.mxu0 0
    %1049 = vmatprep.subr.bf16.mxu0 0
    %1050 = vmatpush1.bf16.xpose.msra.mxu0 0
    %1051 = vmatprep.subr.bf16.mxu0 0
    %1052 = vmatpush1.bf16.xpose.msra.mxu0 0
    %1053 = vmatprep.subr.bf16.mxu0 0
    %1054 = vmatpush1.bf16.xpose.msra.mxu0 0
    %1055 = vmatprep.subr.bf16.mxu0 0
    %1056 = vmatpush1.bf16.xpose.msra.mxu0 0
    %1057 = vmatprep.subr.bf16.mxu0 0
    %1058 = vmatpush1.bf16.xpose.msra.mxu0 0
    %1059 = vmatprep.subr.bf16.mxu0 0
    %1060 = vmatpush1.bf16.xpose.msra.mxu0 0
    %1061 = vmatprep.subr.bf16.mxu0 0
    %1062 = vmatpush1.bf16.xpose.msra.mxu0 0
    %1063 = vmatprep.subr.bf16.mxu0 0
    %1064 = vmatpush1.bf16.xpose.msra.mxu0 0
    %1065 = vmatprep.subr.bf16.mxu0 0
    %1066 = vmatpush1.bf16.xpose.msra.mxu0 0
    %1067 = vmatprep.subr.bf16.mxu0 0
    %1068 = vmatpush1.bf16.xpose.msra.mxu0 0
    %1069 = vmatprep.mubr.bf16.mxu0 0
    %1070 = vmatmul.mubr.bf16.gmra.mrb[0].mxu0 %v1032
    %v1071 = vpop.f32.mrb[0].mxu0
    %v1072 = vadd.f32 %v1029, %v1071
    %v1073 = vpop.f32.mrb[0].mxu0
    %v1074 = vpop.f32.mrb[0].mxu0
    %v1075 = vadd.f32 %v1030, %v1074
    %v1076 = vpop.f32.mrb[0].mxu0
    %1077 = vdwg.mxu0
    %v1078 = vsel %vm541, %v1072, -inf
    %1079 = vmax.xlane.f32.xlu0 %v1078
    %v1080 = vpop.xlane.xlu0 %1079
    %v1081 = vsel %vm541, %v1075, -inf
    %1082 = vmax.xlane.f32.xlu0 %v1081
    %v1083 = vpop.xlane.xlu0 %1082
    %v1084 = vsub.f32 %v1072, %v1080
    %v1085 = vsub.f32 %v1075, %v1083
    %v1086 = vmul.f32 %v1084, 1.442695
    %v1087 = vpow.pop %v1086
    %v1088 = vmul.f32 %v1085, 1.442695
    %v1089 = vpow.pop %v1088
    %v1090 = vsel %vm541, %v1087, 0.0
    %1091 = vadd.xlane.f32.xlu0 %v1090
    %v1092 = vpop.xlane.xlu0 %1091
    %v1093 = vsel %vm541, %v1089, 0.0
    %1094 = vadd.xlane.f32.xlu0 %v1093
    %v1095 = vpop.xlane.xlu0 %1094
    %v1096 = vrcp.pop %v1092
    %v1097 = vrcp.pop %v1095
    %v1098 = vmul.f32 %v1087, %v1096
    %v1099 = vmul.f32 %v1089, %v1097
    %v1100 = vpack.c.bf16 %v1099, %v1098
    %v1102 = vsel %vm541, %v1100, 0
    %1104 = vmatprep.subr.bf16.mxu0 0
    %1105 = vmatpush1.bf16.msra.mxu0 %v1026
    %1106 = vmatprep.subr.bf16.mxu0 0
    %1107 = vmatpush1.bf16.msra.mxu0 0
    %1108 = vmatprep.subr.bf16.mxu0 0
    %1109 = vmatpush1.bf16.msra.mxu0 0
    %1110 = vmatprep.subr.bf16.mxu0 0
    %1111 = vmatpush1.bf16.msra.mxu0 0
    %1112 = vmatprep.subr.bf16.mxu0 0
    %1113 = vmatpush1.bf16.msra.mxu0 0
    %1114 = vmatprep.subr.bf16.mxu0 0
    %1115 = vmatpush1.bf16.msra.mxu0 0
    %1116 = vmatprep.subr.bf16.mxu0 0
    %1117 = vmatpush1.bf16.msra.mxu0 0
    %1118 = vmatprep.subr.bf16.mxu0 0
    %1119 = vmatpush1.bf16.msra.mxu0 0
    %1120 = vmatprep.subr.bf16.mxu0 0
    %1121 = vmatpush1.bf16.msra.mxu0 0
    %1122 = vmatprep.subr.bf16.mxu0 0
    %1123 = vmatpush1.bf16.msra.mxu0 0
    %1124 = vmatprep.subr.bf16.mxu0 0
    %1125 = vmatpush1.bf16.msra.mxu0 0
    %1126 = vmatprep.subr.bf16.mxu0 0
    %1127 = vmatpush1.bf16.msra.mxu0 0
    %1128 = vmatprep.subr.bf16.mxu0 0
    %1129 = vmatpush1.bf16.msra.mxu0 0
    %1130 = vmatprep.subr.bf16.mxu0 0
    %1131 = vmatpush1.bf16.msra.mxu0 0
    %1132 = vmatprep.subr.bf16.mxu0 0
    %1133 = vmatpush1.bf16.msra.mxu0 0
    %1134 = vmatprep.subr.bf16.mxu0 0
    %1135 = vmatpush1.bf16.msra.mxu0 0
    %1136 = vmatprep.mubr.bf16.mxu0 0
    %1137 = vmatmul.mubr.bf16.gmra.mrb[0].mxu0 %v1102
    %v1138 = vpop.f32.mrb[0].mxu0
    %v1139 = vadd.f32 0.0, %v1138
    %v1140 = vpop.f32.mrb[0].mxu0
    %v1141 = vpop.f32.mrb[0].mxu0
    %v1142 = vadd.f32 0.0, %v1141
    %v1143 = vpop.f32.mrb[0].mxu0
    %1144 = vdwg.mxu0
    %v1145 = vld [vmem:[%s609] sm:$0xf]
    %v1146 = vld [vmem:[%s609 + $0x4] sm:$0xf]
    %v1147 = vunpack.c.l.bf16 %v1145
    %v1148 = vunpack.c.l.bf16 %v1146
    %1150 = vrot.lane.b32.xlu0 %v1024, 96
    %v1151 = vpop.permute.xlu0 %1150
    %1153 = vrot.lane.b32.xlu0 %v1025, 96
    %v1154 = vpop.permute.xlu0 %1153
    %v1156 = vsel %vm493, %v1151, 0
    %v1159 = vsel %vm493, %v1154, 0
    %1161 = vmatprep.subr.bf16.mxu0 0
    %1162 = vmatpush1.bf16.xpose.msra.mxu0 %v1159
    %1163 = vmatprep.subr.bf16.mxu0 0
    %1164 = vmatpush1.bf16.xpose.msra.mxu0 0
    %1165 = vmatprep.subr.bf16.mxu0 0
    %1166 = vmatpush1.bf16.xpose.msra.mxu0 0
    %1167 = vmatprep.subr.bf16.mxu0 0
    %1168 = vmatpush1.bf16.xpose.msra.mxu0 0
    %1169 = vmatprep.subr.bf16.mxu0 0
    %1170 = vmatpush1.bf16.xpose.msra.mxu0 0
    %1171 = vmatprep.subr.bf16.mxu0 0
    %1172 = vmatpush1.bf16.xpose.msra.mxu0 0
    %1173 = vmatprep.subr.bf16.mxu0 0
    %1174 = vmatpush1.bf16.xpose.msra.mxu0 0
    %1175 = vmatprep.subr.bf16.mxu0 0
    %1176 = vmatpush1.bf16.xpose.msra.mxu0 0
    %1177 = vmatprep.subr.bf16.mxu0 0
    %1178 = vmatpush1.bf16.xpose.msra.mxu0 0
    %1179 = vmatprep.subr.bf16.mxu0 0
    %1180 = vmatpush1.bf16.xpose.msra.mxu0 0
    %1181 = vmatprep.subr.bf16.mxu0 0
    %1182 = vmatpush1.bf16.xpose.msra.mxu0 0
    %1183 = vmatprep.subr.bf16.mxu0 0
    %1184 = vmatpush1.bf16.xpose.msra.mxu0 0
    %1185 = vmatprep.subr.bf16.mxu0 0
    %1186 = vmatpush1.bf16.xpose.msra.mxu0 0
    %1187 = vmatprep.subr.bf16.mxu0 0
    %1188 = vmatpush1.bf16.xpose.msra.mxu0 0
    %1189 = vmatprep.subr.bf16.mxu0 0
    %1190 = vmatpush1.bf16.xpose.msra.mxu0 0
    %1191 = vmatprep.subr.bf16.mxu0 0
    %1192 = vmatpush1.bf16.xpose.msra.mxu0 0
    %1193 = vmatprep.mubr.bf16.mxu0 0
    %1194 = vmatmul.mubr.bf16.gmra.mrb[0].mxu0 %v1156
    %v1195 = vpop.f32.mrb[0].mxu0
    %v1196 = vadd.f32 %v1147, %v1195
    %v1197 = vpop.f32.mrb[0].mxu0
    %v1198 = vpop.f32.mrb[0].mxu0
    %v1199 = vadd.f32 %v1148, %v1198
    %v1200 = vpop.f32.mrb[0].mxu0
    %1201 = vdwg.mxu0
    %v1202 = vsel %vm541, %v1196, -inf
    %1203 = vmax.xlane.f32.xlu0 %v1202
    %v1204 = vpop.xlane.xlu0 %1203
    %v1205 = vsel %vm541, %v1199, -inf
    %1206 = vmax.xlane.f32.xlu0 %v1205
    %v1207 = vpop.xlane.xlu0 %1206
    %v1208 = vsub.f32 %v1196, %v1204
    %v1209 = vsub.f32 %v1199, %v1207
    %v1210 = vmul.f32 %v1208, 1.442695
    %v1211 = vpow.pop %v1210
    %v1212 = vmul.f32 %v1209, 1.442695
    %v1213 = vpow.pop %v1212
    %v1214 = vsel %vm541, %v1211, 0.0
    %1215 = vadd.xlane.f32.xlu0 %v1214
    %v1216 = vpop.xlane.xlu0 %1215
    %v1217 = vsel %vm541, %v1213, 0.0
    %1218 = vadd.xlane.f32.xlu0 %v1217
    %v1219 = vpop.xlane.xlu0 %1218
    %v1220 = vrcp.pop %v1216
    %v1221 = vrcp.pop %v1219
    %v1222 = vmul.f32 %v1211, %v1220
    %v1223 = vmul.f32 %v1213, %v1221
    %v1224 = vpack.c.bf16 %v1223, %v1222
    %1226 = vrot.lane.b32.xlu0 %v1026, 96
    %v1227 = vpop.permute.xlu0 %1226
    %v1230 = vsel %vm541, %v1224, 0
    %1232 = vmatprep.subr.bf16.mxu0 0
    %1233 = vmatpush1.bf16.msra.mxu0 %v1227
    %1234 = vmatprep.subr.bf16.mxu0 0
    %1235 = vmatpush1.bf16.msra.mxu0 0
    %1236 = vmatprep.subr.bf16.mxu0 0
    %1237 = vmatpush1.bf16.msra.mxu0 0
    %1238 = vmatprep.subr.bf16.mxu0 0
    %1239 = vmatpush1.bf16.msra.mxu0 0
    %1240 = vmatprep.subr.bf16.mxu0 0
    %1241 = vmatpush1.bf16.msra.mxu0 0
    %1242 = vmatprep.subr.bf16.mxu0 0
    %1243 = vmatpush1.bf16.msra.mxu0 0
    %1244 = vmatprep.subr.bf16.mxu0 0
    %1245 = vmatpush1.bf16.msra.mxu0 0
    %1246 = vmatprep.subr.bf16.mxu0 0
    %1247 = vmatpush1.bf16.msra.mxu0 0
    %1248 = vmatprep.subr.bf16.mxu0 0
    %1249 = vmatpush1.bf16.msra.mxu0 0
    %1250 = vmatprep.subr.bf16.mxu0 0
    %1251 = vmatpush1.bf16.msra.mxu0 0
    %1252 = vmatprep.subr.bf16.mxu0 0
    %1253 = vmatpush1.bf16.msra.mxu0 0
    %1254 = vmatprep.subr.bf16.mxu0 0
    %1255 = vmatpush1.bf16.msra.mxu0 0
    %1256 = vmatprep.subr.bf16.mxu0 0
    %1257 = vmatpush1.bf16.msra.mxu0 0
    %1258 = vmatprep.subr.bf16.mxu0 0
    %1259 = vmatpush1.bf16.msra.mxu0 0
    %1260 = vmatprep.subr.bf16.mxu0 0
    %1261 = vmatpush1.bf16.msra.mxu0 0
    %1262 = vmatprep.subr.bf16.mxu0 0
    %1263 = vmatpush1.bf16.msra.mxu0 0
    %1264 = vmatprep.mubr.bf16.mxu0 0
    %1265 = vmatmul.mubr.bf16.gmra.mrb[0].mxu0 %v1230
    %v1266 = vpop.f32.mrb[0].mxu0
    %v1267 = vadd.f32 0.0, %v1266
    %v1268 = vpop.f32.mrb[0].mxu0
    %v1269 = vpop.f32.mrb[0].mxu0
    %v1270 = vadd.f32 0.0, %v1269
    %v1271 = vpop.f32.mrb[0].mxu0
    %1272 = vdwg.mxu0
    %v1273 = vld [vmem:[%s738] sm:$0xf]
    %v1274 = vld [vmem:[%s738 + $0x4] sm:$0xf]
    %v1275 = vunpack.c.l.bf16 %v1273
    %v1276 = vunpack.c.l.bf16 %v1274
    %1277 = vrot.lane.b32.xlu0 %v1024, 64
    %v1278 = vpop.permute.xlu0 %1277
    %1279 = vrot.lane.b32.xlu0 %v1025, 64
    %v1280 = vpop.permute.xlu0 %1279
    %v1282 = vsel %vm493, %v1278, 0
    %v1285 = vsel %vm493, %v1280, 0
    %1287 = vmatprep.subr.bf16.mxu0 0
    %1288 = vmatpush1.bf16.xpose.msra.mxu0 %v1285
    %1289 = vmatprep.subr.bf16.mxu0 0
    %1290 = vmatpush1.bf16.xpose.msra.mxu0 0
    %1291 = vmatprep.subr.bf16.mxu0 0
    %1292 = vmatpush1.bf16.xpose.msra.mxu0 0
    %1293 = vmatprep.subr.bf16.mxu0 0
    %1294 = vmatpush1.bf16.xpose.msra.mxu0 0
    %1295 = vmatprep.subr.bf16.mxu0 0
    %1296 = vmatpush1.bf16.xpose.msra.mxu0 0
    %1297 = vmatprep.subr.bf16.mxu0 0
    %1298 = vmatpush1.bf16.xpose.msra.mxu0 0
    %1299 = vmatprep.subr.bf16.mxu0 0
    %1300 = vmatpush1.bf16.xpose.msra.mxu0 0
    %1301 = vmatprep.subr.bf16.mxu0 0
    %1302 = vmatpush1.bf16.xpose.msra.mxu0 0
    %1303 = vmatprep.subr.bf16.mxu0 0
    %1304 = vmatpush1.bf16.xpose.msra.mxu0 0
    %1305 = vmatprep.subr.bf16.mxu0 0
    %1306 = vmatpush1.bf16.xpose.msra.mxu0 0
    %1307 = vmatprep.subr.bf16.mxu0 0
    %1308 = vmatpush1.bf16.xpose.msra.mxu0 0
    %1309 = vmatprep.subr.bf16.mxu0 0
    %1310 = vmatpush1.bf16.xpose.msra.mxu0 0
    %1311 = vmatprep.subr.bf16.mxu0 0
    %1312 = vmatpush1.bf16.xpose.msra.mxu0 0
    %1313 = vmatprep.subr.bf16.mxu0 0
    %1314 = vmatpush1.bf16.xpose.msra.mxu0 0
    %1315 = vmatprep.subr.bf16.mxu0 0
    %1316 = vmatpush1.bf16.xpose.msra.mxu0 0
    %1317 = vmatprep.subr.bf16.mxu0 0
    %1318 = vmatpush1.bf16.xpose.msra.mxu0 0
    %1319 = vmatprep.mubr.bf16.mxu0 0
    %1320 = vmatmul.mubr.bf16.gmra.mrb[0].mxu0 %v1282
    %v1321 = vpop.f32.mrb[0].mxu0
    %v1322 = vadd.f32 %v1275, %v1321
    %v1323 = vpop.f32.mrb[0].mxu0
    %v1324 = vpop.f32.mrb[0].mxu0
    %v1325 = vadd.f32 %v1276, %v1324
    %v1326 = vpop.f32.mrb[0].mxu0
    %1327 = vdwg.mxu0
    %v1328 = vsel %vm541, %v1322, -inf
    %1329 = vmax.xlane.f32.xlu0 %v1328
    %v1330 = vpop.xlane.xlu0 %1329
    %v1331 = vsel %vm541, %v1325, -inf
    %1332 = vmax.xlane.f32.xlu0 %v1331
    %v1333 = vpop.xlane.xlu0 %1332
    %v1334 = vsub.f32 %v1322, %v1330
    %v1335 = vsub.f32 %v1325, %v1333
    %v1336 = vmul.f32 %v1334, 1.442695
    %v1337 = vpow.pop %v1336
    %v1338 = vmul.f32 %v1335, 1.442695
    %v1339 = vpow.pop %v1338
    %v1340 = vsel %vm541, %v1337, 0.0
    %1341 = vadd.xlane.f32.xlu0 %v1340
    %v1342 = vpop.xlane.xlu0 %1341
    %v1343 = vsel %vm541, %v1339, 0.0
    %1344 = vadd.xlane.f32.xlu0 %v1343
    %v1345 = vpop.xlane.xlu0 %1344
    %v1346 = vrcp.pop %v1342
    %v1347 = vrcp.pop %v1345
    %v1348 = vmul.f32 %v1337, %v1346
    %v1349 = vmul.f32 %v1339, %v1347
    %v1350 = vpack.c.bf16 %v1349, %v1348
    %1351 = vrot.lane.b32.xlu0 %v1026, 64
    %v1352 = vpop.permute.xlu0 %1351
    %v1355 = vsel %vm541, %v1350, 0
    %1357 = vmatprep.subr.bf16.mxu0 0
    %1358 = vmatpush1.bf16.msra.mxu0 %v1352
    %1359 = vmatprep.subr.bf16.mxu0 0
    %1360 = vmatpush1.bf16.msra.mxu0 0
    %1361 = vmatprep.subr.bf16.mxu0 0
    %1362 = vmatpush1.bf16.msra.mxu0 0
    %1363 = vmatprep.subr.bf16.mxu0 0
    %1364 = vmatpush1.bf16.msra.mxu0 0
    %1365 = vmatprep.subr.bf16.mxu0 0
    %1366 = vmatpush1.bf16.msra.mxu0 0
    %1367 = vmatprep.subr.bf16.mxu0 0
    %1368 = vmatpush1.bf16.msra.mxu0 0
    %1369 = vmatprep.subr.bf16.mxu0 0
    %1370 = vmatpush1.bf16.msra.mxu0 0
    %1371 = vmatprep.subr.bf16.mxu0 0
    %1372 = vmatpush1.bf16.msra.mxu0 0
    %1373 = vmatprep.subr.bf16.mxu0 0
    %1374 = vmatpush1.bf16.msra.mxu0 0
    %1375 = vmatprep.subr.bf16.mxu0 0
    %1376 = vmatpush1.bf16.msra.mxu0 0
    %1377 = vmatprep.subr.bf16.mxu0 0
    %1378 = vmatpush1.bf16.msra.mxu0 0
    %1379 = vmatprep.subr.bf16.mxu0 0
    %1380 = vmatpush1.bf16.msra.mxu0 0
    %1381 = vmatprep.subr.bf16.mxu0 0
    %1382 = vmatpush1.bf16.msra.mxu0 0
    %1383 = vmatprep.subr.bf16.mxu0 0
    %1384 = vmatpush1.bf16.msra.mxu0 0
    %1385 = vmatprep.subr.bf16.mxu0 0
    %1386 = vmatpush1.bf16.msra.mxu0 0
    %1387 = vmatprep.subr.bf16.mxu0 0
    %1388 = vmatpush1.bf16.msra.mxu0 0
    %1389 = vmatprep.mubr.bf16.mxu0 0
    %1390 = vmatmul.mubr.bf16.gmra.mrb[0].mxu0 %v1355
    %v1391 = vpop.f32.mrb[0].mxu0
    %v1392 = vadd.f32 0.0, %v1391
    %v1393 = vpop.f32.mrb[0].mxu0
    %v1394 = vpop.f32.mrb[0].mxu0
    %v1395 = vadd.f32 0.0, %v1394
    %v1396 = vpop.f32.mrb[0].mxu0
    %1397 = vdwg.mxu0
    %v1398 = vld [vmem:[%s864] sm:$0xf]
    %v1399 = vld [vmem:[%s864 + $0x4] sm:$0xf]
    %v1400 = vunpack.c.l.bf16 %v1398
    %v1401 = vunpack.c.l.bf16 %v1399
    %1402 = vrot.lane.b32.xlu0 %v1024, 32
    %v1403 = vpop.permute.xlu0 %1402
    %1404 = vrot.lane.b32.xlu0 %v1025, 32
    %v1405 = vpop.permute.xlu0 %1404
    %v1407 = vsel %vm493, %v1403, 0
    %v1410 = vsel %vm493, %v1405, 0
    %1412 = vmatprep.subr.bf16.mxu0 0
    %1413 = vmatpush1.bf16.xpose.msra.mxu0 %v1410
    %1414 = vmatprep.subr.bf16.mxu0 0
    %1415 = vmatpush1.bf16.xpose.msra.mxu0 0
    %1416 = vmatprep.subr.bf16.mxu0 0
    %1417 = vmatpush1.bf16.xpose.msra.mxu0 0
    %1418 = vmatprep.subr.bf16.mxu0 0
    %1419 = vmatpush1.bf16.xpose.msra.mxu0 0
    %1420 = vmatprep.subr.bf16.mxu0 0
    %1421 = vmatpush1.bf16.xpose.msra.mxu0 0
    %1422 = vmatprep.subr.bf16.mxu0 0
    %1423 = vmatpush1.bf16.xpose.msra.mxu0 0
    %1424 = vmatprep.subr.bf16.mxu0 0
    %1425 = vmatpush1.bf16.xpose.msra.mxu0 0
    %1426 = vmatprep.subr.bf16.mxu0 0
    %1427 = vmatpush1.bf16.xpose.msra.mxu0 0
    %1428 = vmatprep.subr.bf16.mxu0 0
    %1429 = vmatpush1.bf16.xpose.msra.mxu0 0
    %1430 = vmatprep.subr.bf16.mxu0 0
    %1431 = vmatpush1.bf16.xpose.msra.mxu0 0
    %1432 = vmatprep.subr.bf16.mxu0 0
    %1433 = vmatpush1.bf16.xpose.msra.mxu0 0
    %1434 = vmatprep.subr.bf16.mxu0 0
    %1435 = vmatpush1.bf16.xpose.msra.mxu0 0
    %1436 = vmatprep.subr.bf16.mxu0 0
    %1437 = vmatpush1.bf16.xpose.msra.mxu0 0
    %1438 = vmatprep.subr.bf16.mxu0 0
    %1439 = vmatpush1.bf16.xpose.msra.mxu0 0
    %1440 = vmatprep.subr.bf16.mxu0 0
    %1441 = vmatpush1.bf16.xpose.msra.mxu0 0
    %1442 = vmatprep.subr.bf16.mxu0 0
    %1443 = vmatpush1.bf16.xpose.msra.mxu0 0
    %1444 = vmatprep.mubr.bf16.mxu0 0
    %1445 = vmatmul.mubr.bf16.gmra.mrb[0].mxu0 %v1407
    %v1446 = vpop.f32.mrb[0].mxu0
    %v1447 = vadd.f32 %v1400, %v1446
    %v1448 = vpop.f32.mrb[0].mxu0
    %v1449 = vpop.f32.mrb[0].mxu0
    %v1450 = vadd.f32 %v1401, %v1449
    %v1451 = vpop.f32.mrb[0].mxu0
    %1452 = vdwg.mxu0
    %v1453 = vsel %vm541, %v1447, -inf
    %1454 = vmax.xlane.f32.xlu0 %v1453
    %v1455 = vpop.xlane.xlu0 %1454
    %v1456 = vsel %vm541, %v1450, -inf
    %1457 = vmax.xlane.f32.xlu0 %v1456
    %v1458 = vpop.xlane.xlu0 %1457
    %v1459 = vsub.f32 %v1447, %v1455
    %v1460 = vsub.f32 %v1450, %v1458
    %v1461 = vmul.f32 %v1459, 1.442695
    %v1462 = vpow.pop %v1461
    %v1463 = vmul.f32 %v1460, 1.442695
    %v1464 = vpow.pop %v1463
    %v1465 = vsel %vm541, %v1462, 0.0
    %1466 = vadd.xlane.f32.xlu0 %v1465
    %v1467 = vpop.xlane.xlu0 %1466
    %v1468 = vsel %vm541, %v1464, 0.0
    %1469 = vadd.xlane.f32.xlu0 %v1468
    %v1470 = vpop.xlane.xlu0 %1469
    %v1471 = vrcp.pop %v1467
    %v1472 = vrcp.pop %v1470
    %v1473 = vmul.f32 %v1462, %v1471
    %v1474 = vmul.f32 %v1464, %v1472
    %v1475 = vpack.c.bf16 %v1474, %v1473
    %1476 = vrot.lane.b32.xlu0 %v1026, 32
    %v1477 = vpop.permute.xlu0 %1476
    %v1480 = vsel %vm541, %v1475, 0
    %1482 = vmatprep.subr.bf16.mxu0 0
    %1483 = vmatpush1.bf16.msra.mxu0 %v1477
    %1484 = vmatprep.subr.bf16.mxu0 0
    %1485 = vmatpush1.bf16.msra.mxu0 0
    %1486 = vmatprep.subr.bf16.mxu0 0
    %1487 = vmatpush1.bf16.msra.mxu0 0
    %1488 = vmatprep.subr.bf16.mxu0 0
    %1489 = vmatpush1.bf16.msra.mxu0 0
    %1490 = vmatprep.subr.bf16.mxu0 0
    %1491 = vmatpush1.bf16.msra.mxu0 0
    %1492 = vmatprep.subr.bf16.mxu0 0
    %1493 = vmatpush1.bf16.msra.mxu0 0
    %1494 = vmatprep.subr.bf16.mxu0 0
    %1495 = vmatpush1.bf16.msra.mxu0 0
    %1496 = vmatprep.subr.bf16.mxu0 0
    %1497 = vmatpush1.bf16.msra.mxu0 0
    %1498 = vmatprep.subr.bf16.mxu0 0
    %1499 = vmatpush1.bf16.msra.mxu0 0
    %1500 = vmatprep.subr.bf16.mxu0 0
    %1501 = vmatpush1.bf16.msra.mxu0 0
    %1502 = vmatprep.subr.bf16.mxu0 0
    %1503 = vmatpush1.bf16.msra.mxu0 0
    %1504 = vmatprep.subr.bf16.mxu0 0
    %1505 = vmatpush1.bf16.msra.mxu0 0
    %1506 = vmatprep.subr.bf16.mxu0 0
    %1507 = vmatpush1.bf16.msra.mxu0 0
    %1508 = vmatprep.subr.bf16.mxu0 0
    %1509 = vmatpush1.bf16.msra.mxu0 0
    %1510 = vmatprep.subr.bf16.mxu0 0
    %1511 = vmatpush1.bf16.msra.mxu0 0
    %1512 = vmatprep.subr.bf16.mxu0 0
    %1513 = vmatpush1.bf16.msra.mxu0 0
    %1514 = vmatprep.mubr.bf16.mxu0 0
    %1515 = vmatmul.mubr.bf16.gmra.mrb[0].mxu0 %v1480
    %v1516 = vpop.f32.mrb[0].mxu0
    %v1517 = vadd.f32 0.0, %v1516
    %v1518 = vpop.f32.mrb[0].mxu0
    %v1519 = vpop.f32.mrb[0].mxu0
    %v1520 = vadd.f32 0.0, %v1519
    %v1521 = vpop.f32.mrb[0].mxu0
    %1522 = vdwg.mxu0
    %1525 = vrot.lane.b32.xlu0 %v1267, 32
    %v1526 = vpop.permute.xlu0 %1525
    %1527 = vrot.lane.b32.xlu0 %v1270, 32
    %v1528 = vpop.permute.xlu0 %1527
    %1533 = vrot.lane.b32.xlu0 %v1392, 64
    %v1534 = vpop.permute.xlu0 %1533
    %1535 = vrot.lane.b32.xlu0 %v1395, 64
    %v1536 = vpop.permute.xlu0 %1535
    %1541 = vrot.lane.b32.xlu0 %v1517, 96
    %v1542 = vpop.permute.xlu0 %1541
    %1543 = vrot.lane.b32.xlu0 %v1520, 96
    %v1544 = vpop.permute.xlu0 %1543
    %v1547 = vsel %vm493, %v1139, %v1526
    %v1548 = vsel %vm493, %v1142, %v1528
    %v1549 = vsel %vm1016, %v1547, %v1534
    %v1550 = vsel %vm1016, %v1548, %v1536
    %v1551 = vsel %vm1019, %v1549, %v1542
    %v1552 = vsel %vm1019, %v1550, %v1544
    %v1553 = vpack.c.bf16 %v1552, %v1551
    %1554 = vst [vmem:[#allocation3 + $0x8] sm:$0xff] %v1553
    %v1555 = vld [vmem:[#allocation3] sm:$0xff]
    %v1556 = vld [vmem:[#allocation3 + $0x8] sm:$0xff]
    %v1557 = vld [vmem:[#allocation10] sm:$0xf]
    %v1558 = vld [vmem:[#allocation10 + $0x4] sm:$0xf]
    %v1559 = vld [vmem:[#allocation10 + $0x8] sm:$0xf]
    %v1560 = vld [vmem:[#allocation10 + $0xc] sm:$0xf]
    %v1561 = vld [vmem:[#allocation10 + $0x10] sm:$0xf]
    %v1562 = vld [vmem:[#allocation10 + $0x14] sm:$0xf]
    %v1563 = vld [vmem:[#allocation10 + $0x18] sm:$0xf]
    %v1564 = vld [vmem:[#allocation10 + $0x1c] sm:$0xf]
    %v1565 = vld [vmem:[#allocation10 + $0x20] sm:$0xf]
    %v1566 = vld [vmem:[#allocation10 + $0x24] sm:$0xf]
    %v1567 = vld [vmem:[#allocation10 + $0x28] sm:$0xf]
    %v1568 = vld [vmem:[#allocation10 + $0x2c] sm:$0xf]
    %v1569 = vld [vmem:[#allocation10 + $0x30] sm:$0xf]
    %v1570 = vld [vmem:[#allocation10 + $0x34] sm:$0xf]
    %v1571 = vld [vmem:[#allocation10 + $0x38] sm:$0xf]
    %v1572 = vld [vmem:[#allocation10 + $0x3c] sm:$0xf]
    %v1573 = vld [vmem:[%s6] sm:$0x1]
    %v1575 = vlaneseq
    %v1576 = vshrl.u32 %v1575, 7
    %v1577 = vsub.s32 0, %v1576
    %v1578 = vrot.slane %v1573, %v1577
    %v1596 = vunpack.c.l.b16 %v1557
    %v1597 = vunpack.c.l.b16 %v1558
    %v1598 = vunpack.c.l.b16 %v1559
    %v1599 = vunpack.c.l.b16 %v1560
    %v1600 = vunpack.c.l.b16 %v1561
    %v1601 = vunpack.c.l.b16 %v1562
    %v1602 = vunpack.c.l.b16 %v1563
    %v1603 = vunpack.c.l.b16 %v1564
    %v1604 = vunpack.c.l.b16 %v1565
    %v1605 = vunpack.c.l.b16 %v1566
    %v1606 = vunpack.c.l.b16 %v1567
    %v1607 = vunpack.c.l.b16 %v1568
    %v1608 = vunpack.c.l.b16 %v1569
    %v1609 = vunpack.c.l.b16 %v1570
    %v1610 = vunpack.c.l.b16 %v1571
    %v1611 = vunpack.c.l.b16 %v1572
    %v1612 = vpack.c.b16 %v1597, %v1596
    %v1613 = vpack.c.b16 %v1599, %v1598
    %v1614 = vpack.c.b16 %v1601, %v1600
    %v1615 = vpack.c.b16 %v1603, %v1602
    %v1616 = vpack.c.b16 %v1605, %v1604
    %v1617 = vpack.c.b16 %v1607, %v1606
    %v1618 = vpack.c.b16 %v1609, %v1608
    %v1619 = vpack.c.b16 %v1611, %v1610
    %1628 = vmatprep.subr.bf16.mxu0 0
    %1629 = vmatpush1.bf16.msra.mxu0 %v1612
    %1630 = vmatprep.subr.bf16.mxu0 0
    %1631 = vmatpush1.bf16.msra.mxu0 %v1613
    %1632 = vmatprep.subr.bf16.mxu0 0
    %1633 = vmatpush1.bf16.msra.mxu0 %v1614
    %1634 = vmatprep.subr.bf16.mxu0 0
    %1635 = vmatpush1.bf16.msra.mxu0 %v1615
    %1636 = vmatprep.subr.bf16.mxu0 0
    %1637 = vmatpush1.bf16.msra.mxu0 %v1616
    %1638 = vmatprep.subr.bf16.mxu0 0
    %1639 = vmatpush1.bf16.msra.mxu0 %v1617
    %1640 = vmatprep.subr.bf16.mxu0 0
    %1641 = vmatpush1.bf16.msra.mxu0 %v1618
    %1642 = vmatprep.subr.bf16.mxu0 0
    %1643 = vmatpush1.bf16.msra.mxu0 %v1619
    %1644 = vmatprep.subr.bf16.mxu0 0
    %1645 = vmatpush1.bf16.msra.mxu0 0
    %1646 = vmatprep.subr.bf16.mxu0 0
    %1647 = vmatpush1.bf16.msra.mxu0 0
    %1648 = vmatprep.subr.bf16.mxu0 0
    %1649 = vmatpush1.bf16.msra.mxu0 0
    %1650 = vmatprep.subr.bf16.mxu0 0
    %1651 = vmatpush1.bf16.msra.mxu0 0
    %1652 = vmatprep.subr.bf16.mxu0 0
    %1653 = vmatpush1.bf16.msra.mxu0 0
    %1654 = vmatprep.subr.bf16.mxu0 0
    %1655 = vmatpush1.bf16.msra.mxu0 0
    %1656 = vmatprep.subr.bf16.mxu0 0
    %1657 = vmatpush1.bf16.msra.mxu0 0
    %1658 = vmatprep.subr.bf16.mxu0 0
    %1659 = vmatpush1.bf16.msra.mxu0 0
    %1660 = vmatprep.mubr.bf16.mxu0 0
    %1661 = vmatmul.mubr.bf16.gmra.mrb[0].mxu0 %v1555
    %v1662 = vpop.f32.mrb[0].mxu0
    %v1663 = vadd.f32 %v1578, %v1662
    %v1664 = vpop.f32.mrb[0].mxu0
    %v1665 = vpop.f32.mrb[0].mxu0
    %v1666 = vadd.f32 %v1578, %v1665
    %v1667 = vpop.f32.mrb[0].mxu0
    %1668 = vmatprep.mubr.bf16.mxu0 0
    %1669 = vmatmul.mubr.bf16.gmra.mrb[0].mxu0 %v1556
    %v1670 = vpop.f32.mrb[0].mxu0
    %v1671 = vadd.f32 %v1578, %v1670
    %v1672 = vpop.f32.mrb[0].mxu0
    %v1673 = vpop.f32.mrb[0].mxu0
    %v1674 = vadd.f32 %v1578, %v1673
    %v1675 = vpop.f32.mrb[0].mxu0
    %1676 = vdwg.mxu0
    %v1677 = vld [vmem:[#allocation4] sm:$0xff]
    %v1678 = vld [vmem:[#allocation4 + $0x8] sm:$0xff]
    %v1679 = vld [vmem:[#allocation4 + $0x10] sm:$0xff]
    %v1680 = vld [vmem:[#allocation4 + $0x18] sm:$0xff]
    %v1681 = vadd.f32 %v1677, %v1663
    %v1682 = vadd.f32 %v1678, %v1666
    %v1683 = vadd.f32 %v1679, %v1671
    %v1684 = vadd.f32 %v1680, %v1674
    %v1685 = vld [vmem:[%s7] sm:$0x1]
    %v1686 = vld [vmem:[%s8] sm:$0x1]
    %1687 = vadd.xlane.f32.xlu0 %v1681
    %v1688 = vpop.xlane.xlu0 %1687
    %1689 = vadd.xlane.f32.xlu0 %v1682
    %v1690 = vpop.xlane.xlu0 %1689
    %1691 = vadd.xlane.f32.xlu0 %v1683
    %v1692 = vpop.xlane.xlu0 %1691
    %1693 = vadd.xlane.f32.xlu0 %v1684
    %v1694 = vpop.xlane.xlu0 %1693
    %v1695 = vmul.f32 %v1688, %v153
    %v1696 = vmul.f32 %v1690, %v153
    %v1697 = vmul.f32 %v1692, %v153
    %v1698 = vmul.f32 %v1694, %v153
    %v1699 = vsub.f32 %v1681, %v1695
    %v1700 = vsub.f32 %v1682, %v1696
    %v1701 = vsub.f32 %v1683, %v1697
    %v1702 = vsub.f32 %v1684, %v1698
    %v1703 = vmul.f32 %v1699, %v1699
    %v1704 = vmul.f32 %v1700, %v1700
    %v1705 = vmul.f32 %v1701, %v1701
    %v1706 = vmul.f32 %v1702, %v1702
    %1707 = vadd.xlane.f32.xlu0 %v1703
    %v1708 = vpop.xlane.xlu0 %1707
    %1709 = vadd.xlane.f32.xlu0 %v1704
    %v1710 = vpop.xlane.xlu0 %1709
    %1711 = vadd.xlane.f32.xlu0 %v1705
    %v1712 = vpop.xlane.xlu0 %1711
    %1713 = vadd.xlane.f32.xlu0 %v1706
    %v1714 = vpop.xlane.xlu0 %1713
    %v1715 = vmul.f32 %v1708, %v153
    %v1716 = vmul.f32 %v1710, %v153
    %v1717 = vmul.f32 %v1712, %v153
    %v1718 = vmul.f32 %v1714, %v153
    %v1719 = vadd.f32 %v1715, 1e-05
    %v1720 = vadd.f32 %v1716, 1e-05
    %v1721 = vadd.f32 %v1717, 1e-05
    %v1722 = vadd.f32 %v1718, 1e-05
    %v1723 = vrsqrt.pop %v1719
    %v1724 = vrsqrt.pop %v1720
    %v1725 = vrsqrt.pop %v1721
    %v1726 = vrsqrt.pop %v1722
    %v1727 = vmul.f32 %v1699, %v1723
    %v1728 = vmul.f32 %v1700, %v1724
    %v1729 = vmul.f32 %v1701, %v1725
    %v1730 = vmul.f32 %v1702, %v1726
    %v1732 = vlaneseq
    %v1733 = vshrl.u32 %v1732, 7
    %v1734 = vsub.s32 0, %v1733
    %v1735 = vrot.slane %v1685, %v1734
    %v1737 = vmul.f32 %v1727, %v1735
    %v1738 = vmul.f32 %v1728, %v1735
    %v1739 = vmul.f32 %v1729, %v1735
    %v1740 = vmul.f32 %v1730, %v1735
    %v1742 = vlaneseq
    %v1743 = vshrl.u32 %v1742, 7
    %v1744 = vsub.s32 0, %v1743
    %v1745 = vrot.slane %v1686, %v1744
    %v1747 = vadd.f32 %v1737, %v1745
    %v1748 = vadd.f32 %v1738, %v1745
    %v1749 = vadd.f32 %v1739, %v1745
    %v1750 = vadd.f32 %v1740, %v1745
    %v1751 = vpack.c.bf16 %v1748, %v1747
    %v1752 = vpack.c.bf16 %v1750, %v1749
    %v1753 = vld [vmem:[#allocation12] sm:$0xff]
    %v1754 = vld [vmem:[#allocation12 + $0x8] sm:$0xff]
    %v1755 = vld [vmem:[#allocation12 + $0x10] sm:$0xff]
    %v1756 = vld [vmem:[#allocation12 + $0x18] sm:$0xff]
    %v1757 = vld [vmem:[#allocation12 + $0x20] sm:$0xff]
    %v1758 = vld [vmem:[#allocation12 + $0x28] sm:$0xff]
    %v1759 = vld [vmem:[#allocation12 + $0x30] sm:$0xff]
    %v1760 = vld [vmem:[#allocation12 + $0x38] sm:$0xff]
    %v1761 = vld [vmem:[#allocation12 + $0x40] sm:$0xff]
    %v1762 = vld [vmem:[#allocation12 + $0x48] sm:$0xff]
    %v1763 = vld [vmem:[#allocation12 + $0x50] sm:$0xff]
    %v1764 = vld [vmem:[#allocation12 + $0x58] sm:$0xff]
    %v1765 = vld [vmem:[#allocation12 + $0x60] sm:$0xff]
    %v1766 = vld [vmem:[#allocation12 + $0x68] sm:$0xff]
    %v1767 = vld [vmem:[#allocation12 + $0x70] sm:$0xff]
    %v1768 = vld [vmem:[#allocation12 + $0x78] sm:$0xff]
    %v1769 = vld [vmem:[#allocation12 + $0x80] sm:$0xff]
    %v1770 = vld [vmem:[#allocation12 + $0x88] sm:$0xff]
    %v1771 = vld [vmem:[#allocation12 + $0x90] sm:$0xff]
    %v1772 = vld [vmem:[#allocation12 + $0x98] sm:$0xff]
    %v1773 = vld [vmem:[#allocation12 + $0xa0] sm:$0xff]
    %v1774 = vld [vmem:[#allocation12 + $0xa8] sm:$0xff]
    %v1775 = vld [vmem:[#allocation12 + $0xb0] sm:$0xff]
    %v1776 = vld [vmem:[#allocation12 + $0xb8] sm:$0xff]
    %v1777 = vld [vmem:[#allocation12 + $0xc0] sm:$0xff]
    %v1778 = vld [vmem:[#allocation12 + $0xc8] sm:$0xff]
    %v1779 = vld [vmem:[#allocation12 + $0xd0] sm:$0xff]
    %v1780 = vld [vmem:[#allocation12 + $0xd8] sm:$0xff]
    %v1781 = vld [vmem:[#allocation12 + $0xe0] sm:$0xff]
    %v1782 = vld [vmem:[#allocation12 + $0xe8] sm:$0xff]
    %v1783 = vld [vmem:[#allocation12 + $0xf0] sm:$0xff]
    %v1784 = vld [vmem:[#allocation12 + $0xf8] sm:$0xff]
    %v1785 = vld [vmem:[#allocation13] sm:$0xf]
    %v1787 = vlaneseq
    %v1788 = vshrl.u32 %v1787, 7
    %v1789 = vsub.s32 0, %v1788
    %v1790 = vrot.slane %v1785, %v1789
    %v1791 = vlaneseq
    %v1792 = vshrl.u32 %v1791, 7
    %v1793 = vsub.s32 1, %v1792
    %v1794 = vrot.slane %v1785, %v1793
    %v1795 = vlaneseq
    %v1796 = vshrl.u32 %v1795, 7
    %v1797 = vsub.s32 2, %v1796
    %v1798 = vrot.slane %v1785, %v1797
    %v1799 = vlaneseq
    %v1800 = vshrl.u32 %v1799, 7
    %v1801 = vsub.s32 3, %v1800
    %v1802 = vrot.slane %v1785, %v1801
    %v1839 = vunpack.c.l.b16 %v1753
    %v1840 = vunpack.c.h.b16 %v1753
    %v1841 = vunpack.c.l.b16 %v1754
    %v1842 = vunpack.c.h.b16 %v1754
    %v1843 = vunpack.c.l.b16 %v1755
    %v1844 = vunpack.c.h.b16 %v1755
    %v1845 = vunpack.c.l.b16 %v1756
    %v1846 = vunpack.c.h.b16 %v1756
    %v1847 = vunpack.c.l.b16 %v1757
    %v1848 = vunpack.c.h.b16 %v1757
    %v1849 = vunpack.c.l.b16 %v1758
    %v1850 = vunpack.c.h.b16 %v1758
    %v1851 = vunpack.c.l.b16 %v1759
    %v1852 = vunpack.c.h.b16 %v1759
    %v1853 = vunpack.c.l.b16 %v1760
    %v1854 = vunpack.c.h.b16 %v1760
    %v1855 = vunpack.c.l.b16 %v1761
    %v1856 = vunpack.c.h.b16 %v1761
    %v1857 = vunpack.c.l.b16 %v1762
    %v1858 = vunpack.c.h.b16 %v1762
    %v1859 = vunpack.c.l.b16 %v1763
    %v1860 = vunpack.c.h.b16 %v1763
    %v1861 = vunpack.c.l.b16 %v1764
    %v1862 = vunpack.c.h.b16 %v1764
    %v1863 = vunpack.c.l.b16 %v1765
    %v1864 = vunpack.c.h.b16 %v1765
    %v1865 = vunpack.c.l.b16 %v1766
    %v1866 = vunpack.c.h.b16 %v1766
    %v1867 = vunpack.c.l.b16 %v1767
    %v1868 = vunpack.c.h.b16 %v1767
    %v1869 = vunpack.c.l.b16 %v1768
    %v1870 = vunpack.c.h.b16 %v1768
    %v1871 = vunpack.c.l.b16 %v1769
    %v1872 = vunpack.c.h.b16 %v1769
    %v1873 = vunpack.c.l.b16 %v1770
    %v1874 = vunpack.c.h.b16 %v1770
    %v1875 = vunpack.c.l.b16 %v1771
    %v1876 = vunpack.c.h.b16 %v1771
    %v1877 = vunpack.c.l.b16 %v1772
    %v1878 = vunpack.c.h.b16 %v1772
    %v1879 = vunpack.c.l.b16 %v1773
    %v1880 = vunpack.c.h.b16 %v1773
    %v1881 = vunpack.c.l.b16 %v1774
    %v1882 = vunpack.c.h.b16 %v1774
    %v1883 = vunpack.c.l.b16 %v1775
    %v1884 = vunpack.c.h.b16 %v1775
    %v1885 = vunpack.c.l.b16 %v1776
    %v1886 = vunpack.c.h.b16 %v1776
    %v1887 = vunpack.c.l.b16 %v1777
    %v1888 = vunpack.c.h.b16 %v1777
    %v1889 = vunpack.c.l.b16 %v1778
    %v1890 = vunpack.c.h.b16 %v1778
    %v1891 = vunpack.c.l.b16 %v1779
    %v1892 = vunpack.c.h.b16 %v1779
    %v1893 = vunpack.c.l.b16 %v1780
    %v1894 = vunpack.c.h.b16 %v1780
    %v1895 = vunpack.c.l.b16 %v1781
    %v1896 = vunpack.c.h.b16 %v1781
    %v1897 = vunpack.c.l.b16 %v1782
    %v1898 = vunpack.c.h.b16 %v1782
    %v1899 = vunpack.c.l.b16 %v1783
    %v1900 = vunpack.c.h.b16 %v1783
    %v1901 = vunpack.c.l.b16 %v1784
    %v1902 = vunpack.c.h.b16 %v1784
    %v1903 = vpack.c.b16 %v1843, %v1839
    %v1904 = vpack.c.b16 %v1844, %v1840
    %v1905 = vpack.c.b16 %v1845, %v1841
    %v1906 = vpack.c.b16 %v1846, %v1842
    %v1907 = vpack.c.b16 %v1851, %v1847
    %v1908 = vpack.c.b16 %v1852, %v1848
    %v1909 = vpack.c.b16 %v1853, %v1849
    %v1910 = vpack.c.b16 %v1854, %v1850
    %v1911 = vpack.c.b16 %v1859, %v1855
    %v1912 = vpack.c.b16 %v1860, %v1856
    %v1913 = vpack.c.b16 %v1861, %v1857
    %v1914 = vpack.c.b16 %v1862, %v1858
    %v1915 = vpack.c.b16 %v1867, %v1863
    %v1916 = vpack.c.b16 %v1868, %v1864
    %v1917 = vpack.c.b16 %v1869, %v1865
    %v1918 = vpack.c.b16 %v1870, %v1866
    %v1919 = vpack.c.b16 %v1875, %v1871
    %v1920 = vpack.c.b16 %v1876, %v1872
    %v1921 = vpack.c.b16 %v1877, %v1873
    %v1922 = vpack.c.b16 %v1878, %v1874
    %v1923 = vpack.c.b16 %v1883, %v1879
    %v1924 = vpack.c.b16 %v1884, %v1880
    %v1925 = vpack.c.b16 %v1885, %v1881
    %v1926 = vpack.c.b16 %v1886, %v1882
    %v1927 = vpack.c.b16 %v1891, %v1887
    %v1928 = vpack.c.b16 %v1892, %v1888
    %v1929 = vpack.c.b16 %v1893, %v1889
    %v1930 = vpack.c.b16 %v1894, %v1890
    %v1931 = vpack.c.b16 %v1899, %v1895
    %v1932 = vpack.c.b16 %v1900, %v1896
    %v1933 = vpack.c.b16 %v1901, %v1897
    %v1934 = vpack.c.b16 %v1902, %v1898
    %1967 = vmatprep.subr.bf16.mxu0 %v1904
    %1968 = vmatpush1.bf16.msra.mxu0 %v1903
    %1969 = vmatprep.subr.bf16.mxu0 %v1908
    %1970 = vmatpush1.bf16.msra.mxu0 %v1907
    %1971 = vmatprep.subr.bf16.mxu0 %v1912
    %1972 = vmatpush1.bf16.msra.mxu0 %v1911
    %1973 = vmatprep.subr.bf16.mxu0 %v1916
    %1974 = vmatpush1.bf16.msra.mxu0 %v1915
    %1975 = vmatprep.subr.bf16.mxu0 %v1920
    %1976 = vmatpush1.bf16.msra.mxu0 %v1919
    %1977 = vmatprep.subr.bf16.mxu0 %v1924
    %1978 = vmatpush1.bf16.msra.mxu0 %v1923
    %1979 = vmatprep.subr.bf16.mxu0 %v1928
    %1980 = vmatpush1.bf16.msra.mxu0 %v1927
    %1981 = vmatprep.subr.bf16.mxu0 %v1932
    %1982 = vmatpush1.bf16.msra.mxu0 %v1931
    %1983 = vmatprep.subr.bf16.mxu0 0
    %1984 = vmatpush1.bf16.msra.mxu0 0
    %1985 = vmatprep.subr.bf16.mxu0 0
    %1986 = vmatpush1.bf16.msra.mxu0 0
    %1987 = vmatprep.subr.bf16.mxu0 0
    %1988 = vmatpush1.bf16.msra.mxu0 0
    %1989 = vmatprep.subr.bf16.mxu0 0
    %1990 = vmatpush1.bf16.msra.mxu0 0
    %1991 = vmatprep.subr.bf16.mxu0 0
    %1992 = vmatpush1.bf16.msra.mxu0 0
    %1993 = vmatprep.subr.bf16.mxu0 0
    %1994 = vmatpush1.bf16.msra.mxu0 0
    %1995 = vmatprep.subr.bf16.mxu0 0
    %1996 = vmatpush1.bf16.msra.mxu0 0
    %1997 = vmatprep.subr.bf16.mxu0 0
    %1998 = vmatpush1.bf16.msra.mxu0 0
    %1999 = vmatprep.mubr.bf16.mxu0 0
    %2000 = vmatmul.mubr.bf16.gmra.mrb[0].mxu0 %v1751
    %v2001 = vpop.f32.mrb[0].mxu0
    %v2002 = vadd.f32 %v1790, %v2001
    %v2003 = vpop.f32.mrb[0].mxu0
    %v2004 = vadd.f32 %v1794, %v2003
    %v2005 = vpop.f32.mrb[0].mxu0
    %v2006 = vadd.f32 %v1790, %v2005
    %v2007 = vpop.f32.mrb[0].mxu0
    %v2008 = vadd.f32 %v1794, %v2007
    %2009 = vmatprep.mubr.bf16.mxu0 0
    %2010 = vmatmul.mubr.bf16.gmra.mrb[0].mxu0 %v1752
    %v2011 = vpop.f32.mrb[0].mxu0
    %v2012 = vadd.f32 %v1790, %v2011
    %v2013 = vpop.f32.mrb[0].mxu0
    %v2014 = vadd.f32 %v1794, %v2013
    %v2015 = vpop.f32.mrb[0].mxu0
    %v2016 = vadd.f32 %v1790, %v2015
    %v2017 = vpop.f32.mrb[0].mxu0
    %v2018 = vadd.f32 %v1794, %v2017
    %2019 = vdwg.mxu0
    %2020 = vmatprep.subr.bf16.mxu0 %v1906
    %2021 = vmatpush1.bf16.msra.mxu0 %v1905
    %2022 = vmatprep.subr.bf16.mxu0 %v1910
    %2023 = vmatpush1.bf16.msra.mxu0 %v1909
    %2024 = vmatprep.subr.bf16.mxu0 %v1914
    %2025 = vmatpush1.bf16.msra.mxu0 %v1913
    %2026 = vmatprep.subr.bf16.mxu0 %v1918
    %2027 = vmatpush1.bf16.msra.mxu0 %v1917
    %2028 = vmatprep.subr.bf16.mxu0 %v1922
    %2029 = vmatpush1.bf16.msra.mxu0 %v1921
    %2030 = vmatprep.subr.bf16.mxu0 %v1926
    %2031 = vmatpush1.bf16.msra.mxu0 %v1925
    %2032 = vmatprep.subr.bf16.mxu0 %v1930
    %2033 = vmatpush1.bf16.msra.mxu0 %v1929
    %2034 = vmatprep.subr.bf16.mxu0 %v1934
    %2035 = vmatpush1.bf16.msra.mxu0 %v1933
    %2036 = vmatprep.subr.bf16.mxu0 0
    %2037 = vmatpush1.bf16.msra.mxu0 0
    %2038 = vmatprep.subr.bf16.mxu0 0
    %2039 = vmatpush1.bf16.msra.mxu0 0
    %2040 = vmatprep.subr.bf16.mxu0 0
    %2041 = vmatpush1.bf16.msra.mxu0 0
    %2042 = vmatprep.subr.bf16.mxu0 0
    %2043 = vmatpush1.bf16.msra.mxu0 0
    %2044 = vmatprep.subr.bf16.mxu0 0
    %2045 = vmatpush1.bf16.msra.mxu0 0
    %2046 = vmatprep.subr.bf16.mxu0 0
    %2047 = vmatpush1.bf16.msra.mxu0 0
    %2048 = vmatprep.subr.bf16.mxu0 0
    %2049 = vmatpush1.bf16.msra.mxu0 0
    %2050 = vmatprep.subr.bf16.mxu0 0
    %2051 = vmatpush1.bf16.msra.mxu0 0
    %2052 = vmatprep.mubr.bf16.mxu0 0
    %2053 = vmatmul.mubr.bf16.gmra.mrb[0].mxu0 %v1751
    %v2054 = vpop.f32.mrb[0].mxu0
    %v2055 = vadd.f32 %v1798, %v2054
    %v2056 = vpop.f32.mrb[0].mxu0
    %v2057 = vadd.f32 %v1802, %v2056
    %v2058 = vpop.f32.mrb[0].mxu0
    %v2059 = vadd.f32 %v1798, %v2058
    %v2060 = vpop.f32.mrb[0].mxu0
    %v2061 = vadd.f32 %v1802, %v2060
    %2062 = vmatprep.mubr.bf16.mxu0 0
    %2063 = vmatmul.mubr.bf16.gmra.mrb[0].mxu0 %v1752
    %v2064 = vpop.f32.mrb[0].mxu0
    %v2065 = vadd.f32 %v1798, %v2064
    %v2066 = vpop.f32.mrb[0].mxu0
    %v2067 = vadd.f32 %v1802, %v2066
    %v2068 = vpop.f32.mrb[0].mxu0
    %v2069 = vadd.f32 %v1798, %v2068
    %v2070 = vpop.f32.mrb[0].mxu0
    %v2071 = vadd.f32 %v1802, %v2070
    %2072 = vdwg.mxu0
    %v2073 = vmax.f32 %v2002, 0.0
    %v2074 = vmax.f32 %v2004, 0.0
    %v2075 = vmax.f32 %v2055, 0.0
    %v2076 = vmax.f32 %v2057, 0.0
    %v2077 = vmax.f32 %v2006, 0.0
    %v2078 = vmax.f32 %v2008, 0.0
    %v2079 = vmax.f32 %v2059, 0.0
    %v2080 = vmax.f32 %v2061, 0.0
    %v2081 = vmax.f32 %v2012, 0.0
    %v2082 = vmax.f32 %v2014, 0.0
    %v2083 = vmax.f32 %v2065, 0.0
    %v2084 = vmax.f32 %v2067, 0.0
    %v2085 = vmax.f32 %v2016, 0.0
    %v2086 = vmax.f32 %v2018, 0.0
    %v2087 = vmax.f32 %v2069, 0.0
    %v2088 = vmax.f32 %v2071, 0.0
    %v2089 = vpack.c.bf16 %v2077, %v2073
    %v2090 = vpack.c.bf16 %v2078, %v2074
    %v2091 = vpack.c.bf16 %v2079, %v2075
    %v2092 = vpack.c.bf16 %v2080, %v2076
    %v2093 = vpack.c.bf16 %v2085, %v2081
    %v2094 = vpack.c.bf16 %v2086, %v2082
    %v2095 = vpack.c.bf16 %v2087, %v2083
    %v2096 = vpack.c.bf16 %v2088, %v2084
    %v2097 = vld [vmem:[#allocation15] sm:$0xf]
    %v2098 = vld [vmem:[#allocation15 + $0x4] sm:$0xf]
    %v2099 = vld [vmem:[#allocation15 + $0x8] sm:$0xf]
    %v2100 = vld [vmem:[#allocation15 + $0xc] sm:$0xf]
    %v2101 = vld [vmem:[#allocation15 + $0x10] sm:$0xf]
    %v2102 = vld [vmem:[#allocation15 + $0x14] sm:$0xf]
    %v2103 = vld [vmem:[#allocation15 + $0x18] sm:$0xf]
    %v2104 = vld [vmem:[#allocation15 + $0x1c] sm:$0xf]
    %v2105 = vld [vmem:[#allocation15 + $0x20] sm:$0xf]
    %v2106 = vld [vmem:[#allocation15 + $0x24] sm:$0xf]
    %v2107 = vld [vmem:[#allocation15 + $0x28] sm:$0xf]
    %v2108 = vld [vmem:[#allocation15 + $0x2c] sm:$0xf]
    %v2109 = vld [vmem:[#allocation15 + $0x30] sm:$0xf]
    %v2110 = vld [vmem:[#allocation15 + $0x34] sm:$0xf]
    %v2111 = vld [vmem:[#allocation15 + $0x38] sm:$0xf]
    %v2112 = vld [vmem:[#allocation15 + $0x3c] sm:$0xf]
    %v2113 = vld [vmem:[#allocation15 + $0x40] sm:$0xf]
    %v2114 = vld [vmem:[#allocation15 + $0x44] sm:$0xf]
    %v2115 = vld [vmem:[#allocation15 + $0x48] sm:$0xf]
    %v2116 = vld [vmem:[#allocation15 + $0x4c] sm:$0xf]
    %v2117 = vld [vmem:[#allocation15 + $0x50] sm:$0xf]
    %v2118 = vld [vmem:[#allocation15 + $0x54] sm:$0xf]
    %v2119 = vld [vmem:[#allocation15 + $0x58] sm:$0xf]
    %v2120 = vld [vmem:[#allocation15 + $0x5c] sm:$0xf]
    %v2121 = vld [vmem:[#allocation15 + $0x60] sm:$0xf]
    %v2122 = vld [vmem:[#allocation15 + $0x64] sm:$0xf]
    %v2123 = vld [vmem:[#allocation15 + $0x68] sm:$0xf]
    %v2124 = vld [vmem:[#allocation15 + $0x6c] sm:$0xf]
    %v2125 = vld [vmem:[#allocation15 + $0x70] sm:$0xf]
    %v2126 = vld [vmem:[#allocation15 + $0x74] sm:$0xf]
    %v2127 = vld [vmem:[#allocation15 + $0x78] sm:$0xf]
    %v2128 = vld [vmem:[#allocation15 + $0x7c] sm:$0xf]
    %v2129 = vld [vmem:[#allocation15 + $0x80] sm:$0xf]
    %v2130 = vld [vmem:[#allocation15 + $0x84] sm:$0xf]
    %v2131 = vld [vmem:[#allocation15 + $0x88] sm:$0xf]
    %v2132 = vld [vmem:[#allocation15 + $0x8c] sm:$0xf]
    %v2133 = vld [vmem:[#allocation15 + $0x90] sm:$0xf]
    %v2134 = vld [vmem:[#allocation15 + $0x94] sm:$0xf]
    %v2135 = vld [vmem:[#allocation15 + $0x98] sm:$0xf]
    %v2136 = vld [vmem:[#allocation15 + $0x9c] sm:$0xf]
    %v2137 = vld [vmem:[#allocation15 + $0xa0] sm:$0xf]
    %v2138 = vld [vmem:[#allocation15 + $0xa4] sm:$0xf]
    %v2139 = vld [vmem:[#allocation15 + $0xa8] sm:$0xf]
    %v2140 = vld [vmem:[#allocation15 + $0xac] sm:$0xf]
    %v2141 = vld [vmem:[#allocation15 + $0xb0] sm:$0xf]
    %v2142 = vld [vmem:[#allocation15 + $0xb4] sm:$0xf]
    %v2143 = vld [vmem:[#allocation15 + $0xb8] sm:$0xf]
    %v2144 = vld [vmem:[#allocation15 + $0xbc] sm:$0xf]
    %v2145 = vld [vmem:[#allocation15 + $0xc0] sm:$0xf]
    %v2146 = vld [vmem:[#allocation15 + $0xc4] sm:$0xf]
    %v2147 = vld [vmem:[#allocation15 + $0xc8] sm:$0xf]
    %v2148 = vld [vmem:[#allocation15 + $0xcc] sm:$0xf]
    %v2149 = vld [vmem:[#allocation15 + $0xd0] sm:$0xf]
    %v2150 = vld [vmem:[#allocation15 + $0xd4] sm:$0xf]
    %v2151 = vld [vmem:[#allocation15 + $0xd8] sm:$0xf]
    %v2152 = vld [vmem:[#allocation15 + $0xdc] sm:$0xf]
    %v2153 = vld [vmem:[#allocation15 + $0xe0] sm:$0xf]
    %v2154 = vld [vmem:[#allocation15 + $0xe4] sm:$0xf]
    %v2155 = vld [vmem:[#allocation15 + $0xe8] sm:$0xf]
    %v2156 = vld [vmem:[#allocation15 + $0xec] sm:$0xf]
    %v2157 = vld [vmem:[#allocation15 + $0xf0] sm:$0xf]
    %v2158 = vld [vmem:[#allocation15 + $0xf4] sm:$0xf]
    %v2159 = vld [vmem:[#allocation15 + $0xf8] sm:$0xf]
    %v2160 = vld [vmem:[#allocation15 + $0xfc] sm:$0xf]
    %v2161 = vld [vmem:[%s12] sm:$0x1]
    %v2163 = vlaneseq
    %v2164 = vshrl.u32 %v2163, 7
    %v2165 = vsub.s32 0, %v2164
    %v2166 = vrot.slane %v2161, %v2165
    %v2232 = vunpack.c.l.b16 %v2097
    %v2233 = vunpack.c.l.b16 %v2098
    %v2234 = vunpack.c.l.b16 %v2099
    %v2235 = vunpack.c.l.b16 %v2100
    %v2236 = vunpack.c.l.b16 %v2101
    %v2237 = vunpack.c.l.b16 %v2102
    %v2238 = vunpack.c.l.b16 %v2103
    %v2239 = vunpack.c.l.b16 %v2104
    %v2240 = vunpack.c.l.b16 %v2105
    %v2241 = vunpack.c.l.b16 %v2106
    %v2242 = vunpack.c.l.b16 %v2107
    %v2243 = vunpack.c.l.b16 %v2108
    %v2244 = vunpack.c.l.b16 %v2109
    %v2245 = vunpack.c.l.b16 %v2110
    %v2246 = vunpack.c.l.b16 %v2111
    %v2247 = vunpack.c.l.b16 %v2112
    %v2248 = vunpack.c.l.b16 %v2113
    %v2249 = vunpack.c.l.b16 %v2114
    %v2250 = vunpack.c.l.b16 %v2115
    %v2251 = vunpack.c.l.b16 %v2116
    %v2252 = vunpack.c.l.b16 %v2117
    %v2253 = vunpack.c.l.b16 %v2118
    %v2254 = vunpack.c.l.b16 %v2119
    %v2255 = vunpack.c.l.b16 %v2120
    %v2256 = vunpack.c.l.b16 %v2121
    %v2257 = vunpack.c.l.b16 %v2122
    %v2258 = vunpack.c.l.b16 %v2123
    %v2259 = vunpack.c.l.b16 %v2124
    %v2260 = vunpack.c.l.b16 %v2125
    %v2261 = vunpack.c.l.b16 %v2126
    %v2262 = vunpack.c.l.b16 %v2127
    %v2263 = vunpack.c.l.b16 %v2128
    %v2264 = vunpack.c.l.b16 %v2129
    %v2265 = vunpack.c.l.b16 %v2130
    %v2266 = vunpack.c.l.b16 %v2131
    %v2267 = vunpack.c.l.b16 %v2132
    %v2268 = vunpack.c.l.b16 %v2133
    %v2269 = vunpack.c.l.b16 %v2134
    %v2270 = vunpack.c.l.b16 %v2135
    %v2271 = vunpack.c.l.b16 %v2136
    %v2272 = vunpack.c.l.b16 %v2137
    %v2273 = vunpack.c.l.b16 %v2138
    %v2274 = vunpack.c.l.b16 %v2139
    %v2275 = vunpack.c.l.b16 %v2140
    %v2276 = vunpack.c.l.b16 %v2141
    %v2277 = vunpack.c.l.b16 %v2142
    %v2278 = vunpack.c.l.b16 %v2143
    %v2279 = vunpack.c.l.b16 %v2144
    %v2280 = vunpack.c.l.b16 %v2145
    %v2281 = vunpack.c.l.b16 %v2146
    %v2282 = vunpack.c.l.b16 %v2147
    %v2283 = vunpack.c.l.b16 %v2148
    %v2284 = vunpack.c.l.b16 %v2149
    %v2285 = vunpack.c.l.b16 %v2150
    %v2286 = vunpack.c.l.b16 %v2151
    %v2287 = vunpack.c.l.b16 %v2152
    %v2288 = vunpack.c.l.b16 %v2153
    %v2289 = vunpack.c.l.b16 %v2154
    %v2290 = vunpack.c.l.b16 %v2155
    %v2291 = vunpack.c.l.b16 %v2156
    %v2292 = vunpack.c.l.b16 %v2157
    %v2293 = vunpack.c.l.b16 %v2158
    %v2294 = vunpack.c.l.b16 %v2159
    %v2295 = vunpack.c.l.b16 %v2160
    %v2296 = vpack.c.b16 %v2233, %v2232
    %v2297 = vpack.c.b16 %v2235, %v2234
    %v2298 = vpack.c.b16 %v2237, %v2236
    %v2299 = vpack.c.b16 %v2239, %v2238
    %v2300 = vpack.c.b16 %v2241, %v2240
    %v2301 = vpack.c.b16 %v2243, %v2242
    %v2302 = vpack.c.b16 %v2245, %v2244
    %v2303 = vpack.c.b16 %v2247, %v2246
    %v2304 = vpack.c.b16 %v2249, %v2248
    %v2305 = vpack.c.b16 %v2251, %v2250
    %v2306 = vpack.c.b16 %v2253, %v2252
    %v2307 = vpack.c.b16 %v2255, %v2254
    %v2308 = vpack.c.b16 %v2257, %v2256
    %v2309 = vpack.c.b16 %v2259, %v2258
    %v2310 = vpack.c.b16 %v2261, %v2260
    %v2311 = vpack.c.b16 %v2263, %v2262
    %v2312 = vpack.c.b16 %v2265, %v2264
    %v2313 = vpack.c.b16 %v2267, %v2266
    %v2314 = vpack.c.b16 %v2269, %v2268
    %v2315 = vpack.c.b16 %v2271, %v2270
    %v2316 = vpack.c.b16 %v2273, %v2272
    %v2317 = vpack.c.b16 %v2275, %v2274
    %v2318 = vpack.c.b16 %v2277, %v2276
    %v2319 = vpack.c.b16 %v2279, %v2278
    %v2320 = vpack.c.b16 %v2281, %v2280
    %v2321 = vpack.c.b16 %v2283, %v2282
    %v2322 = vpack.c.b16 %v2285, %v2284
    %v2323 = vpack.c.b16 %v2287, %v2286
    %v2324 = vpack.c.b16 %v2289, %v2288
    %v2325 = vpack.c.b16 %v2291, %v2290
    %v2326 = vpack.c.b16 %v2293, %v2292
    %v2327 = vpack.c.b16 %v2295, %v2294
    %2360 = vmatprep.subr.bf16.mxu0 0
    %2361 = vmatpush1.bf16.msra.mxu0 %v2296
    %2362 = vmatprep.subr.bf16.mxu0 0
    %2363 = vmatpush1.bf16.msra.mxu0 %v2297
    %2364 = vmatprep.subr.bf16.mxu0 0
    %2365 = vmatpush1.bf16.msra.mxu0 %v2298
    %2366 = vmatprep.subr.bf16.mxu0 0
    %2367 = vmatpush1.bf16.msra.mxu0 %v2299
    %2368 = vmatprep.subr.bf16.mxu0 0
    %2369 = vmatpush1.bf16.msra.mxu0 %v2300
    %2370 = vmatprep.subr.bf16.mxu0 0
    %2371 = vmatpush1.bf16.msra.mxu0 %v2301
    %2372 = vmatprep.subr.bf16.mxu0 0
    %2373 = vmatpush1.bf16.msra.mxu0 %v2302
    %2374 = vmatprep.subr.bf16.mxu0 0
    %2375 = vmatpush1.bf16.msra.mxu0 %v2303
    %2376 = vmatprep.subr.bf16.mxu0 0
    %2377 = vmatpush1.bf16.msra.mxu0 %v2304
    %2378 = vmatprep.subr.bf16.mxu0 0
    %2379 = vmatpush1.bf16.msra.mxu0 %v2305
    %2380 = vmatprep.subr.bf16.mxu0 0
    %2381 = vmatpush1.bf16.msra.mxu0 %v2306
    %2382 = vmatprep.subr.bf16.mxu0 0
    %2383 = vmatpush1.bf16.msra.mxu0 %v2307
    %2384 = vmatprep.subr.bf16.mxu0 0
    %2385 = vmatpush1.bf16.msra.mxu0 %v2308
    %2386 = vmatprep.subr.bf16.mxu0 0
    %2387 = vmatpush1.bf16.msra.mxu0 %v2309
    %2388 = vmatprep.subr.bf16.mxu0 0
    %2389 = vmatpush1.bf16.msra.mxu0 %v2310
    %2390 = vmatprep.subr.bf16.mxu0 0
    %2391 = vmatpush1.bf16.msra.mxu0 %v2311
    %2392 = vmatprep.mubr.bf16.mxu0 %v2090
    %2393 = vmatmul.mubr.bf16.gmra.mrb[0].mxu0 %v2089
    %v2394 = vpop.f32.mrb[0].mxu0
    %v2395 = vadd.f32 %v2166, %v2394
    %v2396 = vpop.f32.mrb[0].mxu0
    %v2397 = vpop.f32.mrb[0].mxu0
    %v2398 = vadd.f32 %v2166, %v2397
    %v2399 = vpop.f32.mrb[0].mxu0
    %2400 = vmatprep.mubr.bf16.mxu0 %v2094
    %2401 = vmatmul.mubr.bf16.gmra.mrb[0].mxu0 %v2093
    %v2402 = vpop.f32.mrb[0].mxu0
    %v2403 = vadd.f32 %v2166, %v2402
    %v2404 = vpop.f32.mrb[0].mxu0
    %v2405 = vpop.f32.mrb[0].mxu0
    %v2406 = vadd.f32 %v2166, %v2405
    %v2407 = vpop.f32.mrb[0].mxu0
    %2408 = vdwg.mxu0
    %2409 = vmatprep.subr.bf16.mxu0 0
    %2410 = vmatpush1.bf16.msra.mxu0 %v2312
    %2411 = vmatprep.subr.bf16.mxu0 0
    %2412 = vmatpush1.bf16.msra.mxu0 %v2313
    %2413 = vmatprep.subr.bf16.mxu0 0
    %2414 = vmatpush1.bf16.msra.mxu0 %v2314
    %2415 = vmatprep.subr.bf16.mxu0 0
    %2416 = vmatpush1.bf16.msra.mxu0 %v2315
    %2417 = vmatprep.subr.bf16.mxu0 0
    %2418 = vmatpush1.bf16.msra.mxu0 %v2316
    %2419 = vmatprep.subr.bf16.mxu0 0
    %2420 = vmatpush1.bf16.msra.mxu0 %v2317
    %2421 = vmatprep.subr.bf16.mxu0 0
    %2422 = vmatpush1.bf16.msra.mxu0 %v2318
    %2423 = vmatprep.subr.bf16.mxu0 0
    %2424 = vmatpush1.bf16.msra.mxu0 %v2319
    %2425 = vmatprep.subr.bf16.mxu0 0
    %2426 = vmatpush1.bf16.msra.mxu0 %v2320
    %2427 = vmatprep.subr.bf16.mxu0 0
    %2428 = vmatpush1.bf16.msra.mxu0 %v2321
    %2429 = vmatprep.subr.bf16.mxu0 0
    %2430 = vmatpush1.bf16.msra.mxu0 %v2322
    %2431 = vmatprep.subr.bf16.mxu0 0
    %2432 = vmatpush1.bf16.msra.mxu0 %v2323
    %2433 = vmatprep.subr.bf16.mxu0 0
    %2434 = vmatpush1.bf16.msra.mxu0 %v2324
    %2435 = vmatprep.subr.bf16.mxu0 0
    %2436 = vmatpush1.bf16.msra.mxu0 %v2325
    %2437 = vmatprep.subr.bf16.mxu0 0
    %2438 = vmatpush1.bf16.msra.mxu0 %v2326
    %2439 = vmatprep.subr.bf16.mxu0 0
    %2440 = vmatpush1.bf16.msra.mxu0 %v2327
    %2441 = vmatprep.mubr.bf16.mxu0 %v2092
    %2442 = vmatmul.mubr.bf16.gmra.mrb[0].mxu0 %v2091
    %v2443 = vpop.f32.mrb[0].mxu0
    %v2444 = vadd.f32 %v2395, %v2443
    %v2445 = vpop.f32.mrb[0].mxu0
    %v2446 = vpop.f32.mrb[0].mxu0
    %v2447 = vadd.f32 %v2398, %v2446
    %v2448 = vpop.f32.mrb[0].mxu0
    %2449 = vmatprep.mubr.bf16.mxu0 %v2096
    %2450 = vmatmul.mubr.bf16.gmra.mrb[0].mxu0 %v2095
    %v2451 = vpop.f32.mrb[0].mxu0
    %v2452 = vadd.f32 %v2403, %v2451
    %v2453 = vpop.f32.mrb[0].mxu0
    %v2454 = vpop.f32.mrb[0].mxu0
    %v2455 = vadd.f32 %v2406, %v2454
    %v2456 = vpop.f32.mrb[0].mxu0
    %2457 = vdwg.mxu0
    %v2458 = vadd.f32 %v1681, %v2444
    %v2459 = vadd.f32 %v1682, %v2447
    %v2460 = vadd.f32 %v1683, %v2452
    %v2461 = vadd.f32 %v1684, %v2455
    %2462 = vst [vmem:[#allocation16] sm:$0xff] %v2458
    %2463 = vst [vmem:[#allocation16 + $0x8] sm:$0xff] %v2459
    %2464 = vst [vmem:[#allocation16 + $0x10] sm:$0xff] %v2460
    %2465 = vst [vmem:[#allocation16 + $0x18] sm:$0xff] %v2461
    // Predicated region
    $region82: #{block_relpos_forward.1} parent=1 // pred_check
      _
    $region83: #{block_relpos_forward.1} parent=1 // pred_check_branch
      %2467 = sbr.rel (0) target = $region85
    $region84: #{block_relpos_forward.1} parent=1 // pred_region
      %s2469 = ssub.s32 512, 512
      %2470 = vsyncadd [#allocation6], %s2469
      %s2471 = sshll.u32 [#allocation16], 4
      %s2472 = int_to_ptr.vmem [resolvable:$true] %s2471
      %2477 = dma.vmem_to_hbm [thread:$0]  %s2472, 512, %s13, [#allocation6], 128, 128, 8
    $region85: #{block_relpos_forward.1} parent=1 // pred_fallthru
      _
    // Predicated region
    $region86: #{block_relpos_forward.1} parent=1 // pred_check
      _
    $region87: #{block_relpos_forward.1} parent=1 // pred_check_branch
      %2479 = sbr.rel (0) target = $region89
    $region88: #{block_relpos_forward.1} parent=1 // pred_region
      %2480 = dma.done [#allocation6], 512
    $region89: #{block_relpos_forward.1} parent=1 // pred_fallthru
      _
    %2481 = vsyncpa [#allocation5], 1
    %2482 = vsyncpa [#allocation8], 1
    %2483 = vsyncpa [#allocation11], 1
    %2484 = vsyncpa [#allocation14], 1
    %2485 = vsyncpa [#allocation6], 1

</llo_original>
